<compile_context>
chip_gen: v5e
topology: v5e:2x2
jax: 0.10.0
libtpu: 0.0.40
codegen_flags: <defaults>
</compile_context>

<pallas_src>
import math
import functools

import jax
import jax.numpy as jnp
import numpy as np
from jax.experimental import pallas as pl
from jax.experimental.pallas import tpu as pltpu


def self_att_kernel(x_ref, mask_ref,
                    wqkv_ref, bqkv_ref, wm_ref, bm_ref,
                    w1_ref, b1_ref, w2_ref, b2_ref,
                    ln0g_ref, ln0b_ref, ln1g_ref, ln1b_ref,
                    out_ref, scores_ref,
                    *, n_head, d_head, seq_len, bblk, eps):
    f32 = jnp.float32
    bf16 = jnp.bfloat16
    S = seq_len
    H = n_head * d_head

    # ---- flatten the batch block: all projection/FFN dots see M = Bblk*S ----
    x = x_ref[...].reshape(bblk * S, H)        # (Bblk*S, H) f32
    xb = x.astype(bf16)                        # MXU operand

    # ---- fused Q|K|V projection: one (Bblk*S, H) x (H, 3H) MXU dot ----
    qkv = jnp.dot(xb, wqkv_ref[...], preferred_element_type=f32) + bqkv_ref[0]
    q = qkv[:, 0 * H:1 * H].astype(bf16)
    k = qkv[:, 1 * H:2 * H].astype(bf16)
    v = qkv[:, 2 * H:3 * H].astype(bf16)

    inv_sqrt_d = f32(1.0 / math.sqrt(d_head))
    # contract last dim of both operands: q_h @ k_h^T without a materialized
    # transpose (straight MXU feed).
    contract = (((1,), (1,)), ((), ()))

    wm = wm_ref[...]                           # (H, H) bf16, loaded once

    # ---- per-sequence, per-head attention (both loops unrolled at trace time;
    #      output projection fused per head to avoid a lane-axis concatenate) --
    atted_rows = []
    for b in range(bblk):
        row = b * S
        mask_b = mask_ref[b]                   # (1, S) -> broadcasts over rows
        acc_b = None                           # (S, H) f32 accumulator
        for h in range(n_head):
            lo = h * d_head
            q_h = q[row:row + S, lo:lo + d_head]   # (S, d)
            k_h = k[row:row + S, lo:lo + d_head]   # (S, d)
            v_h = v[row:row + S, lo:lo + d_head]   # (S, d)

            s_h = jax.lax.dot_general(q_h, k_h, contract,
                                      preferred_element_type=f32) * inv_sqrt_d
            s_h = s_h + mask_b                 # additive mask
            # lane-dense scores layout: heads stacked along the lane axis so the
            # HBM writeback block has last dim n_head*S (>=128 at MCAN sizes).
            scores_ref[b, :, h * S:(h + 1) * S] = s_h

            m_h = jnp.max(s_h, axis=-1, keepdims=True)
            p_h = jnp.exp(s_h - m_h)
            att_h = p_h * pl.reciprocal(jnp.sum(p_h, axis=-1, keepdims=True),
                                        approx=True)
            ctx_h = jnp.dot(att_h.astype(bf16), v_h,
                            preferred_element_type=f32)          # (S, d)
            contrib = jnp.dot(ctx_h.astype(bf16), wm[lo:lo + d_head, :],
                              preferred_element_type=f32)        # (S, H)
            acc_b = contrib if acc_b is None else acc_b + contrib
        atted_rows.append(acc_b)

    atted = atted_rows[0] if bblk == 1 else jnp.concatenate(atted_rows, axis=0)
    atted = atted + bm_ref[0]                  # (Bblk*S, H) f32

    # ---- residual + LayerNorm0 (dropout = identity) ----
    # TODO(synk): LayerNorm source not provided; using standard nn.LayerNorm
    # semantics (biased variance, eps inside rsqrt, eps=1e-12 per SelfAtt ctor).
    y = x + atted
    mu = jnp.mean(y, axis=-1, keepdims=True)
    var = jnp.mean((y - mu) ** 2, axis=-1, keepdims=True)
    y = (y - mu) * jax.lax.rsqrt(var + eps) * ln0g_ref[0] + ln0b_ref[0]

    # ---- FFN over the whole flattened block ----
    # TODO(synk): FeedForward source not provided; using the standard MCAN FFN
    # Linear(H, HFF) -> ReLU -> Linear(HFF, H).
    hid = jnp.maximum(
        jnp.dot(y.astype(bf16), w1_ref[...], preferred_element_type=f32)
        + b1_ref[0], 0.0)
    f = jnp.dot(hid.astype(bf16), w2_ref[...],
                preferred_element_type=f32) + b2_ref[0]

    # ---- residual + LayerNorm1 ----
    z = y + f
    mu = jnp.mean(z, axis=-1, keepdims=True)
    var = jnp.mean((z - mu) ** 2, axis=-1, keepdims=True)
    z = (z - mu) * jax.lax.rsqrt(var + eps) * ln1g_ref[0] + ln1b_ref[0]

    out_ref[...] = z.reshape(bblk, S, H)


def prepare_params(params):
    """One-time weight preparation: fuse Q|K|V and cast matmul weights to bf16.

    Hoisted out of the forward so the f32->bf16 converts / concatenation are not
    re-emitted (and the f32 weights not re-read from HBM) on every call.
    Weight matrices are expected in (in, out) layout (transpose nn.Linear).
    """
    bf16, f32 = jnp.bfloat16, jnp.float32
    return dict(
        wqkv=jnp.concatenate([params['wq'], params['wk'], params['wv']],
                             axis=1).astype(bf16),
        bqkv=jnp.concatenate([params['bq'], params['bk'], params['bv']],
                             axis=1).astype(f32),
        wm=params['wm'].astype(bf16), bm=params['bm'].astype(f32),
        w1=params['w1'].astype(bf16), b1=params['b1'].astype(f32),
        w2=params['w2'].astype(bf16), b2=params['b2'].astype(f32),
        ln0g=params['ln0g'].astype(f32), ln0b=params['ln0b'].astype(f32),
        ln1g=params['ln1g'].astype(f32), ln1b=params['ln1b'].astype(f32),
    )


def _choose_bblk(B, S, row_cap=1024):
    """Batch elements per grid step.

    Prefer the largest divisor of B (best MXU M-fill: Bblk*S rows per dot) while
    keeping >= 2 grid steps when B >= 2 (so v7x's second TensorCore gets work)
    and Bblk*S <= row_cap (bounds activation VMEM / vreg pressure).
    """
    cands = [d for d in range(1, B + 1)
             if B % d == 0 and (B < 2 or B // d >= 2) and d * S <= row_cap]
    return max(cands) if cands else 1


def _vmem_limit_bytes(bblk, S, H, HFF, n_head, single_buffer_weights=True):
    """Explicit scoped-VMEM budget derived from the actual block shapes."""
    f32, bf16 = 4, 2
    # pipelined activation blocks (double-buffered by the runtime)
    act = 2 * (bblk * S * H * f32)                 # x
    act += 2 * (bblk * 1 * S * f32)                # mask
    act += 2 * (bblk * S * H * f32)                # out
    act += 2 * (bblk * S * n_head * S * f32)       # scores (lane-dense)
    wbuf = 1 if single_buffer_weights else 2
    weights = wbuf * bf16 * (H * 3 * H + H * H + H * HFF + HFF * H)
    small = wbuf * f32 * (3 * H + H + HFF + H + 4 * H)
    est = act + weights + small
    # headroom for compiler temporaries; floor at 32 MiB, cap at v7x physical.
    return int(min(64 << 20, max(2 * est + (1 << 20), 32 << 20)))


def self_att_forward(x, x_mask, prep, *, n_head):
    B, S, H = x.shape
    d_head = H // n_head
    x = x.astype(jnp.float32)
    mask2 = x_mask.reshape(B, 1, S).astype(jnp.float32)

    bblk = _choose_bblk(B, S)
    n_steps = B // bblk
    HFF = prep['w1'].shape[1]

    weight_args = (prep['wqkv'], prep['bqkv'], prep['wm'], prep['bm'],
                   prep['w1'], prep['b1'], prep['w2'], prep['b2'],
                   prep['ln0g'], prep['ln0b'], prep['ln1g'], prep['ln1b'])

    kernel = functools.partial(self_att_kernel, n_head=n_head, d_head=d_head,
                               seq_len=S, bblk=bblk, eps=1e-12)
    vmem_limit = _vmem_limit_bytes(bblk, S, H, HFF, n_head)

    def run(weight_pipeline_mode):
        def const_spec(shape):
            nd = len(shape)
            imap = lambda b, _nd=nd: (0,) * _nd   # constant index -> fetched once
            if weight_pipeline_mode is None:
                return pl.BlockSpec(shape, imap)
            # single-buffer: block index never changes across the batch grid.
            return pl.BlockSpec(shape, imap, pipeline_mode=weight_pipeline_mode)

        in_specs = [
            pl.BlockSpec((bblk, S, H), lambda b: (b, 0, 0)),   # x
            pl.BlockSpec((bblk, 1, S), lambda b: (b, 0, 0)),   # mask
        ] + [const_spec(w.shape) for w in weight_args]

        out_specs = (
            pl.BlockSpec((bblk, S, H), lambda b: (b, 0, 0)),            # out
            pl.BlockSpec((bblk, S, n_head * S), lambda b: (b, 0, 0)),   # scores
        )

        return pl.pallas_call(
            kernel,
            out_shape=(jax.ShapeDtypeStruct((B, S, H), jnp.float32),
                       jax.ShapeDtypeStruct((B, S, n_head * S), jnp.float32)),
            grid=(n_steps,),
            in_specs=in_specs,
            out_specs=out_specs,
            compiler_params=pltpu.CompilerParams(
                dimension_semantics=("parallel",),   # batch blocks independent
                vmem_limit_bytes=vmem_limit),
        )(x, mask2, *weight_args)

    try:
        out, scores_flat = run(pl.Buffered(1))
    except Exception:
        # TODO(synk): this jax build rejected single-buffered weight BlockSpecs;
        # fall back to default double buffering (identical results).
        out, scores_flat = run(None)

    # layout plumbing only: lane-dense (B, S, n_head*S) -> PyTorch (B, nh, S, S)
    scores = scores_flat.reshape(B, S, n_head, S).transpose(0, 2, 1, 3)
    return out, scores


# ---------------- pure-JAX reference (for verification) ----------------
def reference(x, mask, p, *, n_head):
    B, S, H = x.shape
    d_head = H // n_head

    def ln(v, g, b, eps=1e-12):
        mu = jnp.mean(v, -1, keepdims=True)
        var = jnp.mean((v - mu) ** 2, -1, keepdims=True)
        return (v - mu) * jax.lax.rsqrt(var + eps) * g[0] + b[0]

    q = (x @ p['wq'] + p['bq'][0]).reshape(B, S, n_head, d_head)
    k = (x @ p['wk'] + p['bk'][0]).reshape(B, S, n_head, d_head)
    v = (x @ p['wv'] + p['bv'][0]).reshape(B, S, n_head, d_head)
    scores = jnp.einsum('bqhd,bkhd->bhqk', q, k) / math.sqrt(d_head) + mask
    att = jax.nn.softmax(scores, -1)
    atted = jnp.einsum('bhqk,bkhd->bqhd', att, v).reshape(B, S, H)
    atted = atted @ p['wm'] + p['bm'][0]
    y = ln(x + atted, p['ln0g'], p['ln0b'])
    f = jnp.maximum(y @ p['w1'] + p['b1'][0], 0.0) @ p['w2'] + p['b2'][0]
    z = ln(y + f, p['ln1g'], p['ln1b'])
    return z, scores


if __name__ == "__main__":
    B, S, HSIZE, HHEAD, HFF = 4, 8, 32, 4, 64   # HBASE = HSIZE // HHEAD = 8

    key = jax.random.PRNGKey(0)
    ks = jax.random.split(key, 16)

    def w(k, shape, scale=0.05):
        return (scale * jax.random.normal(k, shape)).astype(jnp.float32)

    params = {
        'wq': w(ks[0], (HSIZE, HSIZE)), 'bq': w(ks[1], (1, HSIZE)),
        'wk': w(ks[2], (HSIZE, HSIZE)), 'bk': w(ks[3], (1, HSIZE)),
        'wv': w(ks[4], (HSIZE, HSIZE)), 'bv': w(ks[5], (1, HSIZE)),
        'wm': w(ks[6], (HSIZE, HSIZE)), 'bm': w(ks[7], (1, HSIZE)),
        'w1': w(ks[8], (HSIZE, HFF)),   'b1': w(ks[9], (1, HFF)),
        'w2': w(ks[10], (HFF, HSIZE)),  'b2': w(ks[11], (1, HSIZE)),
        'ln0g': jnp.ones((1, HSIZE), jnp.float32),
        'ln0b': jnp.zeros((1, HSIZE), jnp.float32),
        'ln1g': jnp.ones((1, HSIZE), jnp.float32),
        'ln1b': jnp.zeros((1, HSIZE), jnp.float32),
    }
    prep = prepare_params(params)   # one-time fusion + bf16 cast

    x = jax.random.normal(ks[12], (B, S, HSIZE), dtype=jnp.float32)
    # additive mask: last two sequence positions of batches 1 and 3 masked out
    pad = jnp.zeros((B, S), jnp.float32).at[1, -2:].set(-1e9).at[3, -2:].set(-1e9)
    x_mask = pad[:, None, None, :]          # (B, 1, 1, S) PyTorch convention

    out, scores = self_att_forward(x, x_mask, prep, n_head=HHEAD)
    out = jax.block_until_ready(out)
    scores = jax.block_until_ready(scores)

    # Tolerances loosened vs. a pure-f32 kernel: matmul operands are bf16 on
    # the MXU (intentional perf tradeoff); accumulation and elementwise are f32.
    ref_out, ref_scores = reference(x, x_mask, params, n_head=HHEAD)
    np.testing.assert_allclose(np.asarray(out), np.asarray(ref_out),
                               rtol=2e-2, atol=2e-2)
    np.testing.assert_allclose(np.asarray(scores), np.asarray(ref_scores),
                               rtol=2e-2, atol=2e-2)

    print("KERNEL_OK")
</pallas_src>

<mosaic_0001>
module attributes {stable_mosaic.version = 11 : i64} {
  func.func @self_att_kernel(%arg0: i32, %arg1: memref<2x8x32xf32, #tpu.memory_space<vmem>>, %arg2: memref<2x1x8xf32, #tpu.memory_space<vmem>>, %arg3: memref<32x96xbf16, #tpu.memory_space<vmem>>, %arg4: memref<1x96xf32, #tpu.memory_space<vmem>>, %arg5: memref<32x32xbf16, #tpu.memory_space<vmem>>, %arg6: memref<1x32xf32, #tpu.memory_space<vmem>>, %arg7: memref<32x64xbf16, #tpu.memory_space<vmem>>, %arg8: memref<1x64xf32, #tpu.memory_space<vmem>>, %arg9: memref<64x32xbf16, #tpu.memory_space<vmem>>, %arg10: memref<1x32xf32, #tpu.memory_space<vmem>>, %arg11: memref<1x32xf32, #tpu.memory_space<vmem>>, %arg12: memref<1x32xf32, #tpu.memory_space<vmem>>, %arg13: memref<1x32xf32, #tpu.memory_space<vmem>>, %arg14: memref<1x32xf32, #tpu.memory_space<vmem>>, %arg15: memref<2x8x32xf32, #tpu.memory_space<vmem>>, %arg16: memref<2x8x32xf32, #tpu.memory_space<vmem>>) attributes {dimension_semantics = [#tpu.dimension_semantics<parallel>], iteration_bounds = array<i64: 2>, scalar_prefetch = 0 : i64, scratch_operands = 0 : i64, tpu.core_type = #tpu.core_type<tc>, window_params = [{transform_indices = @transform_0, window_bounds = array<i64: 2, 8, 32>}, {transform_indices = @transform_1, window_bounds = array<i64: 2, 1, 8>}, {pipeline_mode = #tpu.pipeline_mode<synchronous>, transform_indices = @transform_2, window_bounds = array<i64: 32, 96>}, {pipeline_mode = #tpu.pipeline_mode<synchronous>, transform_indices = @transform_3, window_bounds = array<i64: 1, 96>}, {pipeline_mode = #tpu.pipeline_mode<synchronous>, transform_indices = @transform_4, window_bounds = array<i64: 32, 32>}, {pipeline_mode = #tpu.pipeline_mode<synchronous>, transform_indices = @transform_5, window_bounds = array<i64: 1, 32>}, {pipeline_mode = #tpu.pipeline_mode<synchronous>, transform_indices = @transform_6, window_bounds = array<i64: 32, 64>}, {pipeline_mode = #tpu.pipeline_mode<synchronous>, transform_indices = @transform_7, window_bounds = array<i64: 1, 64>}, {pipeline_mode = #tpu.pipeline_mode<synchronous>, transform_indices = @transform_8, window_bounds = array<i64: 64, 32>}, {pipeline_mode = #tpu.pipeline_mode<synchronous>, transform_indices = @transform_9, window_bounds = array<i64: 1, 32>}, {pipeline_mode = #tpu.pipeline_mode<synchronous>, transform_indices = @transform_10, window_bounds = array<i64: 1, 32>}, {pipeline_mode = #tpu.pipeline_mode<synchronous>, transform_indices = @transform_11, window_bounds = array<i64: 1, 32>}, {pipeline_mode = #tpu.pipeline_mode<synchronous>, transform_indices = @transform_12, window_bounds = array<i64: 1, 32>}, {pipeline_mode = #tpu.pipeline_mode<synchronous>, transform_indices = @transform_13, window_bounds = array<i64: 1, 32>}, {transform_indices = @transform_14, window_bounds = array<i64: 2, 8, 32>}, {transform_indices = @transform_15, window_bounds = array<i64: 2, 8, 32>}]} {
    %c0 = arith.constant 0 : index
    %c0_0 = arith.constant 0 : index
    %c0_1 = arith.constant 0 : index
    %0 = vector.load %arg1[%c0, %c0_0, %c0_1] : memref<2x8x32xf32, #tpu.memory_space<vmem>>, vector<2x8x32xf32>
    %1 = vector.shape_cast %0 : vector<2x8x32xf32> to vector<16x32xf32>
    %2 = arith.truncf %1 : vector<16x32xf32> to vector<16x32xbf16>
    %c0_2 = arith.constant 0 : index
    %c0_3 = arith.constant 0 : index
    %3 = vector.load %arg3[%c0_2, %c0_3] : memref<32x96xbf16, #tpu.memory_space<vmem>>, vector<32x96xbf16>
    %cst = arith.constant dense<0.000000e+00> : vector<16x96xf32>
    %4 = tpu.matmul %2, %3, %cst {dimension_numbers = #tpu.dot_dimension_numbers<[1], [0], [0], [1], [0, 0, 1, 1], [], []>} : vector<16x32xbf16>, vector<32x96xbf16>, vector<16x96xf32> -> vector<16x96xf32>
    %c0_4 = arith.constant 0 : index
    %c0_5 = arith.constant 0 : index
    %5 = vector.load %arg4[%c0_4, %c0_5] : memref<1x96xf32, #tpu.memory_space<vmem>>, vector<1x96xf32>
    %6 = vector.shape_cast %5 : vector<1x96xf32> to vector<96xf32>
    %7 = vector.shape_cast %6 : vector<96xf32> to vector<1x96xf32>
    %8 = vector.broadcast %7 : vector<1x96xf32> to vector<16x96xf32>
    %9 = arith.addf %4, %8 : vector<16x96xf32>
    %10 = vector.extract_strided_slice %9 {offsets = [0, 0], sizes = [16, 32], strides = [1, 1]} : vector<16x96xf32> to vector<16x32xf32>
    %11 = arith.truncf %10 : vector<16x32xf32> to vector<16x32xbf16>
    %12 = vector.extract_strided_slice %9 {offsets = [0, 32], sizes = [16, 32], strides = [1, 1]} : vector<16x96xf32> to vector<16x32xf32>
    %13 = arith.truncf %12 : vector<16x32xf32> to vector<16x32xbf16>
    %14 = vector.extract_strided_slice %9 {offsets = [0, 64], sizes = [16, 32], strides = [1, 1]} : vector<16x96xf32> to vector<16x32xf32>
    %15 = arith.truncf %14 : vector<16x32xf32> to vector<16x32xbf16>
    %c0_6 = arith.constant 0 : index
    %c0_7 = arith.constant 0 : index
    %16 = vector.load %arg5[%c0_6, %c0_7] : memref<32x32xbf16, #tpu.memory_space<vmem>>, vector<32x32xbf16>
    %c0_8 = arith.constant 0 : index
    %c0_9 = arith.constant 0 : index
    %c0_10 = arith.constant 0 : index
    %17 = vector.load %arg2[%c0_8, %c0_9, %c0_10] : memref<2x1x8xf32, #tpu.memory_space<vmem>>, vector<1x1x8xf32>
    %18 = vector.shape_cast %17 : vector<1x1x8xf32> to vector<1x8xf32>
    %19 = vector.extract_strided_slice %11 {offsets = [0, 0], sizes = [8, 8], strides = [1, 1]} : vector<16x32xbf16> to vector<8x8xbf16>
    %20 = vector.extract_strided_slice %13 {offsets = [0, 0], sizes = [8, 8], strides = [1, 1]} : vector<16x32xbf16> to vector<8x8xbf16>
    %21 = vector.extract_strided_slice %15 {offsets = [0, 0], sizes = [8, 8], strides = [1, 1]} : vector<16x32xbf16> to vector<8x8xbf16>
    %cst_11 = arith.constant dense<0.000000e+00> : vector<8x8xf32>
    %22 = tpu.matmul %19, %20, %cst_11 {dimension_numbers = #tpu.dot_dimension_numbers<[1], [1], [0], [0], [0, 0, 1, 0], [], []>} : vector<8x8xbf16>, vector<8x8xbf16>, vector<8x8xf32> -> vector<8x8xf32>
    %cst_12 = arith.constant 0.353553385 : f32
    %23 = vector.broadcast %cst_12 : f32 to vector<8x8xf32>
    %24 = arith.mulf %22, %23 : vector<8x8xf32>
    %25 = vector.broadcast %18 : vector<1x8xf32> to vector<8x8xf32>
    %26 = arith.addf %24, %25 : vector<8x8xf32>
    %c0_13 = arith.constant 0 : index
    %c0_14 = arith.constant 0 : index
    %c0_15 = arith.constant 0 : index
    %27 = vector.load %arg16[%c0_13, %c0_14, %c0_15] : memref<2x8x32xf32, #tpu.memory_space<vmem>>, vector<1x8x8xf32>
    %28 = vector.shape_cast %27 : vector<1x8x8xf32> to vector<8x8xf32>
    %29 = vector.shape_cast %26 : vector<8x8xf32> to vector<1x8x8xf32>
    tpu.vector_store %arg16[%c0_13, %c0_14, %c0_15], %29 {strides = array<i32>} : memref<2x8x32xf32, #tpu.memory_space<vmem>>, vector<1x8x8xf32>,
    %cst_16 = arith.constant dense<0xFF800000> : vector<8xf32>
    %30 = vector.multi_reduction <maximumf>, %26, %cst_16 [1] : vector<8x8xf32> to vector<8xf32>
    %31 = vector.shape_cast %30 : vector<8xf32> to vector<8x1xf32>
    %32 = vector.broadcast %31 : vector<8x1xf32> to vector<8x8xf32>
    %33 = arith.subf %26, %32 : vector<8x8xf32>
    %34 = math.exp %33 : vector<8x8xf32>
    %cst_17 = arith.constant dense<0.000000e+00> : vector<8xf32>
    %35 = vector.multi_reduction <add>, %34, %cst_17 [1] : vector<8x8xf32> to vector<8xf32>
    %36 = vector.shape_cast %35 : vector<8xf32> to vector<8x1xf32>
    %37 = tpu.reciprocal %36 {approx = true} : vector<8x1xf32> -> vector<8x1xf32>
    %38 = vector.broadcast %37 : vector<8x1xf32> to vector<8x8xf32>
    %39 = arith.mulf %34, %38 : vector<8x8xf32>
    %40 = arith.truncf %39 : vector<8x8xf32> to vector<8x8xbf16>
    %cst_18 = arith.constant dense<0.000000e+00> : vector<8x8xf32>
    %41 = tpu.matmul %40, %21, %cst_18 {dimension_numbers = #tpu.dot_dimension_numbers<[1], [0], [0], [1], [0, 0, 1, 1], [], []>} : vector<8x8xbf16>, vector<8x8xbf16>, vector<8x8xf32> -> vector<8x8xf32>
    %42 = arith.truncf %41 : vector<8x8xf32> to vector<8x8xbf16>
    %43 = vector.extract_strided_slice %16 {offsets = [0, 0], sizes = [8, 32], strides = [1, 1]} : vector<32x32xbf16> to vector<8x32xbf16>
    %cst_19 = arith.constant dense<0.000000e+00> : vector<8x32xf32>
    %44 = tpu.matmul %42, %43, %cst_19 {dimension_numbers = #tpu.dot_dimension_numbers<[1], [0], [0], [1], [0, 0, 1, 1], [], []>} : vector<8x8xbf16>, vector<8x32xbf16>, vector<8x32xf32> -> vector<8x32xf32>
    %45 = vector.extract_strided_slice %11 {offsets = [0, 8], sizes = [8, 8], strides = [1, 1]} : vector<16x32xbf16> to vector<8x8xbf16>
    %46 = vector.extract_strided_slice %13 {offsets = [0, 8], sizes = [8, 8], strides = [1, 1]} : vector<16x32xbf16> to vector<8x8xbf16>
    %47 = vector.extract_strided_slice %15 {offsets = [0, 8], sizes = [8, 8], strides = [1, 1]} : vector<16x32xbf16> to vector<8x8xbf16>
    %cst_20 = arith.constant dense<0.000000e+00> : vector<8x8xf32>
    %48 = tpu.matmul %45, %46, %cst_20 {dimension_numbers = #tpu.dot_dimension_numbers<[1], [1], [0], [0], [0, 0, 1, 0], [], []>} : vector<8x8xbf16>, vector<8x8xbf16>, vector<8x8xf32> -> vector<8x8xf32>
    %cst_21 = arith.constant 0.353553385 : f32
    %49 = vector.broadcast %cst_21 : f32 to vector<8x8xf32>
    %50 = arith.mulf %48, %49 : vector<8x8xf32>
    %51 = vector.broadcast %18 : vector<1x8xf32> to vector<8x8xf32>
    %52 = arith.addf %50, %51 : vector<8x8xf32>
    %c0_22 = arith.constant 0 : index
    %c0_23 = arith.constant 0 : index
    %c8 = arith.constant 8 : index
    %53 = vector.load %arg16[%c0_22, %c0_23, %c8] : memref<2x8x32xf32, #tpu.memory_space<vmem>>, vector<1x8x8xf32>
    %54 = vector.shape_cast %53 : vector<1x8x8xf32> to vector<8x8xf32>
    %55 = vector.shape_cast %52 : vector<8x8xf32> to vector<1x8x8xf32>
    tpu.vector_store %arg16[%c0_22, %c0_23, %c8], %55 {strides = array<i32>} : memref<2x8x32xf32, #tpu.memory_space<vmem>>, vector<1x8x8xf32>,
    %cst_24 = arith.constant dense<0xFF800000> : vector<8xf32>
    %56 = vector.multi_reduction <maximumf>, %52, %cst_24 [1] : vector<8x8xf32> to vector<8xf32>
    %57 = vector.shape_cast %56 : vector<8xf32> to vector<8x1xf32>
    %58 = vector.broadcast %57 : vector<8x1xf32> to vector<8x8xf32>
    %59 = arith.subf %52, %58 : vector<8x8xf32>
    %60 = math.exp %59 : vector<8x8xf32>
    %cst_25 = arith.constant dense<0.000000e+00> : vector<8xf32>
    %61 = vector.multi_reduction <add>, %60, %cst_25 [1] : vector<8x8xf32> to vector<8xf32>
    %62 = vector.shape_cast %61 : vector<8xf32> to vector<8x1xf32>
    %63 = tpu.reciprocal %62 {approx = true} : vector<8x1xf32> -> vector<8x1xf32>
    %64 = vector.broadcast %63 : vector<8x1xf32> to vector<8x8xf32>
    %65 = arith.mulf %60, %64 : vector<8x8xf32>
    %66 = arith.truncf %65 : vector<8x8xf32> to vector<8x8xbf16>
    %cst_26 = arith.constant dense<0.000000e+00> : vector<8x8xf32>
    %67 = tpu.matmul %66, %47, %cst_26 {dimension_numbers = #tpu.dot_dimension_numbers<[1], [0], [0], [1], [0, 0, 1, 1], [], []>} : vector<8x8xbf16>, vector<8x8xbf16>, vector<8x8xf32> -> vector<8x8xf32>
    %68 = arith.truncf %67 : vector<8x8xf32> to vector<8x8xbf16>
    %69 = vector.extract_strided_slice %16 {offsets = [8, 0], sizes = [8, 32], strides = [1, 1]} : vector<32x32xbf16> to vector<8x32xbf16>
    %cst_27 = arith.constant dense<0.000000e+00> : vector<8x32xf32>
    %70 = tpu.matmul %68, %69, %cst_27 {dimension_numbers = #tpu.dot_dimension_numbers<[1], [0], [0], [1], [0, 0, 1, 1], [], []>} : vector<8x8xbf16>, vector<8x32xbf16>, vector<8x32xf32> -> vector<8x32xf32>
    %71 = arith.addf %44, %70 : vector<8x32xf32>
    %72 = vector.extract_strided_slice %11 {offsets = [0, 16], sizes = [8, 8], strides = [1, 1]} : vector<16x32xbf16> to vector<8x8xbf16>
    %73 = vector.extract_strided_slice %13 {offsets = [0, 16], sizes = [8, 8], strides = [1, 1]} : vector<16x32xbf16> to vector<8x8xbf16>
    %74 = vector.extract_strided_slice %15 {offsets = [0, 16], sizes = [8, 8], strides = [1, 1]} : vector<16x32xbf16> to vector<8x8xbf16>
    %cst_28 = arith.constant dense<0.000000e+00> : vector<8x8xf32>
    %75 = tpu.matmul %72, %73, %cst_28 {dimension_numbers = #tpu.dot_dimension_numbers<[1], [1], [0], [0], [0, 0, 1, 0], [], []>} : vector<8x8xbf16>, vector<8x8xbf16>, vector<8x8xf32> -> vector<8x8xf32>
    %cst_29 = arith.constant 0.353553385 : f32
    %76 = vector.broadcast %cst_29 : f32 to vector<8x8xf32>
    %77 = arith.mulf %75, %76 : vector<8x8xf32>
    %78 = vector.broadcast %18 : vector<1x8xf32> to vector<8x8xf32>
    %79 = arith.addf %77, %78 : vector<8x8xf32>
    %c0_30 = arith.constant 0 : index
    %c0_31 = arith.constant 0 : index
    %c16 = arith.constant 16 : index
    %80 = vector.load %arg16[%c0_30, %c0_31, %c16] : memref<2x8x32xf32, #tpu.memory_space<vmem>>, vector<1x8x8xf32>
    %81 = vector.shape_cast %80 : vector<1x8x8xf32> to vector<8x8xf32>
    %82 = vector.shape_cast %79 : vector<8x8xf32> to vector<1x8x8xf32>
    tpu.vector_store %arg16[%c0_30, %c0_31, %c16], %82 {strides = array<i32>} : memref<2x8x32xf32, #tpu.memory_space<vmem>>, vector<1x8x8xf32>,
    %cst_32 = arith.constant dense<0xFF800000> : vector<8xf32>
    %83 = vector.multi_reduction <maximumf>, %79, %cst_32 [1] : vector<8x8xf32> to vector<8xf32>
    %84 = vector.shape_cast %83 : vector<8xf32> to vector<8x1xf32>
    %85 = vector.broadcast %84 : vector<8x1xf32> to vector<8x8xf32>
    %86 = arith.subf %79, %85 : vector<8x8xf32>
    %87 = math.exp %86 : vector<8x8xf32>
    %cst_33 = arith.constant dense<0.000000e+00> : vector<8xf32>
    %88 = vector.multi_reduction <add>, %87, %cst_33 [1] : vector<8x8xf32> to vector<8xf32>
    %89 = vector.shape_cast %88 : vector<8xf32> to vector<8x1xf32>
    %90 = tpu.reciprocal %89 {approx = true} : vector<8x1xf32> -> vector<8x1xf32>
    %91 = vector.broadcast %90 : vector<8x1xf32> to vector<8x8xf32>
    %92 = arith.mulf %87, %91 : vector<8x8xf32>
    %93 = arith.truncf %92 : vector<8x8xf32> to vector<8x8xbf16>
    %cst_34 = arith.constant dense<0.000000e+00> : vector<8x8xf32>
    %94 = tpu.matmul %93, %74, %cst_34 {dimension_numbers = #tpu.dot_dimension_numbers<[1], [0], [0], [1], [0, 0, 1, 1], [], []>} : vector<8x8xbf16>, vector<8x8xbf16>, vector<8x8xf32> -> vector<8x8xf32>
    %95 = arith.truncf %94 : vector<8x8xf32> to vector<8x8xbf16>
    %96 = vector.extract_strided_slice %16 {offsets = [16, 0], sizes = [8, 32], strides = [1, 1]} : vector<32x32xbf16> to vector<8x32xbf16>
    %cst_35 = arith.constant dense<0.000000e+00> : vector<8x32xf32>
    %97 = tpu.matmul %95, %96, %cst_35 {dimension_numbers = #tpu.dot_dimension_numbers<[1], [0], [0], [1], [0, 0, 1, 1], [], []>} : vector<8x8xbf16>, vector<8x32xbf16>, vector<8x32xf32> -> vector<8x32xf32>
    %98 = arith.addf %71, %97 : vector<8x32xf32>
    %99 = vector.extract_strided_slice %11 {offsets = [0, 24], sizes = [8, 8], strides = [1, 1]} : vector<16x32xbf16> to vector<8x8xbf16>
    %100 = vector.extract_strided_slice %13 {offsets = [0, 24], sizes = [8, 8], strides = [1, 1]} : vector<16x32xbf16> to vector<8x8xbf16>
    %101 = vector.extract_strided_slice %15 {offsets = [0, 24], sizes = [8, 8], strides = [1, 1]} : vector<16x32xbf16> to vector<8x8xbf16>
    %cst_36 = arith.constant dense<0.000000e+00> : vector<8x8xf32>
    %102 = tpu.matmul %99, %100, %cst_36 {dimension_numbers = #tpu.dot_dimension_numbers<[1], [1], [0], [0], [0, 0, 1, 0], [], []>} : vector<8x8xbf16>, vector<8x8xbf16>, vector<8x8xf32> -> vector<8x8xf32>
    %cst_37 = arith.constant 0.353553385 : f32
    %103 = vector.broadcast %cst_37 : f32 to vector<8x8xf32>
    %104 = arith.mulf %102, %103 : vector<8x8xf32>
    %105 = vector.broadcast %18 : vector<1x8xf32> to vector<8x8xf32>
    %106 = arith.addf %104, %105 : vector<8x8xf32>
    %c0_38 = arith.constant 0 : index
    %c0_39 = arith.constant 0 : index
    %c24 = arith.constant 24 : index
    %107 = vector.load %arg16[%c0_38, %c0_39, %c24] : memref<2x8x32xf32, #tpu.memory_space<vmem>>, vector<1x8x8xf32>
    %108 = vector.shape_cast %107 : vector<1x8x8xf32> to vector<8x8xf32>
    %109 = vector.shape_cast %106 : vector<8x8xf32> to vector<1x8x8xf32>
    tpu.vector_store %arg16[%c0_38, %c0_39, %c24], %109 {strides = array<i32>} : memref<2x8x32xf32, #tpu.memory_space<vmem>>, vector<1x8x8xf32>,
    %cst_40 = arith.constant dense<0xFF800000> : vector<8xf32>
    %110 = vector.multi_reduction <maximumf>, %106, %cst_40 [1] : vector<8x8xf32> to vector<8xf32>
    %111 = vector.shape_cast %110 : vector<8xf32> to vector<8x1xf32>
    %112 = vector.broadcast %111 : vector<8x1xf32> to vector<8x8xf32>
    %113 = arith.subf %106, %112 : vector<8x8xf32>
    %114 = math.exp %113 : vector<8x8xf32>
    %cst_41 = arith.constant dense<0.000000e+00> : vector<8xf32>
    %115 = vector.multi_reduction <add>, %114, %cst_41 [1] : vector<8x8xf32> to vector<8xf32>
    %116 = vector.shape_cast %115 : vector<8xf32> to vector<8x1xf32>
    %117 = tpu.reciprocal %116 {approx = true} : vector<8x1xf32> -> vector<8x1xf32>
    %118 = vector.broadcast %117 : vector<8x1xf32> to vector<8x8xf32>
    %119 = arith.mulf %114, %118 : vector<8x8xf32>
    %120 = arith.truncf %119 : vector<8x8xf32> to vector<8x8xbf16>
    %cst_42 = arith.constant dense<0.000000e+00> : vector<8x8xf32>
    %121 = tpu.matmul %120, %101, %cst_42 {dimension_numbers = #tpu.dot_dimension_numbers<[1], [0], [0], [1], [0, 0, 1, 1], [], []>} : vector<8x8xbf16>, vector<8x8xbf16>, vector<8x8xf32> -> vector<8x8xf32>
    %122 = arith.truncf %121 : vector<8x8xf32> to vector<8x8xbf16>
    %123 = vector.extract_strided_slice %16 {offsets = [24, 0], sizes = [8, 32], strides = [1, 1]} : vector<32x32xbf16> to vector<8x32xbf16>
    %cst_43 = arith.constant dense<0.000000e+00> : vector<8x32xf32>
    %124 = tpu.matmul %122, %123, %cst_43 {dimension_numbers = #tpu.dot_dimension_numbers<[1], [0], [0], [1], [0, 0, 1, 1], [], []>} : vector<8x8xbf16>, vector<8x32xbf16>, vector<8x32xf32> -> vector<8x32xf32>
    %125 = arith.addf %98, %124 : vector<8x32xf32>
    %c1 = arith.constant 1 : index
    %c0_44 = arith.constant 0 : index
    %c0_45 = arith.constant 0 : index
    %126 = vector.load %arg2[%c1, %c0_44, %c0_45] : memref<2x1x8xf32, #tpu.memory_space<vmem>>, vector<1x1x8xf32>
    %127 = vector.shape_cast %126 : vector<1x1x8xf32> to vector<1x8xf32>
    %128 = vector.extract_strided_slice %11 {offsets = [8, 0], sizes = [8, 8], strides = [1, 1]} : vector<16x32xbf16> to vector<8x8xbf16>
    %129 = vector.extract_strided_slice %13 {offsets = [8, 0], sizes = [8, 8], strides = [1, 1]} : vector<16x32xbf16> to vector<8x8xbf16>
    %130 = vector.extract_strided_slice %15 {offsets = [8, 0], sizes = [8, 8], strides = [1, 1]} : vector<16x32xbf16> to vector<8x8xbf16>
    %cst_46 = arith.constant dense<0.000000e+00> : vector<8x8xf32>
    %131 = tpu.matmul %128, %129, %cst_46 {dimension_numbers = #tpu.dot_dimension_numbers<[1], [1], [0], [0], [0, 0, 1, 0], [], []>} : vector<8x8xbf16>, vector<8x8xbf16>, vector<8x8xf32> -> vector<8x8xf32>
    %cst_47 = arith.constant 0.353553385 : f32
    %132 = vector.broadcast %cst_47 : f32 to vector<8x8xf32>
    %133 = arith.mulf %131, %132 : vector<8x8xf32>
    %134 = vector.broadcast %127 : vector<1x8xf32> to vector<8x8xf32>
    %135 = arith.addf %133, %134 : vector<8x8xf32>
    %c1_48 = arith.constant 1 : index
    %c0_49 = arith.constant 0 : index
    %c0_50 = arith.constant 0 : index
    %136 = vector.load %arg16[%c1_48, %c0_49, %c0_50] : memref<2x8x32xf32, #tpu.memory_space<vmem>>, vector<1x8x8xf32>
    %137 = vector.shape_cast %136 : vector<1x8x8xf32> to vector<8x8xf32>
    %138 = vector.shape_cast %135 : vector<8x8xf32> to vector<1x8x8xf32>
    tpu.vector_store %arg16[%c1_48, %c0_49, %c0_50], %138 {strides = array<i32>} : memref<2x8x32xf32, #tpu.memory_space<vmem>>, vector<1x8x8xf32>,
    %cst_51 = arith.constant dense<0xFF800000> : vector<8xf32>
    %139 = vector.multi_reduction <maximumf>, %135, %cst_51 [1] : vector<8x8xf32> to vector<8xf32>
    %140 = vector.shape_cast %139 : vector<8xf32> to vector<8x1xf32>
    %141 = vector.broadcast %140 : vector<8x1xf32> to vector<8x8xf32>
    %142 = arith.subf %135, %141 : vector<8x8xf32>
    %143 = math.exp %142 : vector<8x8xf32>
    %cst_52 = arith.constant dense<0.000000e+00> : vector<8xf32>
    %144 = vector.multi_reduction <add>, %143, %cst_52 [1] : vector<8x8xf32> to vector<8xf32>
    %145 = vector.shape_cast %144 : vector<8xf32> to vector<8x1xf32>
    %146 = tpu.reciprocal %145 {approx = true} : vector<8x1xf32> -> vector<8x1xf32>
    %147 = vector.broadcast %146 : vector<8x1xf32> to vector<8x8xf32>
    %148 = arith.mulf %143, %147 : vector<8x8xf32>
    %149 = arith.truncf %148 : vector<8x8xf32> to vector<8x8xbf16>
    %cst_53 = arith.constant dense<0.000000e+00> : vector<8x8xf32>
    %150 = tpu.matmul %149, %130, %cst_53 {dimension_numbers = #tpu.dot_dimension_numbers<[1], [0], [0], [1], [0, 0, 1, 1], [], []>} : vector<8x8xbf16>, vector<8x8xbf16>, vector<8x8xf32> -> vector<8x8xf32>
    %151 = arith.truncf %150 : vector<8x8xf32> to vector<8x8xbf16>
    %152 = vector.extract_strided_slice %16 {offsets = [0, 0], sizes = [8, 32], strides = [1, 1]} : vector<32x32xbf16> to vector<8x32xbf16>
    %cst_54 = arith.constant dense<0.000000e+00> : vector<8x32xf32>
    %153 = tpu.matmul %151, %152, %cst_54 {dimension_numbers = #tpu.dot_dimension_numbers<[1], [0], [0], [1], [0, 0, 1, 1], [], []>} : vector<8x8xbf16>, vector<8x32xbf16>, vector<8x32xf32> -> vector<8x32xf32>
    %154 = vector.extract_strided_slice %11 {offsets = [8, 8], sizes = [8, 8], strides = [1, 1]} : vector<16x32xbf16> to vector<8x8xbf16>
    %155 = vector.extract_strided_slice %13 {offsets = [8, 8], sizes = [8, 8], strides = [1, 1]} : vector<16x32xbf16> to vector<8x8xbf16>
    %156 = vector.extract_strided_slice %15 {offsets = [8, 8], sizes = [8, 8], strides = [1, 1]} : vector<16x32xbf16> to vector<8x8xbf16>
    %cst_55 = arith.constant dense<0.000000e+00> : vector<8x8xf32>
    %157 = tpu.matmul %154, %155, %cst_55 {dimension_numbers = #tpu.dot_dimension_numbers<[1], [1], [0], [0], [0, 0, 1, 0], [], []>} : vector<8x8xbf16>, vector<8x8xbf16>, vector<8x8xf32> -> vector<8x8xf32>
    %cst_56 = arith.constant 0.353553385 : f32
    %158 = vector.broadcast %cst_56 : f32 to vector<8x8xf32>
    %159 = arith.mulf %157, %158 : vector<8x8xf32>
    %160 = vector.broadcast %127 : vector<1x8xf32> to vector<8x8xf32>
    %161 = arith.addf %159, %160 : vector<8x8xf32>
    %c1_57 = arith.constant 1 : index
    %c0_58 = arith.constant 0 : index
    %c8_59 = arith.constant 8 : index
    %162 = vector.load %arg16[%c1_57, %c0_58, %c8_59] : memref<2x8x32xf32, #tpu.memory_space<vmem>>, vector<1x8x8xf32>
    %163 = vector.shape_cast %162 : vector<1x8x8xf32> to vector<8x8xf32>
    %164 = vector.shape_cast %161 : vector<8x8xf32> to vector<1x8x8xf32>
    tpu.vector_store %arg16[%c1_57, %c0_58, %c8_59], %164 {strides = array<i32>} : memref<2x8x32xf32, #tpu.memory_space<vmem>>, vector<1x8x8xf32>,
    %cst_60 = arith.constant dense<0xFF800000> : vector<8xf32>
    %165 = vector.multi_reduction <maximumf>, %161, %cst_60 [1] : vector<8x8xf32> to vector<8xf32>
    %166 = vector.shape_cast %165 : vector<8xf32> to vector<8x1xf32>
    %167 = vector.broadcast %166 : vector<8x1xf32> to vector<8x8xf32>
    %168 = arith.subf %161, %167 : vector<8x8xf32>
    %169 = math.exp %168 : vector<8x8xf32>
    %cst_61 = arith.constant dense<0.000000e+00> : vector<8xf32>
    %170 = vector.multi_reduction <add>, %169, %cst_61 [1] : vector<8x8xf32> to vector<8xf32>
    %171 = vector.shape_cast %170 : vector<8xf32> to vector<8x1xf32>
    %172 = tpu.reciprocal %171 {approx = true} : vector<8x1xf32> -> vector<8x1xf32>
    %173 = vector.broadcast %172 : vector<8x1xf32> to vector<8x8xf32>
    %174 = arith.mulf %169, %173 : vector<8x8xf32>
    %175 = arith.truncf %174 : vector<8x8xf32> to vector<8x8xbf16>
    %cst_62 = arith.constant dense<0.000000e+00> : vector<8x8xf32>
    %176 = tpu.matmul %175, %156, %cst_62 {dimension_numbers = #tpu.dot_dimension_numbers<[1], [0], [0], [1], [0, 0, 1, 1], [], []>} : vector<8x8xbf16>, vector<8x8xbf16>, vector<8x8xf32> -> vector<8x8xf32>
    %177 = arith.truncf %176 : vector<8x8xf32> to vector<8x8xbf16>
    %178 = vector.extract_strided_slice %16 {offsets = [8, 0], sizes = [8, 32], strides = [1, 1]} : vector<32x32xbf16> to vector<8x32xbf16>
    %cst_63 = arith.constant dense<0.000000e+00> : vector<8x32xf32>
    %179 = tpu.matmul %177, %178, %cst_63 {dimension_numbers = #tpu.dot_dimension_numbers<[1], [0], [0], [1], [0, 0, 1, 1], [], []>} : vector<8x8xbf16>, vector<8x32xbf16>, vector<8x32xf32> -> vector<8x32xf32>
    %180 = arith.addf %153, %179 : vector<8x32xf32>
    %181 = vector.extract_strided_slice %11 {offsets = [8, 16], sizes = [8, 8], strides = [1, 1]} : vector<16x32xbf16> to vector<8x8xbf16>
    %182 = vector.extract_strided_slice %13 {offsets = [8, 16], sizes = [8, 8], strides = [1, 1]} : vector<16x32xbf16> to vector<8x8xbf16>
    %183 = vector.extract_strided_slice %15 {offsets = [8, 16], sizes = [8, 8], strides = [1, 1]} : vector<16x32xbf16> to vector<8x8xbf16>
    %cst_64 = arith.constant dense<0.000000e+00> : vector<8x8xf32>
    %184 = tpu.matmul %181, %182, %cst_64 {dimension_numbers = #tpu.dot_dimension_numbers<[1], [1], [0], [0], [0, 0, 1, 0], [], []>} : vector<8x8xbf16>, vector<8x8xbf16>, vector<8x8xf32> -> vector<8x8xf32>
    %cst_65 = arith.constant 0.353553385 : f32
    %185 = vector.broadcast %cst_65 : f32 to vector<8x8xf32>
    %186 = arith.mulf %184, %185 : vector<8x8xf32>
    %187 = vector.broadcast %127 : vector<1x8xf32> to vector<8x8xf32>
    %188 = arith.addf %186, %187 : vector<8x8xf32>
    %c1_66 = arith.constant 1 : index
    %c0_67 = arith.constant 0 : index
    %c16_68 = arith.constant 16 : index
    %189 = vector.load %arg16[%c1_66, %c0_67, %c16_68] : memref<2x8x32xf32, #tpu.memory_space<vmem>>, vector<1x8x8xf32>
    %190 = vector.shape_cast %189 : vector<1x8x8xf32> to vector<8x8xf32>
    %191 = vector.shape_cast %188 : vector<8x8xf32> to vector<1x8x8xf32>
    tpu.vector_store %arg16[%c1_66, %c0_67, %c16_68], %191 {strides = array<i32>} : memref<2x8x32xf32, #tpu.memory_space<vmem>>, vector<1x8x8xf32>,
    %cst_69 = arith.constant dense<0xFF800000> : vector<8xf32>
    %192 = vector.multi_reduction <maximumf>, %188, %cst_69 [1] : vector<8x8xf32> to vector<8xf32>
    %193 = vector.shape_cast %192 : vector<8xf32> to vector<8x1xf32>
    %194 = vector.broadcast %193 : vector<8x1xf32> to vector<8x8xf32>
    %195 = arith.subf %188, %194 : vector<8x8xf32>
    %196 = math.exp %195 : vector<8x8xf32>
    %cst_70 = arith.constant dense<0.000000e+00> : vector<8xf32>
    %197 = vector.multi_reduction <add>, %196, %cst_70 [1] : vector<8x8xf32> to vector<8xf32>
    %198 = vector.shape_cast %197 : vector<8xf32> to vector<8x1xf32>
    %199 = tpu.reciprocal %198 {approx = true} : vector<8x1xf32> -> vector<8x1xf32>
    %200 = vector.broadcast %199 : vector<8x1xf32> to vector<8x8xf32>
    %201 = arith.mulf %196, %200 : vector<8x8xf32>
    %202 = arith.truncf %201 : vector<8x8xf32> to vector<8x8xbf16>
    %cst_71 = arith.constant dense<0.000000e+00> : vector<8x8xf32>
    %203 = tpu.matmul %202, %183, %cst_71 {dimension_numbers = #tpu.dot_dimension_numbers<[1], [0], [0], [1], [0, 0, 1, 1], [], []>} : vector<8x8xbf16>, vector<8x8xbf16>, vector<8x8xf32> -> vector<8x8xf32>
    %204 = arith.truncf %203 : vector<8x8xf32> to vector<8x8xbf16>
    %205 = vector.extract_strided_slice %16 {offsets = [16, 0], sizes = [8, 32], strides = [1, 1]} : vector<32x32xbf16> to vector<8x32xbf16>
    %cst_72 = arith.constant dense<0.000000e+00> : vector<8x32xf32>
    %206 = tpu.matmul %204, %205, %cst_72 {dimension_numbers = #tpu.dot_dimension_numbers<[1], [0], [0], [1], [0, 0, 1, 1], [], []>} : vector<8x8xbf16>, vector<8x32xbf16>, vector<8x32xf32> -> vector<8x32xf32>
    %207 = arith.addf %180, %206 : vector<8x32xf32>
    %208 = vector.extract_strided_slice %11 {offsets = [8, 24], sizes = [8, 8], strides = [1, 1]} : vector<16x32xbf16> to vector<8x8xbf16>
    %209 = vector.extract_strided_slice %13 {offsets = [8, 24], sizes = [8, 8], strides = [1, 1]} : vector<16x32xbf16> to vector<8x8xbf16>
    %210 = vector.extract_strided_slice %15 {offsets = [8, 24], sizes = [8, 8], strides = [1, 1]} : vector<16x32xbf16> to vector<8x8xbf16>
    %cst_73 = arith.constant dense<0.000000e+00> : vector<8x8xf32>
    %211 = tpu.matmul %208, %209, %cst_73 {dimension_numbers = #tpu.dot_dimension_numbers<[1], [1], [0], [0], [0, 0, 1, 0], [], []>} : vector<8x8xbf16>, vector<8x8xbf16>, vector<8x8xf32> -> vector<8x8xf32>
    %cst_74 = arith.constant 0.353553385 : f32
    %212 = vector.broadcast %cst_74 : f32 to vector<8x8xf32>
    %213 = arith.mulf %211, %212 : vector<8x8xf32>
    %214 = vector.broadcast %127 : vector<1x8xf32> to vector<8x8xf32>
    %215 = arith.addf %213, %214 : vector<8x8xf32>
    %c1_75 = arith.constant 1 : index
    %c0_76 = arith.constant 0 : index
    %c24_77 = arith.constant 24 : index
    %216 = vector.load %arg16[%c1_75, %c0_76, %c24_77] : memref<2x8x32xf32, #tpu.memory_space<vmem>>, vector<1x8x8xf32>
    %217 = vector.shape_cast %216 : vector<1x8x8xf32> to vector<8x8xf32>
    %218 = vector.shape_cast %215 : vector<8x8xf32> to vector<1x8x8xf32>
    tpu.vector_store %arg16[%c1_75, %c0_76, %c24_77], %218 {strides = array<i32>} : memref<2x8x32xf32, #tpu.memory_space<vmem>>, vector<1x8x8xf32>,
    %cst_78 = arith.constant dense<0xFF800000> : vector<8xf32>
    %219 = vector.multi_reduction <maximumf>, %215, %cst_78 [1] : vector<8x8xf32> to vector<8xf32>
    %220 = vector.shape_cast %219 : vector<8xf32> to vector<8x1xf32>
    %221 = vector.broadcast %220 : vector<8x1xf32> to vector<8x8xf32>
    %222 = arith.subf %215, %221 : vector<8x8xf32>
    %223 = math.exp %222 : vector<8x8xf32>
    %cst_79 = arith.constant dense<0.000000e+00> : vector<8xf32>
    %224 = vector.multi_reduction <add>, %223, %cst_79 [1] : vector<8x8xf32> to vector<8xf32>
    %225 = vector.shape_cast %224 : vector<8xf32> to vector<8x1xf32>
    %226 = tpu.reciprocal %225 {approx = true} : vector<8x1xf32> -> vector<8x1xf32>
    %227 = vector.broadcast %226 : vector<8x1xf32> to vector<8x8xf32>
    %228 = arith.mulf %223, %227 : vector<8x8xf32>
    %229 = arith.truncf %228 : vector<8x8xf32> to vector<8x8xbf16>
    %cst_80 = arith.constant dense<0.000000e+00> : vector<8x8xf32>
    %230 = tpu.matmul %229, %210, %cst_80 {dimension_numbers = #tpu.dot_dimension_numbers<[1], [0], [0], [1], [0, 0, 1, 1], [], []>} : vector<8x8xbf16>, vector<8x8xbf16>, vector<8x8xf32> -> vector<8x8xf32>
    %231 = arith.truncf %230 : vector<8x8xf32> to vector<8x8xbf16>
    %232 = vector.extract_strided_slice %16 {offsets = [24, 0], sizes = [8, 32], strides = [1, 1]} : vector<32x32xbf16> to vector<8x32xbf16>
    %cst_81 = arith.constant dense<0.000000e+00> : vector<8x32xf32>
    %233 = tpu.matmul %231, %232, %cst_81 {dimension_numbers = #tpu.dot_dimension_numbers<[1], [0], [0], [1], [0, 0, 1, 1], [], []>} : vector<8x8xbf16>, vector<8x32xbf16>, vector<8x32xf32> -> vector<8x32xf32>
    %234 = arith.addf %207, %233 : vector<8x32xf32>
    %235 = tpu.concatenate %125, %234 in 0 : vector<8x32xf32>, vector<8x32xf32> -> vector<16x32xf32>
    %c0_82 = arith.constant 0 : index
    %c0_83 = arith.constant 0 : index
    %236 = vector.load %arg6[%c0_82, %c0_83] : memref<1x32xf32, #tpu.memory_space<vmem>>, vector<1x32xf32>
    %237 = vector.shape_cast %236 : vector<1x32xf32> to vector<32xf32>
    %238 = vector.shape_cast %237 : vector<32xf32> to vector<1x32xf32>
    %239 = vector.broadcast %238 : vector<1x32xf32> to vector<16x32xf32>
    %240 = arith.addf %235, %239 : vector<16x32xf32>
    %241 = arith.addf %1, %240 : vector<16x32xf32>
    %cst_84 = arith.constant dense<0.000000e+00> : vector<16xf32>
    %242 = vector.multi_reduction <add>, %241, %cst_84 [1] : vector<16x32xf32> to vector<16xf32>
    %243 = vector.shape_cast %242 : vector<16xf32> to vector<16x1xf32>
    %cst_85 = arith.constant 3.200000e+01 : f32
    %244 = vector.broadcast %cst_85 : f32 to vector<16x1xf32>
    %245 = arith.divf %243, %244 : vector<16x1xf32>
    %246 = vector.broadcast %245 : vector<16x1xf32> to vector<16x32xf32>
    %247 = arith.subf %241, %246 : vector<16x32xf32>
    %248 = arith.mulf %247, %247 : vector<16x32xf32>
    %cst_86 = arith.constant dense<0.000000e+00> : vector<16xf32>
    %249 = vector.multi_reduction <add>, %248, %cst_86 [1] : vector<16x32xf32> to vector<16xf32>
    %250 = vector.shape_cast %249 : vector<16xf32> to vector<16x1xf32>
    %cst_87 = arith.constant 3.200000e+01 : f32
    %251 = vector.broadcast %cst_87 : f32 to vector<16x1xf32>
    %252 = arith.divf %250, %251 : vector<16x1xf32>
    %253 = vector.broadcast %245 : vector<16x1xf32> to vector<16x32xf32>
    %254 = arith.subf %241, %253 : vector<16x32xf32>
    %cst_88 = arith.constant 9.99999996E-13 : f32
    %255 = vector.broadcast %cst_88 : f32 to vector<16x1xf32>
    %256 = arith.addf %252, %255 : vector<16x1xf32>
    %257 = math.rsqrt %256 : vector<16x1xf32>
    %258 = vector.broadcast %257 : vector<16x1xf32> to vector<16x32xf32>
    %259 = arith.mulf %254, %258 : vector<16x32xf32>
    %c0_89 = arith.constant 0 : index
    %c0_90 = arith.constant 0 : index
    %260 = vector.load %arg11[%c0_89, %c0_90] : memref<1x32xf32, #tpu.memory_space<vmem>>, vector<1x32xf32>
    %261 = vector.shape_cast %260 : vector<1x32xf32> to vector<32xf32>
    %262 = vector.shape_cast %261 : vector<32xf32> to vector<1x32xf32>
    %263 = vector.broadcast %262 : vector<1x32xf32> to vector<16x32xf32>
    %264 = arith.mulf %259, %263 : vector<16x32xf32>
    %c0_91 = arith.constant 0 : index
    %c0_92 = arith.constant 0 : index
    %265 = vector.load %arg12[%c0_91, %c0_92] : memref<1x32xf32, #tpu.memory_space<vmem>>, vector<1x32xf32>
    %266 = vector.shape_cast %265 : vector<1x32xf32> to vector<32xf32>
    %267 = vector.shape_cast %266 : vector<32xf32> to vector<1x32xf32>
    %268 = vector.broadcast %267 : vector<1x32xf32> to vector<16x32xf32>
    %269 = arith.addf %264, %268 : vector<16x32xf32>
    %270 = arith.truncf %269 : vector<16x32xf32> to vector<16x32xbf16>
    %c0_93 = arith.constant 0 : index
    %c0_94 = arith.constant 0 : index
    %271 = vector.load %arg7[%c0_93, %c0_94] : memref<32x64xbf16, #tpu.memory_space<vmem>>, vector<32x64xbf16>
    %cst_95 = arith.constant dense<0.000000e+00> : vector<16x64xf32>
    %272 = tpu.matmul %270, %271, %cst_95 {dimension_numbers = #tpu.dot_dimension_numbers<[1], [0], [0], [1], [0, 0, 1, 1], [], []>} : vector<16x32xbf16>, vector<32x64xbf16>, vector<16x64xf32> -> vector<16x64xf32>
    %c0_96 = arith.constant 0 : index
    %c0_97 = arith.constant 0 : index
    %273 = vector.load %arg8[%c0_96, %c0_97] : memref<1x64xf32, #tpu.memory_space<vmem>>, vector<1x64xf32>
    %274 = vector.shape_cast %273 : vector<1x64xf32> to vector<64xf32>
    %275 = vector.shape_cast %274 : vector<64xf32> to vector<1x64xf32>
    %276 = vector.broadcast %275 : vector<1x64xf32> to vector<16x64xf32>
    %277 = arith.addf %272, %276 : vector<16x64xf32>
    %cst_98 = arith.constant 0.000000e+00 : f32
    %278 = vector.broadcast %cst_98 : f32 to vector<16x64xf32>
    %279 = arith.maximumf %277, %278 : vector<16x64xf32>
    %280 = arith.truncf %279 : vector<16x64xf32> to vector<16x64xbf16>
    %c0_99 = arith.constant 0 : index
    %c0_100 = arith.constant 0 : index
    %281 = vector.load %arg9[%c0_99, %c0_100] : memref<64x32xbf16, #tpu.memory_space<vmem>>, vector<64x32xbf16>
    %cst_101 = arith.constant dense<0.000000e+00> : vector<16x32xf32>
    %282 = tpu.matmul %280, %281, %cst_101 {dimension_numbers = #tpu.dot_dimension_numbers<[1], [0], [0], [1], [0, 0, 1, 1], [], []>} : vector<16x64xbf16>, vector<64x32xbf16>, vector<16x32xf32> -> vector<16x32xf32>
    %c0_102 = arith.constant 0 : index
    %c0_103 = arith.constant 0 : index
    %283 = vector.load %arg10[%c0_102, %c0_103] : memref<1x32xf32, #tpu.memory_space<vmem>>, vector<1x32xf32>
    %284 = vector.shape_cast %283 : vector<1x32xf32> to vector<32xf32>
    %285 = vector.shape_cast %284 : vector<32xf32> to vector<1x32xf32>
    %286 = vector.broadcast %285 : vector<1x32xf32> to vector<16x32xf32>
    %287 = arith.addf %282, %286 : vector<16x32xf32>
    %288 = arith.addf %269, %287 : vector<16x32xf32>
    %cst_104 = arith.constant dense<0.000000e+00> : vector<16xf32>
    %289 = vector.multi_reduction <add>, %288, %cst_104 [1] : vector<16x32xf32> to vector<16xf32>
    %290 = vector.shape_cast %289 : vector<16xf32> to vector<16x1xf32>
    %cst_105 = arith.constant 3.200000e+01 : f32
    %291 = vector.broadcast %cst_105 : f32 to vector<16x1xf32>
    %292 = arith.divf %290, %291 : vector<16x1xf32>
    %293 = vector.broadcast %292 : vector<16x1xf32> to vector<16x32xf32>
    %294 = arith.subf %288, %293 : vector<16x32xf32>
    %295 = arith.mulf %294, %294 : vector<16x32xf32>
    %cst_106 = arith.constant dense<0.000000e+00> : vector<16xf32>
    %296 = vector.multi_reduction <add>, %295, %cst_106 [1] : vector<16x32xf32> to vector<16xf32>
    %297 = vector.shape_cast %296 : vector<16xf32> to vector<16x1xf32>
    %cst_107 = arith.constant 3.200000e+01 : f32
    %298 = vector.broadcast %cst_107 : f32 to vector<16x1xf32>
    %299 = arith.divf %297, %298 : vector<16x1xf32>
    %300 = vector.broadcast %292 : vector<16x1xf32> to vector<16x32xf32>
    %301 = arith.subf %288, %300 : vector<16x32xf32>
    %cst_108 = arith.constant 9.99999996E-13 : f32
    %302 = vector.broadcast %cst_108 : f32 to vector<16x1xf32>
    %303 = arith.addf %299, %302 : vector<16x1xf32>
    %304 = math.rsqrt %303 : vector<16x1xf32>
    %305 = vector.broadcast %304 : vector<16x1xf32> to vector<16x32xf32>
    %306 = arith.mulf %301, %305 : vector<16x32xf32>
    %c0_109 = arith.constant 0 : index
    %c0_110 = arith.constant 0 : index
    %307 = vector.load %arg13[%c0_109, %c0_110] : memref<1x32xf32, #tpu.memory_space<vmem>>, vector<1x32xf32>
    %308 = vector.shape_cast %307 : vector<1x32xf32> to vector<32xf32>
    %309 = vector.shape_cast %308 : vector<32xf32> to vector<1x32xf32>
    %310 = vector.broadcast %309 : vector<1x32xf32> to vector<16x32xf32>
    %311 = arith.mulf %306, %310 : vector<16x32xf32>
    %c0_111 = arith.constant 0 : index
    %c0_112 = arith.constant 0 : index
    %312 = vector.load %arg14[%c0_111, %c0_112] : memref<1x32xf32, #tpu.memory_space<vmem>>, vector<1x32xf32>
    %313 = vector.shape_cast %312 : vector<1x32xf32> to vector<32xf32>
    %314 = vector.shape_cast %313 : vector<32xf32> to vector<1x32xf32>
    %315 = vector.broadcast %314 : vector<1x32xf32> to vector<16x32xf32>
    %316 = arith.addf %311, %315 : vector<16x32xf32>
    %317 = vector.shape_cast %316 : vector<16x32xf32> to vector<2x8x32xf32>
    %c0_113 = arith.constant 0 : index
    %c0_114 = arith.constant 0 : index
    %c0_115 = arith.constant 0 : index
    %318 = vector.load %arg15[%c0_113, %c0_114, %c0_115] : memref<2x8x32xf32, #tpu.memory_space<vmem>>, vector<2x8x32xf32>
    tpu.vector_store %arg15[%c0_113, %c0_114, %c0_115], %317 {strides = array<i32>} : memref<2x8x32xf32, #tpu.memory_space<vmem>>, vector<2x8x32xf32>,
    return
  }
  func.func @transform_0(%arg0: i32) -> (i32, i32, i32) {
    %c0_i32 = arith.constant 0 : i32
    %c0_i32_0 = arith.constant 0 : i32
    %c0_i32_1 = arith.constant 0 : i32
    return %arg0, %c0_i32, %c0_i32_0 : i32, i32, i32
  }
  func.func @transform_1(%arg0: i32) -> (i32, i32, i32) {
    %c0_i32 = arith.constant 0 : i32
    %c0_i32_0 = arith.constant 0 : i32
    %c0_i32_1 = arith.constant 0 : i32
    return %arg0, %c0_i32, %c0_i32_0 : i32, i32, i32
  }
  func.func @transform_2(%arg0: i32) -> (i32, i32) {
    %c0_i32 = arith.constant 0 : i32
    %c0_i32_0 = arith.constant 0 : i32
    %c0_i32_1 = arith.constant 0 : i32
    return %c0_i32, %c0_i32_0 : i32, i32
  }
  func.func @transform_3(%arg0: i32) -> (i32, i32) {
    %c0_i32 = arith.constant 0 : i32
    %c0_i32_0 = arith.constant 0 : i32
    %c0_i32_1 = arith.constant 0 : i32
    return %c0_i32, %c0_i32_0 : i32, i32
  }
  func.func @transform_4(%arg0: i32) -> (i32, i32) {
    %c0_i32 = arith.constant 0 : i32
    %c0_i32_0 = arith.constant 0 : i32
    %c0_i32_1 = arith.constant 0 : i32
    return %c0_i32, %c0_i32_0 : i32, i32
  }
  func.func @transform_5(%arg0: i32) -> (i32, i32) {
    %c0_i32 = arith.constant 0 : i32
    %c0_i32_0 = arith.constant 0 : i32
    %c0_i32_1 = arith.constant 0 : i32
    return %c0_i32, %c0_i32_0 : i32, i32
  }
  func.func @transform_6(%arg0: i32) -> (i32, i32) {
    %c0_i32 = arith.constant 0 : i32
    %c0_i32_0 = arith.constant 0 : i32
    %c0_i32_1 = arith.constant 0 : i32
    return %c0_i32, %c0_i32_0 : i32, i32
  }
  func.func @transform_7(%arg0: i32) -> (i32, i32) {
    %c0_i32 = arith.constant 0 : i32
    %c0_i32_0 = arith.constant 0 : i32
    %c0_i32_1 = arith.constant 0 : i32
    return %c0_i32, %c0_i32_0 : i32, i32
  }
  func.func @transform_8(%arg0: i32) -> (i32, i32) {
    %c0_i32 = arith.constant 0 : i32
    %c0_i32_0 = arith.constant 0 : i32
    %c0_i32_1 = arith.constant 0 : i32
    return %c0_i32, %c0_i32_0 : i32, i32
  }
  func.func @transform_9(%arg0: i32) -> (i32, i32) {
    %c0_i32 = arith.constant 0 : i32
    %c0_i32_0 = arith.constant 0 : i32
    %c0_i32_1 = arith.constant 0 : i32
    return %c0_i32, %c0_i32_0 : i32, i32
  }
  func.func @transform_10(%arg0: i32) -> (i32, i32) {
    %c0_i32 = arith.constant 0 : i32
    %c0_i32_0 = arith.constant 0 : i32
    %c0_i32_1 = arith.constant 0 : i32
    return %c0_i32, %c0_i32_0 : i32, i32
  }
  func.func @transform_11(%arg0: i32) -> (i32, i32) {
    %c0_i32 = arith.constant 0 : i32
    %c0_i32_0 = arith.constant 0 : i32
    %c0_i32_1 = arith.constant 0 : i32
    return %c0_i32, %c0_i32_0 : i32, i32
  }
  func.func @transform_12(%arg0: i32) -> (i32, i32) {
    %c0_i32 = arith.constant 0 : i32
    %c0_i32_0 = arith.constant 0 : i32
    %c0_i32_1 = arith.constant 0 : i32
    return %c0_i32, %c0_i32_0 : i32, i32
  }
  func.func @transform_13(%arg0: i32) -> (i32, i32) {
    %c0_i32 = arith.constant 0 : i32
    %c0_i32_0 = arith.constant 0 : i32
    %c0_i32_1 = arith.constant 0 : i32
    return %c0_i32, %c0_i32_0 : i32, i32
  }
  func.func @transform_14(%arg0: i32) -> (i32, i32, i32) {
    %c0_i32 = arith.constant 0 : i32
    %c0_i32_0 = arith.constant 0 : i32
    %c0_i32_1 = arith.constant 0 : i32
    return %arg0, %c0_i32, %c0_i32_0 : i32, i32, i32
  }
  func.func @transform_15(%arg0: i32) -> (i32, i32, i32) {
    %c0_i32 = arith.constant 0 : i32
    %c0_i32_0 = arith.constant 0 : i32
    %c0_i32_1 = arith.constant 0 : i32
    return %arg0, %c0_i32, %c0_i32_0 : i32, i32, i32
  }
}

module attributes {stable_mosaic.version = 11 : i64} {
  func.func @self_att_kernel(%arg0: i32, %arg1: memref<2x8x32xf32, #tpu.memory_space<vmem>>, %arg2: memref<2x1x8xf32, #tpu.memory_space<vmem>>, %arg3: memref<32x96xbf16, #tpu.memory_space<vmem>>, %arg4: memref<1x96xf32, #tpu.memory_space<vmem>>, %arg5: memref<32x32xbf16, #tpu.memory_space<vmem>>, %arg6: memref<1x32xf32, #tpu.memory_space<vmem>>, %arg7: memref<32x64xbf16, #tpu.memory_space<vmem>>, %arg8: memref<1x64xf32, #tpu.memory_space<vmem>>, %arg9: memref<64x32xbf16, #tpu.memory_space<vmem>>, %arg10: memref<1x32xf32, #tpu.memory_space<vmem>>, %arg11: memref<1x32xf32, #tpu.memory_space<vmem>>, %arg12: memref<1x32xf32, #tpu.memory_space<vmem>>, %arg13: memref<1x32xf32, #tpu.memory_space<vmem>>, %arg14: memref<1x32xf32, #tpu.memory_space<vmem>>, %arg15: memref<2x8x32xf32, #tpu.memory_space<vmem>>, %arg16: memref<2x8x32xf32, #tpu.memory_space<vmem>>) attributes {dimension_semantics = [#tpu.dimension_semantics<parallel>], iteration_bounds = array<i64: 2>, scalar_prefetch = 0 : i64, scratch_operands = 0 : i64, tpu.core_type = #tpu.core_type<tc>, window_params = [{transform_indices = @transform_0, window_bounds = array<i64: 2, 8, 32>}, {transform_indices = @transform_1, window_bounds = array<i64: 2, 1, 8>}, {pipeline_mode = #tpu.pipeline_mode<synchronous>, transform_indices = @transform_2, window_bounds = array<i64: 32, 96>}, {pipeline_mode = #tpu.pipeline_mode<synchronous>, transform_indices = @transform_3, window_bounds = array<i64: 1, 96>}, {pipeline_mode = #tpu.pipeline_mode<synchronous>, transform_indices = @transform_4, window_bounds = array<i64: 32, 32>}, {pipeline_mode = #tpu.pipeline_mode<synchronous>, transform_indices = @transform_5, window_bounds = array<i64: 1, 32>}, {pipeline_mode = #tpu.pipeline_mode<synchronous>, transform_indices = @transform_6, window_bounds = array<i64: 32, 64>}, {pipeline_mode = #tpu.pipeline_mode<synchronous>, transform_indices = @transform_7, window_bounds = array<i64: 1, 64>}, {pipeline_mode = #tpu.pipeline_mode<synchronous>, transform_indices = @transform_8, window_bounds = array<i64: 64, 32>}, {pipeline_mode = #tpu.pipeline_mode<synchronous>, transform_indices = @transform_9, window_bounds = array<i64: 1, 32>}, {pipeline_mode = #tpu.pipeline_mode<synchronous>, transform_indices = @transform_10, window_bounds = array<i64: 1, 32>}, {pipeline_mode = #tpu.pipeline_mode<synchronous>, transform_indices = @transform_11, window_bounds = array<i64: 1, 32>}, {pipeline_mode = #tpu.pipeline_mode<synchronous>, transform_indices = @transform_12, window_bounds = array<i64: 1, 32>}, {pipeline_mode = #tpu.pipeline_mode<synchronous>, transform_indices = @transform_13, window_bounds = array<i64: 1, 32>}, {transform_indices = @transform_14, window_bounds = array<i64: 2, 8, 32>}, {transform_indices = @transform_15, window_bounds = array<i64: 2, 8, 32>}]} {
    %c0 = arith.constant 0 : index
    %c0_0 = arith.constant 0 : index
    %c0_1 = arith.constant 0 : index
    %0 = vector.load %arg1[%c0, %c0_0, %c0_1] : memref<2x8x32xf32, #tpu.memory_space<vmem>>, vector<2x8x32xf32>
    %1 = vector.shape_cast %0 : vector<2x8x32xf32> to vector<16x32xf32>
    %2 = arith.truncf %1 : vector<16x32xf32> to vector<16x32xbf16>
    %c0_2 = arith.constant 0 : index
    %c0_3 = arith.constant 0 : index
    %3 = vector.load %arg3[%c0_2, %c0_3] : memref<32x96xbf16, #tpu.memory_space<vmem>>, vector<32x96xbf16>
    %cst = arith.constant dense<0.000000e+00> : vector<16x96xf32>
    %4 = tpu.matmul %2, %3, %cst {dimension_numbers = #tpu.dot_dimension_numbers<[1], [0], [0], [1], [0, 0, 1, 1], [], []>} : vector<16x32xbf16>, vector<32x96xbf16>, vector<16x96xf32> -> vector<16x96xf32>
    %c0_4 = arith.constant 0 : index
    %c0_5 = arith.constant 0 : index
    %5 = vector.load %arg4[%c0_4, %c0_5] : memref<1x96xf32, #tpu.memory_space<vmem>>, vector<1x96xf32>
    %6 = vector.shape_cast %5 : vector<1x96xf32> to vector<96xf32>
    %7 = vector.shape_cast %6 : vector<96xf32> to vector<1x96xf32>
    %8 = vector.broadcast %7 : vector<1x96xf32> to vector<16x96xf32>
    %9 = arith.addf %4, %8 : vector<16x96xf32>
    %10 = vector.extract_strided_slice %9 {offsets = [0, 0], sizes = [16, 32], strides = [1, 1]} : vector<16x96xf32> to vector<16x32xf32>
    %11 = arith.truncf %10 : vector<16x32xf32> to vector<16x32xbf16>
    %12 = vector.extract_strided_slice %9 {offsets = [0, 32], sizes = [16, 32], strides = [1, 1]} : vector<16x96xf32> to vector<16x32xf32>
    %13 = arith.truncf %12 : vector<16x32xf32> to vector<16x32xbf16>
    %14 = vector.extract_strided_slice %9 {offsets = [0, 64], sizes = [16, 32], strides = [1, 1]} : vector<16x96xf32> to vector<16x32xf32>
    %15 = arith.truncf %14 : vector<16x32xf32> to vector<16x32xbf16>
    %c0_6 = arith.constant 0 : index
    %c0_7 = arith.constant 0 : index
    %16 = vector.load %arg5[%c0_6, %c0_7] : memref<32x32xbf16, #tpu.memory_space<vmem>>, vector<32x32xbf16>
    %c0_8 = arith.constant 0 : index
    %c0_9 = arith.constant 0 : index
    %c0_10 = arith.constant 0 : index
    %17 = vector.load %arg2[%c0_8, %c0_9, %c0_10] : memref<2x1x8xf32, #tpu.memory_space<vmem>>, vector<1x1x8xf32>
    %18 = vector.shape_cast %17 : vector<1x1x8xf32> to vector<1x8xf32>
    %19 = vector.extract_strided_slice %11 {offsets = [0, 0], sizes = [8, 8], strides = [1, 1]} : vector<16x32xbf16> to vector<8x8xbf16>
    %20 = vector.extract_strided_slice %13 {offsets = [0, 0], sizes = [8, 8], strides = [1, 1]} : vector<16x32xbf16> to vector<8x8xbf16>
    %21 = vector.extract_strided_slice %15 {offsets = [0, 0], sizes = [8, 8], strides = [1, 1]} : vector<16x32xbf16> to vector<8x8xbf16>
    %cst_11 = arith.constant dense<0.000000e+00> : vector<8x8xf32>
    %22 = tpu.matmul %19, %20, %cst_11 {dimension_numbers = #tpu.dot_dimension_numbers<[1], [1], [0], [0], [0, 0, 1, 0], [], []>} : vector<8x8xbf16>, vector<8x8xbf16>, vector<8x8xf32> -> vector<8x8xf32>
    %cst_12 = arith.constant 0.353553385 : f32
    %23 = vector.broadcast %cst_12 : f32 to vector<8x8xf32>
    %24 = arith.mulf %22, %23 : vector<8x8xf32>
    %25 = vector.broadcast %18 : vector<1x8xf32> to vector<8x8xf32>
    %26 = arith.addf %24, %25 : vector<8x8xf32>
    %c0_13 = arith.constant 0 : index
    %c0_14 = arith.constant 0 : index
    %c0_15 = arith.constant 0 : index
    %27 = vector.load %arg16[%c0_13, %c0_14, %c0_15] : memref<2x8x32xf32, #tpu.memory_space<vmem>>, vector<1x8x8xf32>
    %28 = vector.shape_cast %27 : vector<1x8x8xf32> to vector<8x8xf32>
    %29 = vector.shape_cast %26 : vector<8x8xf32> to vector<1x8x8xf32>
    tpu.vector_store %arg16[%c0_13, %c0_14, %c0_15], %29 {strides = array<i32>} : memref<2x8x32xf32, #tpu.memory_space<vmem>>, vector<1x8x8xf32>,
    %cst_16 = arith.constant dense<0xFF800000> : vector<8xf32>
    %30 = vector.multi_reduction <maximumf>, %26, %cst_16 [1] : vector<8x8xf32> to vector<8xf32>
    %31 = vector.shape_cast %30 : vector<8xf32> to vector<8x1xf32>
    %32 = vector.broadcast %31 : vector<8x1xf32> to vector<8x8xf32>
    %33 = arith.subf %26, %32 : vector<8x8xf32>
    %34 = math.exp %33 : vector<8x8xf32>
    %cst_17 = arith.constant dense<0.000000e+00> : vector<8xf32>
    %35 = vector.multi_reduction <add>, %34, %cst_17 [1] : vector<8x8xf32> to vector<8xf32>
    %36 = vector.shape_cast %35 : vector<8xf32> to vector<8x1xf32>
    %37 = tpu.reciprocal %36 {approx = true} : vector<8x1xf32> -> vector<8x1xf32>
    %38 = vector.broadcast %37 : vector<8x1xf32> to vector<8x8xf32>
    %39 = arith.mulf %34, %38 : vector<8x8xf32>
    %40 = arith.truncf %39 : vector<8x8xf32> to vector<8x8xbf16>
    %cst_18 = arith.constant dense<0.000000e+00> : vector<8x8xf32>
    %41 = tpu.matmul %40, %21, %cst_18 {dimension_numbers = #tpu.dot_dimension_numbers<[1], [0], [0], [1], [0, 0, 1, 1], [], []>} : vector<8x8xbf16>, vector<8x8xbf16>, vector<8x8xf32> -> vector<8x8xf32>
    %42 = arith.truncf %41 : vector<8x8xf32> to vector<8x8xbf16>
    %43 = vector.extract_strided_slice %16 {offsets = [0, 0], sizes = [8, 32], strides = [1, 1]} : vector<32x32xbf16> to vector<8x32xbf16>
    %cst_19 = arith.constant dense<0.000000e+00> : vector<8x32xf32>
    %44 = tpu.matmul %42, %43, %cst_19 {dimension_numbers = #tpu.dot_dimension_numbers<[1], [0], [0], [1], [0, 0, 1, 1], [], []>} : vector<8x8xbf16>, vector<8x32xbf16>, vector<8x32xf32> -> vector<8x32xf32>
    %45 = vector.extract_strided_slice %11 {offsets = [0, 8], sizes = [8, 8], strides = [1, 1]} : vector<16x32xbf16> to vector<8x8xbf16>
    %46 = vector.extract_strided_slice %13 {offsets = [0, 8], sizes = [8, 8], strides = [1, 1]} : vector<16x32xbf16> to vector<8x8xbf16>
    %47 = vector.extract_strided_slice %15 {offsets = [0, 8], sizes = [8, 8], strides = [1, 1]} : vector<16x32xbf16> to vector<8x8xbf16>
    %cst_20 = arith.constant dense<0.000000e+00> : vector<8x8xf32>
    %48 = tpu.matmul %45, %46, %cst_20 {dimension_numbers = #tpu.dot_dimension_numbers<[1], [1], [0], [0], [0, 0, 1, 0], [], []>} : vector<8x8xbf16>, vector<8x8xbf16>, vector<8x8xf32> -> vector<8x8xf32>
    %cst_21 = arith.constant 0.353553385 : f32
    %49 = vector.broadcast %cst_21 : f32 to vector<8x8xf32>
    %50 = arith.mulf %48, %49 : vector<8x8xf32>
    %51 = vector.broadcast %18 : vector<1x8xf32> to vector<8x8xf32>
    %52 = arith.addf %50, %51 : vector<8x8xf32>
    %c0_22 = arith.constant 0 : index
    %c0_23 = arith.constant 0 : index
    %c8 = arith.constant 8 : index
    %53 = vector.load %arg16[%c0_22, %c0_23, %c8] : memref<2x8x32xf32, #tpu.memory_space<vmem>>, vector<1x8x8xf32>
    %54 = vector.shape_cast %53 : vector<1x8x8xf32> to vector<8x8xf32>
    %55 = vector.shape_cast %52 : vector<8x8xf32> to vector<1x8x8xf32>
    tpu.vector_store %arg16[%c0_22, %c0_23, %c8], %55 {strides = array<i32>} : memref<2x8x32xf32, #tpu.memory_space<vmem>>, vector<1x8x8xf32>,
    %cst_24 = arith.constant dense<0xFF800000> : vector<8xf32>
    %56 = vector.multi_reduction <maximumf>, %52, %cst_24 [1] : vector<8x8xf32> to vector<8xf32>
    %57 = vector.shape_cast %56 : vector<8xf32> to vector<8x1xf32>
    %58 = vector.broadcast %57 : vector<8x1xf32> to vector<8x8xf32>
    %59 = arith.subf %52, %58 : vector<8x8xf32>
    %60 = math.exp %59 : vector<8x8xf32>
    %cst_25 = arith.constant dense<0.000000e+00> : vector<8xf32>
    %61 = vector.multi_reduction <add>, %60, %cst_25 [1] : vector<8x8xf32> to vector<8xf32>
    %62 = vector.shape_cast %61 : vector<8xf32> to vector<8x1xf32>
    %63 = tpu.reciprocal %62 {approx = true} : vector<8x1xf32> -> vector<8x1xf32>
    %64 = vector.broadcast %63 : vector<8x1xf32> to vector<8x8xf32>
    %65 = arith.mulf %60, %64 : vector<8x8xf32>
    %66 = arith.truncf %65 : vector<8x8xf32> to vector<8x8xbf16>
    %cst_26 = arith.constant dense<0.000000e+00> : vector<8x8xf32>
    %67 = tpu.matmul %66, %47, %cst_26 {dimension_numbers = #tpu.dot_dimension_numbers<[1], [0], [0], [1], [0, 0, 1, 1], [], []>} : vector<8x8xbf16>, vector<8x8xbf16>, vector<8x8xf32> -> vector<8x8xf32>
    %68 = arith.truncf %67 : vector<8x8xf32> to vector<8x8xbf16>
    %69 = vector.extract_strided_slice %16 {offsets = [8, 0], sizes = [8, 32], strides = [1, 1]} : vector<32x32xbf16> to vector<8x32xbf16>
    %cst_27 = arith.constant dense<0.000000e+00> : vector<8x32xf32>
    %70 = tpu.matmul %68, %69, %cst_27 {dimension_numbers = #tpu.dot_dimension_numbers<[1], [0], [0], [1], [0, 0, 1, 1], [], []>} : vector<8x8xbf16>, vector<8x32xbf16>, vector<8x32xf32> -> vector<8x32xf32>
    %71 = arith.addf %44, %70 : vector<8x32xf32>
    %72 = vector.extract_strided_slice %11 {offsets = [0, 16], sizes = [8, 8], strides = [1, 1]} : vector<16x32xbf16> to vector<8x8xbf16>
    %73 = vector.extract_strided_slice %13 {offsets = [0, 16], sizes = [8, 8], strides = [1, 1]} : vector<16x32xbf16> to vector<8x8xbf16>
    %74 = vector.extract_strided_slice %15 {offsets = [0, 16], sizes = [8, 8], strides = [1, 1]} : vector<16x32xbf16> to vector<8x8xbf16>
    %cst_28 = arith.constant dense<0.000000e+00> : vector<8x8xf32>
    %75 = tpu.matmul %72, %73, %cst_28 {dimension_numbers = #tpu.dot_dimension_numbers<[1], [1], [0], [0], [0, 0, 1, 0], [], []>} : vector<8x8xbf16>, vector<8x8xbf16>, vector<8x8xf32> -> vector<8x8xf32>
    %cst_29 = arith.constant 0.353553385 : f32
    %76 = vector.broadcast %cst_29 : f32 to vector<8x8xf32>
    %77 = arith.mulf %75, %76 : vector<8x8xf32>
    %78 = vector.broadcast %18 : vector<1x8xf32> to vector<8x8xf32>
    %79 = arith.addf %77, %78 : vector<8x8xf32>
    %c0_30 = arith.constant 0 : index
    %c0_31 = arith.constant 0 : index
    %c16 = arith.constant 16 : index
    %80 = vector.load %arg16[%c0_30, %c0_31, %c16] : memref<2x8x32xf32, #tpu.memory_space<vmem>>, vector<1x8x8xf32>
    %81 = vector.shape_cast %80 : vector<1x8x8xf32> to vector<8x8xf32>
    %82 = vector.shape_cast %79 : vector<8x8xf32> to vector<1x8x8xf32>
    tpu.vector_store %arg16[%c0_30, %c0_31, %c16], %82 {strides = array<i32>} : memref<2x8x32xf32, #tpu.memory_space<vmem>>, vector<1x8x8xf32>,
    %cst_32 = arith.constant dense<0xFF800000> : vector<8xf32>
    %83 = vector.multi_reduction <maximumf>, %79, %cst_32 [1] : vector<8x8xf32> to vector<8xf32>
    %84 = vector.shape_cast %83 : vector<8xf32> to vector<8x1xf32>
    %85 = vector.broadcast %84 : vector<8x1xf32> to vector<8x8xf32>
    %86 = arith.subf %79, %85 : vector<8x8xf32>
    %87 = math.exp %86 : vector<8x8xf32>
    %cst_33 = arith.constant dense<0.000000e+00> : vector<8xf32>
    %88 = vector.multi_reduction <add>, %87, %cst_33 [1] : vector<8x8xf32> to vector<8xf32>
    %89 = vector.shape_cast %88 : vector<8xf32> to vector<8x1xf32>
    %90 = tpu.reciprocal %89 {approx = true} : vector<8x1xf32> -> vector<8x1xf32>
    %91 = vector.broadcast %90 : vector<8x1xf32> to vector<8x8xf32>
    %92 = arith.mulf %87, %91 : vector<8x8xf32>
    %93 = arith.truncf %92 : vector<8x8xf32> to vector<8x8xbf16>
    %cst_34 = arith.constant dense<0.000000e+00> : vector<8x8xf32>
    %94 = tpu.matmul %93, %74, %cst_34 {dimension_numbers = #tpu.dot_dimension_numbers<[1], [0], [0], [1], [0, 0, 1, 1], [], []>} : vector<8x8xbf16>, vector<8x8xbf16>, vector<8x8xf32> -> vector<8x8xf32>
    %95 = arith.truncf %94 : vector<8x8xf32> to vector<8x8xbf16>
    %96 = vector.extract_strided_slice %16 {offsets = [16, 0], sizes = [8, 32], strides = [1, 1]} : vector<32x32xbf16> to vector<8x32xbf16>
    %cst_35 = arith.constant dense<0.000000e+00> : vector<8x32xf32>
    %97 = tpu.matmul %95, %96, %cst_35 {dimension_numbers = #tpu.dot_dimension_numbers<[1], [0], [0], [1], [0, 0, 1, 1], [], []>} : vector<8x8xbf16>, vector<8x32xbf16>, vector<8x32xf32> -> vector<8x32xf32>
    %98 = arith.addf %71, %97 : vector<8x32xf32>
    %99 = vector.extract_strided_slice %11 {offsets = [0, 24], sizes = [8, 8], strides = [1, 1]} : vector<16x32xbf16> to vector<8x8xbf16>
    %100 = vector.extract_strided_slice %13 {offsets = [0, 24], sizes = [8, 8], strides = [1, 1]} : vector<16x32xbf16> to vector<8x8xbf16>
    %101 = vector.extract_strided_slice %15 {offsets = [0, 24], sizes = [8, 8], strides = [1, 1]} : vector<16x32xbf16> to vector<8x8xbf16>
    %cst_36 = arith.constant dense<0.000000e+00> : vector<8x8xf32>
    %102 = tpu.matmul %99, %100, %cst_36 {dimension_numbers = #tpu.dot_dimension_numbers<[1], [1], [0], [0], [0, 0, 1, 0], [], []>} : vector<8x8xbf16>, vector<8x8xbf16>, vector<8x8xf32> -> vector<8x8xf32>
    %cst_37 = arith.constant 0.353553385 : f32
    %103 = vector.broadcast %cst_37 : f32 to vector<8x8xf32>
    %104 = arith.mulf %102, %103 : vector<8x8xf32>
    %105 = vector.broadcast %18 : vector<1x8xf32> to vector<8x8xf32>
    %106 = arith.addf %104, %105 : vector<8x8xf32>
    %c0_38 = arith.constant 0 : index
    %c0_39 = arith.constant 0 : index
    %c24 = arith.constant 24 : index
    %107 = vector.load %arg16[%c0_38, %c0_39, %c24] : memref<2x8x32xf32, #tpu.memory_space<vmem>>, vector<1x8x8xf32>
    %108 = vector.shape_cast %107 : vector<1x8x8xf32> to vector<8x8xf32>
    %109 = vector.shape_cast %106 : vector<8x8xf32> to vector<1x8x8xf32>
    tpu.vector_store %arg16[%c0_38, %c0_39, %c24], %109 {strides = array<i32>} : memref<2x8x32xf32, #tpu.memory_space<vmem>>, vector<1x8x8xf32>,
    %cst_40 = arith.constant dense<0xFF800000> : vector<8xf32>
    %110 = vector.multi_reduction <maximumf>, %106, %cst_40 [1] : vector<8x8xf32> to vector<8xf32>
    %111 = vector.shape_cast %110 : vector<8xf32> to vector<8x1xf32>
    %112 = vector.broadcast %111 : vector<8x1xf32> to vector<8x8xf32>
    %113 = arith.subf %106, %112 : vector<8x8xf32>
    %114 = math.exp %113 : vector<8x8xf32>
    %cst_41 = arith.constant dense<0.000000e+00> : vector<8xf32>
    %115 = vector.multi_reduction <add>, %114, %cst_41 [1] : vector<8x8xf32> to vector<8xf32>
    %116 = vector.shape_cast %115 : vector<8xf32> to vector<8x1xf32>
    %117 = tpu.reciprocal %116 {approx = true} : vector<8x1xf32> -> vector<8x1xf32>
    %118 = vector.broadcast %117 : vector<8x1xf32> to vector<8x8xf32>
    %119 = arith.mulf %114, %118 : vector<8x8xf32>
    %120 = arith.truncf %119 : vector<8x8xf32> to vector<8x8xbf16>
    %cst_42 = arith.constant dense<0.000000e+00> : vector<8x8xf32>
    %121 = tpu.matmul %120, %101, %cst_42 {dimension_numbers = #tpu.dot_dimension_numbers<[1], [0], [0], [1], [0, 0, 1, 1], [], []>} : vector<8x8xbf16>, vector<8x8xbf16>, vector<8x8xf32> -> vector<8x8xf32>
    %122 = arith.truncf %121 : vector<8x8xf32> to vector<8x8xbf16>
    %123 = vector.extract_strided_slice %16 {offsets = [24, 0], sizes = [8, 32], strides = [1, 1]} : vector<32x32xbf16> to vector<8x32xbf16>
    %cst_43 = arith.constant dense<0.000000e+00> : vector<8x32xf32>
    %124 = tpu.matmul %122, %123, %cst_43 {dimension_numbers = #tpu.dot_dimension_numbers<[1], [0], [0], [1], [0, 0, 1, 1], [], []>} : vector<8x8xbf16>, vector<8x32xbf16>, vector<8x32xf32> -> vector<8x32xf32>
    %125 = arith.addf %98, %124 : vector<8x32xf32>
    %c1 = arith.constant 1 : index
    %c0_44 = arith.constant 0 : index
    %c0_45 = arith.constant 0 : index
    %126 = vector.load %arg2[%c1, %c0_44, %c0_45] : memref<2x1x8xf32, #tpu.memory_space<vmem>>, vector<1x1x8xf32>
    %127 = vector.shape_cast %126 : vector<1x1x8xf32> to vector<1x8xf32>
    %128 = vector.extract_strided_slice %11 {offsets = [8, 0], sizes = [8, 8], strides = [1, 1]} : vector<16x32xbf16> to vector<8x8xbf16>
    %129 = vector.extract_strided_slice %13 {offsets = [8, 0], sizes = [8, 8], strides = [1, 1]} : vector<16x32xbf16> to vector<8x8xbf16>
    %130 = vector.extract_strided_slice %15 {offsets = [8, 0], sizes = [8, 8], strides = [1, 1]} : vector<16x32xbf16> to vector<8x8xbf16>
    %cst_46 = arith.constant dense<0.000000e+00> : vector<8x8xf32>
    %131 = tpu.matmul %128, %129, %cst_46 {dimension_numbers = #tpu.dot_dimension_numbers<[1], [1], [0], [0], [0, 0, 1, 0], [], []>} : vector<8x8xbf16>, vector<8x8xbf16>, vector<8x8xf32> -> vector<8x8xf32>
    %cst_47 = arith.constant 0.353553385 : f32
    %132 = vector.broadcast %cst_47 : f32 to vector<8x8xf32>
    %133 = arith.mulf %131, %132 : vector<8x8xf32>
    %134 = vector.broadcast %127 : vector<1x8xf32> to vector<8x8xf32>
    %135 = arith.addf %133, %134 : vector<8x8xf32>
    %c1_48 = arith.constant 1 : index
    %c0_49 = arith.constant 0 : index
    %c0_50 = arith.constant 0 : index
    %136 = vector.load %arg16[%c1_48, %c0_49, %c0_50] : memref<2x8x32xf32, #tpu.memory_space<vmem>>, vector<1x8x8xf32>
    %137 = vector.shape_cast %136 : vector<1x8x8xf32> to vector<8x8xf32>
    %138 = vector.shape_cast %135 : vector<8x8xf32> to vector<1x8x8xf32>
    tpu.vector_store %arg16[%c1_48, %c0_49, %c0_50], %138 {strides = array<i32>} : memref<2x8x32xf32, #tpu.memory_space<vmem>>, vector<1x8x8xf32>,
    %cst_51 = arith.constant dense<0xFF800000> : vector<8xf32>
    %139 = vector.multi_reduction <maximumf>, %135, %cst_51 [1] : vector<8x8xf32> to vector<8xf32>
    %140 = vector.shape_cast %139 : vector<8xf32> to vector<8x1xf32>
    %141 = vector.broadcast %140 : vector<8x1xf32> to vector<8x8xf32>
    %142 = arith.subf %135, %141 : vector<8x8xf32>
    %143 = math.exp %142 : vector<8x8xf32>
    %cst_52 = arith.constant dense<0.000000e+00> : vector<8xf32>
    %144 = vector.multi_reduction <add>, %143, %cst_52 [1] : vector<8x8xf32> to vector<8xf32>
    %145 = vector.shape_cast %144 : vector<8xf32> to vector<8x1xf32>
    %146 = tpu.reciprocal %145 {approx = true} : vector<8x1xf32> -> vector<8x1xf32>
    %147 = vector.broadcast %146 : vector<8x1xf32> to vector<8x8xf32>
    %148 = arith.mulf %143, %147 : vector<8x8xf32>
    %149 = arith.truncf %148 : vector<8x8xf32> to vector<8x8xbf16>
    %cst_53 = arith.constant dense<0.000000e+00> : vector<8x8xf32>
    %150 = tpu.matmul %149, %130, %cst_53 {dimension_numbers = #tpu.dot_dimension_numbers<[1], [0], [0], [1], [0, 0, 1, 1], [], []>} : vector<8x8xbf16>, vector<8x8xbf16>, vector<8x8xf32> -> vector<8x8xf32>
    %151 = arith.truncf %150 : vector<8x8xf32> to vector<8x8xbf16>
    %152 = vector.extract_strided_slice %16 {offsets = [0, 0], sizes = [8, 32], strides = [1, 1]} : vector<32x32xbf16> to vector<8x32xbf16>
    %cst_54 = arith.constant dense<0.000000e+00> : vector<8x32xf32>
    %153 = tpu.matmul %151, %152, %cst_54 {dimension_numbers = #tpu.dot_dimension_numbers<[1], [0], [0], [1], [0, 0, 1, 1], [], []>} : vector<8x8xbf16>, vector<8x32xbf16>, vector<8x32xf32> -> vector<8x32xf32>
    %154 = vector.extract_strided_slice %11 {offsets = [8, 8], sizes = [8, 8], strides = [1, 1]} : vector<16x32xbf16> to vector<8x8xbf16>
    %155 = vector.extract_strided_slice %13 {offsets = [8, 8], sizes = [8, 8], strides = [1, 1]} : vector<16x32xbf16> to vector<8x8xbf16>
    %156 = vector.extract_strided_slice %15 {offsets = [8, 8], sizes = [8, 8], strides = [1, 1]} : vector<16x32xbf16> to vector<8x8xbf16>
    %cst_55 = arith.constant dense<0.000000e+00> : vector<8x8xf32>
    %157 = tpu.matmul %154, %155, %cst_55 {dimension_numbers = #tpu.dot_dimension_numbers<[1], [1], [0], [0], [0, 0, 1, 0], [], []>} : vector<8x8xbf16>, vector<8x8xbf16>, vector<8x8xf32> -> vector<8x8xf32>
    %cst_56 = arith.constant 0.353553385 : f32
    %158 = vector.broadcast %cst_56 : f32 to vector<8x8xf32>
    %159 = arith.mulf %157, %158 : vector<8x8xf32>
    %160 = vector.broadcast %127 : vector<1x8xf32> to vector<8x8xf32>
    %161 = arith.addf %159, %160 : vector<8x8xf32>
    %c1_57 = arith.constant 1 : index
    %c0_58 = arith.constant 0 : index
    %c8_59 = arith.constant 8 : index
    %162 = vector.load %arg16[%c1_57, %c0_58, %c8_59] : memref<2x8x32xf32, #tpu.memory_space<vmem>>, vector<1x8x8xf32>
    %163 = vector.shape_cast %162 : vector<1x8x8xf32> to vector<8x8xf32>
    %164 = vector.shape_cast %161 : vector<8x8xf32> to vector<1x8x8xf32>
    tpu.vector_store %arg16[%c1_57, %c0_58, %c8_59], %164 {strides = array<i32>} : memref<2x8x32xf32, #tpu.memory_space<vmem>>, vector<1x8x8xf32>,
    %cst_60 = arith.constant dense<0xFF800000> : vector<8xf32>
    %165 = vector.multi_reduction <maximumf>, %161, %cst_60 [1] : vector<8x8xf32> to vector<8xf32>
    %166 = vector.shape_cast %165 : vector<8xf32> to vector<8x1xf32>
    %167 = vector.broadcast %166 : vector<8x1xf32> to vector<8x8xf32>
    %168 = arith.subf %161, %167 : vector<8x8xf32>
    %169 = math.exp %168 : vector<8x8xf32>
    %cst_61 = arith.constant dense<0.000000e+00> : vector<8xf32>
    %170 = vector.multi_reduction <add>, %169, %cst_61 [1] : vector<8x8xf32> to vector<8xf32>
    %171 = vector.shape_cast %170 : vector<8xf32> to vector<8x1xf32>
    %172 = tpu.reciprocal %171 {approx = true} : vector<8x1xf32> -> vector<8x1xf32>
    %173 = vector.broadcast %172 : vector<8x1xf32> to vector<8x8xf32>
    %174 = arith.mulf %169, %173 : vector<8x8xf32>
    %175 = arith.truncf %174 : vector<8x8xf32> to vector<8x8xbf16>
    %cst_62 = arith.constant dense<0.000000e+00> : vector<8x8xf32>
    %176 = tpu.matmul %175, %156, %cst_62 {dimension_numbers = #tpu.dot_dimension_numbers<[1], [0], [0], [1], [0, 0, 1, 1], [], []>} : vector<8x8xbf16>, vector<8x8xbf16>, vector<8x8xf32> -> vector<8x8xf32>
    %177 = arith.truncf %176 : vector<8x8xf32> to vector<8x8xbf16>
    %178 = vector.extract_strided_slice %16 {offsets = [8, 0], sizes = [8, 32], strides = [1, 1]} : vector<32x32xbf16> to vector<8x32xbf16>
    %cst_63 = arith.constant dense<0.000000e+00> : vector<8x32xf32>
    %179 = tpu.matmul %177, %178, %cst_63 {dimension_numbers = #tpu.dot_dimension_numbers<[1], [0], [0], [1], [0, 0, 1, 1], [], []>} : vector<8x8xbf16>, vector<8x32xbf16>, vector<8x32xf32> -> vector<8x32xf32>
    %180 = arith.addf %153, %179 : vector<8x32xf32>
    %181 = vector.extract_strided_slice %11 {offsets = [8, 16], sizes = [8, 8], strides = [1, 1]} : vector<16x32xbf16> to vector<8x8xbf16>
    %182 = vector.extract_strided_slice %13 {offsets = [8, 16], sizes = [8, 8], strides = [1, 1]} : vector<16x32xbf16> to vector<8x8xbf16>
    %183 = vector.extract_strided_slice %15 {offsets = [8, 16], sizes = [8, 8], strides = [1, 1]} : vector<16x32xbf16> to vector<8x8xbf16>
    %cst_64 = arith.constant dense<0.000000e+00> : vector<8x8xf32>
    %184 = tpu.matmul %181, %182, %cst_64 {dimension_numbers = #tpu.dot_dimension_numbers<[1], [1], [0], [0], [0, 0, 1, 0], [], []>} : vector<8x8xbf16>, vector<8x8xbf16>, vector<8x8xf32> -> vector<8x8xf32>
    %cst_65 = arith.constant 0.353553385 : f32
    %185 = vector.broadcast %cst_65 : f32 to vector<8x8xf32>
    %186 = arith.mulf %184, %185 : vector<8x8xf32>
    %187 = vector.broadcast %127 : vector<1x8xf32> to vector<8x8xf32>
    %188 = arith.addf %186, %187 : vector<8x8xf32>
    %c1_66 = arith.constant 1 : index
    %c0_67 = arith.constant 0 : index
    %c16_68 = arith.constant 16 : index
    %189 = vector.load %arg16[%c1_66, %c0_67, %c16_68] : memref<2x8x32xf32, #tpu.memory_space<vmem>>, vector<1x8x8xf32>
    %190 = vector.shape_cast %189 : vector<1x8x8xf32> to vector<8x8xf32>
    %191 = vector.shape_cast %188 : vector<8x8xf32> to vector<1x8x8xf32>
    tpu.vector_store %arg16[%c1_66, %c0_67, %c16_68], %191 {strides = array<i32>} : memref<2x8x32xf32, #tpu.memory_space<vmem>>, vector<1x8x8xf32>,
    %cst_69 = arith.constant dense<0xFF800000> : vector<8xf32>
    %192 = vector.multi_reduction <maximumf>, %188, %cst_69 [1] : vector<8x8xf32> to vector<8xf32>
    %193 = vector.shape_cast %192 : vector<8xf32> to vector<8x1xf32>
    %194 = vector.broadcast %193 : vector<8x1xf32> to vector<8x8xf32>
    %195 = arith.subf %188, %194 : vector<8x8xf32>
    %196 = math.exp %195 : vector<8x8xf32>
    %cst_70 = arith.constant dense<0.000000e+00> : vector<8xf32>
    %197 = vector.multi_reduction <add>, %196, %cst_70 [1] : vector<8x8xf32> to vector<8xf32>
    %198 = vector.shape_cast %197 : vector<8xf32> to vector<8x1xf32>
    %199 = tpu.reciprocal %198 {approx = true} : vector<8x1xf32> -> vector<8x1xf32>
    %200 = vector.broadcast %199 : vector<8x1xf32> to vector<8x8xf32>
    %201 = arith.mulf %196, %200 : vector<8x8xf32>
    %202 = arith.truncf %201 : vector<8x8xf32> to vector<8x8xbf16>
    %cst_71 = arith.constant dense<0.000000e+00> : vector<8x8xf32>
    %203 = tpu.matmul %202, %183, %cst_71 {dimension_numbers = #tpu.dot_dimension_numbers<[1], [0], [0], [1], [0, 0, 1, 1], [], []>} : vector<8x8xbf16>, vector<8x8xbf16>, vector<8x8xf32> -> vector<8x8xf32>
    %204 = arith.truncf %203 : vector<8x8xf32> to vector<8x8xbf16>
    %205 = vector.extract_strided_slice %16 {offsets = [16, 0], sizes = [8, 32], strides = [1, 1]} : vector<32x32xbf16> to vector<8x32xbf16>
    %cst_72 = arith.constant dense<0.000000e+00> : vector<8x32xf32>
    %206 = tpu.matmul %204, %205, %cst_72 {dimension_numbers = #tpu.dot_dimension_numbers<[1], [0], [0], [1], [0, 0, 1, 1], [], []>} : vector<8x8xbf16>, vector<8x32xbf16>, vector<8x32xf32> -> vector<8x32xf32>
    %207 = arith.addf %180, %206 : vector<8x32xf32>
    %208 = vector.extract_strided_slice %11 {offsets = [8, 24], sizes = [8, 8], strides = [1, 1]} : vector<16x32xbf16> to vector<8x8xbf16>
    %209 = vector.extract_strided_slice %13 {offsets = [8, 24], sizes = [8, 8], strides = [1, 1]} : vector<16x32xbf16> to vector<8x8xbf16>
    %210 = vector.extract_strided_slice %15 {offsets = [8, 24], sizes = [8, 8], strides = [1, 1]} : vector<16x32xbf16> to vector<8x8xbf16>
    %cst_73 = arith.constant dense<0.000000e+00> : vector<8x8xf32>
    %211 = tpu.matmul %208, %209, %cst_73 {dimension_numbers = #tpu.dot_dimension_numbers<[1], [1], [0], [0], [0, 0, 1, 0], [], []>} : vector<8x8xbf16>, vector<8x8xbf16>, vector<8x8xf32> -> vector<8x8xf32>
    %cst_74 = arith.constant 0.353553385 : f32
    %212 = vector.broadcast %cst_74 : f32 to vector<8x8xf32>
    %213 = arith.mulf %211, %212 : vector<8x8xf32>
    %214 = vector.broadcast %127 : vector<1x8xf32> to vector<8x8xf32>
    %215 = arith.addf %213, %214 : vector<8x8xf32>
    %c1_75 = arith.constant 1 : index
    %c0_76 = arith.constant 0 : index
    %c24_77 = arith.constant 24 : index
    %216 = vector.load %arg16[%c1_75, %c0_76, %c24_77] : memref<2x8x32xf32, #tpu.memory_space<vmem>>, vector<1x8x8xf32>
    %217 = vector.shape_cast %216 : vector<1x8x8xf32> to vector<8x8xf32>
    %218 = vector.shape_cast %215 : vector<8x8xf32> to vector<1x8x8xf32>
    tpu.vector_store %arg16[%c1_75, %c0_76, %c24_77], %218 {strides = array<i32>} : memref<2x8x32xf32, #tpu.memory_space<vmem>>, vector<1x8x8xf32>,
    %cst_78 = arith.constant dense<0xFF800000> : vector<8xf32>
    %219 = vector.multi_reduction <maximumf>, %215, %cst_78 [1] : vector<8x8xf32> to vector<8xf32>
    %220 = vector.shape_cast %219 : vector<8xf32> to vector<8x1xf32>
    %221 = vector.broadcast %220 : vector<8x1xf32> to vector<8x8xf32>
    %222 = arith.subf %215, %221 : vector<8x8xf32>
    %223 = math.exp %222 : vector<8x8xf32>
    %cst_79 = arith.constant dense<0.000000e+00> : vector<8xf32>
    %224 = vector.multi_reduction <add>, %223, %cst_79 [1] : vector<8x8xf32> to vector<8xf32>
    %225 = vector.shape_cast %224 : vector<8xf32> to vector<8x1xf32>
    %226 = tpu.reciprocal %225 {approx = true} : vector<8x1xf32> -> vector<8x1xf32>
    %227 = vector.broadcast %226 : vector<8x1xf32> to vector<8x8xf32>
    %228 = arith.mulf %223, %227 : vector<8x8xf32>
    %229 = arith.truncf %228 : vector<8x8xf32> to vector<8x8xbf16>
    %cst_80 = arith.constant dense<0.000000e+00> : vector<8x8xf32>
    %230 = tpu.matmul %229, %210, %cst_80 {dimension_numbers = #tpu.dot_dimension_numbers<[1], [0], [0], [1], [0, 0, 1, 1], [], []>} : vector<8x8xbf16>, vector<8x8xbf16>, vector<8x8xf32> -> vector<8x8xf32>
    %231 = arith.truncf %230 : vector<8x8xf32> to vector<8x8xbf16>
    %232 = vector.extract_strided_slice %16 {offsets = [24, 0], sizes = [8, 32], strides = [1, 1]} : vector<32x32xbf16> to vector<8x32xbf16>
    %cst_81 = arith.constant dense<0.000000e+00> : vector<8x32xf32>
    %233 = tpu.matmul %231, %232, %cst_81 {dimension_numbers = #tpu.dot_dimension_numbers<[1], [0], [0], [1], [0, 0, 1, 1], [], []>} : vector<8x8xbf16>, vector<8x32xbf16>, vector<8x32xf32> -> vector<8x32xf32>
    %234 = arith.addf %207, %233 : vector<8x32xf32>
    %235 = tpu.concatenate %125, %234 in 0 : vector<8x32xf32>, vector<8x32xf32> -> vector<16x32xf32>
    %c0_82 = arith.constant 0 : index
    %c0_83 = arith.constant 0 : index
    %236 = vector.load %arg6[%c0_82, %c0_83] : memref<1x32xf32, #tpu.memory_space<vmem>>, vector<1x32xf32>
    %237 = vector.shape_cast %236 : vector<1x32xf32> to vector<32xf32>
    %238 = vector.shape_cast %237 : vector<32xf32> to vector<1x32xf32>
    %239 = vector.broadcast %238 : vector<1x32xf32> to vector<16x32xf32>
    %240 = arith.addf %235, %239 : vector<16x32xf32>
    %241 = arith.addf %1, %240 : vector<16x32xf32>
    %cst_84 = arith.constant dense<0.000000e+00> : vector<16xf32>
    %242 = vector.multi_reduction <add>, %241, %cst_84 [1] : vector<16x32xf32> to vector<16xf32>
    %243 = vector.shape_cast %242 : vector<16xf32> to vector<16x1xf32>
    %cst_85 = arith.constant 3.200000e+01 : f32
    %244 = vector.broadcast %cst_85 : f32 to vector<16x1xf32>
    %245 = arith.divf %243, %244 : vector<16x1xf32>
    %246 = vector.broadcast %245 : vector<16x1xf32> to vector<16x32xf32>
    %247 = arith.subf %241, %246 : vector<16x32xf32>
    %248 = arith.mulf %247, %247 : vector<16x32xf32>
    %cst_86 = arith.constant dense<0.000000e+00> : vector<16xf32>
    %249 = vector.multi_reduction <add>, %248, %cst_86 [1] : vector<16x32xf32> to vector<16xf32>
    %250 = vector.shape_cast %249 : vector<16xf32> to vector<16x1xf32>
    %cst_87 = arith.constant 3.200000e+01 : f32
    %251 = vector.broadcast %cst_87 : f32 to vector<16x1xf32>
    %252 = arith.divf %250, %251 : vector<16x1xf32>
    %253 = vector.broadcast %245 : vector<16x1xf32> to vector<16x32xf32>
    %254 = arith.subf %241, %253 : vector<16x32xf32>
    %cst_88 = arith.constant 9.99999996E-13 : f32
    %255 = vector.broadcast %cst_88 : f32 to vector<16x1xf32>
    %256 = arith.addf %252, %255 : vector<16x1xf32>
    %257 = math.rsqrt %256 : vector<16x1xf32>
    %258 = vector.broadcast %257 : vector<16x1xf32> to vector<16x32xf32>
    %259 = arith.mulf %254, %258 : vector<16x32xf32>
    %c0_89 = arith.constant 0 : index
    %c0_90 = arith.constant 0 : index
    %260 = vector.load %arg11[%c0_89, %c0_90] : memref<1x32xf32, #tpu.memory_space<vmem>>, vector<1x32xf32>
    %261 = vector.shape_cast %260 : vector<1x32xf32> to vector<32xf32>
    %262 = vector.shape_cast %261 : vector<32xf32> to vector<1x32xf32>
    %263 = vector.broadcast %262 : vector<1x32xf32> to vector<16x32xf32>
    %264 = arith.mulf %259, %263 : vector<16x32xf32>
    %c0_91 = arith.constant 0 : index
    %c0_92 = arith.constant 0 : index
    %265 = vector.load %arg12[%c0_91, %c0_92] : memref<1x32xf32, #tpu.memory_space<vmem>>, vector<1x32xf32>
    %266 = vector.shape_cast %265 : vector<1x32xf32> to vector<32xf32>
    %267 = vector.shape_cast %266 : vector<32xf32> to vector<1x32xf32>
    %268 = vector.broadcast %267 : vector<1x32xf32> to vector<16x32xf32>
    %269 = arith.addf %264, %268 : vector<16x32xf32>
    %270 = arith.truncf %269 : vector<16x32xf32> to vector<16x32xbf16>
    %c0_93 = arith.constant 0 : index
    %c0_94 = arith.constant 0 : index
    %271 = vector.load %arg7[%c0_93, %c0_94] : memref<32x64xbf16, #tpu.memory_space<vmem>>, vector<32x64xbf16>
    %cst_95 = arith.constant dense<0.000000e+00> : vector<16x64xf32>
    %272 = tpu.matmul %270, %271, %cst_95 {dimension_numbers = #tpu.dot_dimension_numbers<[1], [0], [0], [1], [0, 0, 1, 1], [], []>} : vector<16x32xbf16>, vector<32x64xbf16>, vector<16x64xf32> -> vector<16x64xf32>
    %c0_96 = arith.constant 0 : index
    %c0_97 = arith.constant 0 : index
    %273 = vector.load %arg8[%c0_96, %c0_97] : memref<1x64xf32, #tpu.memory_space<vmem>>, vector<1x64xf32>
    %274 = vector.shape_cast %273 : vector<1x64xf32> to vector<64xf32>
    %275 = vector.shape_cast %274 : vector<64xf32> to vector<1x64xf32>
    %276 = vector.broadcast %275 : vector<1x64xf32> to vector<16x64xf32>
    %277 = arith.addf %272, %276 : vector<16x64xf32>
    %cst_98 = arith.constant 0.000000e+00 : f32
    %278 = vector.broadcast %cst_98 : f32 to vector<16x64xf32>
    %279 = arith.maximumf %277, %278 : vector<16x64xf32>
    %280 = arith.truncf %279 : vector<16x64xf32> to vector<16x64xbf16>
    %c0_99 = arith.constant 0 : index
    %c0_100 = arith.constant 0 : index
    %281 = vector.load %arg9[%c0_99, %c0_100] : memref<64x32xbf16, #tpu.memory_space<vmem>>, vector<64x32xbf16>
    %cst_101 = arith.constant dense<0.000000e+00> : vector<16x32xf32>
    %282 = tpu.matmul %280, %281, %cst_101 {dimension_numbers = #tpu.dot_dimension_numbers<[1], [0], [0], [1], [0, 0, 1, 1], [], []>} : vector<16x64xbf16>, vector<64x32xbf16>, vector<16x32xf32> -> vector<16x32xf32>
    %c0_102 = arith.constant 0 : index
    %c0_103 = arith.constant 0 : index
    %283 = vector.load %arg10[%c0_102, %c0_103] : memref<1x32xf32, #tpu.memory_space<vmem>>, vector<1x32xf32>
    %284 = vector.shape_cast %283 : vector<1x32xf32> to vector<32xf32>
    %285 = vector.shape_cast %284 : vector<32xf32> to vector<1x32xf32>
    %286 = vector.broadcast %285 : vector<1x32xf32> to vector<16x32xf32>
    %287 = arith.addf %282, %286 : vector<16x32xf32>
    %288 = arith.addf %269, %287 : vector<16x32xf32>
    %cst_104 = arith.constant dense<0.000000e+00> : vector<16xf32>
    %289 = vector.multi_reduction <add>, %288, %cst_104 [1] : vector<16x32xf32> to vector<16xf32>
    %290 = vector.shape_cast %289 : vector<16xf32> to vector<16x1xf32>
    %cst_105 = arith.constant 3.200000e+01 : f32
    %291 = vector.broadcast %cst_105 : f32 to vector<16x1xf32>
    %292 = arith.divf %290, %291 : vector<16x1xf32>
    %293 = vector.broadcast %292 : vector<16x1xf32> to vector<16x32xf32>
    %294 = arith.subf %288, %293 : vector<16x32xf32>
    %295 = arith.mulf %294, %294 : vector<16x32xf32>
    %cst_106 = arith.constant dense<0.000000e+00> : vector<16xf32>
    %296 = vector.multi_reduction <add>, %295, %cst_106 [1] : vector<16x32xf32> to vector<16xf32>
    %297 = vector.shape_cast %296 : vector<16xf32> to vector<16x1xf32>
    %cst_107 = arith.constant 3.200000e+01 : f32
    %298 = vector.broadcast %cst_107 : f32 to vector<16x1xf32>
    %299 = arith.divf %297, %298 : vector<16x1xf32>
    %300 = vector.broadcast %292 : vector<16x1xf32> to vector<16x32xf32>
    %301 = arith.subf %288, %300 : vector<16x32xf32>
    %cst_108 = arith.constant 9.99999996E-13 : f32
    %302 = vector.broadcast %cst_108 : f32 to vector<16x1xf32>
    %303 = arith.addf %299, %302 : vector<16x1xf32>
    %304 = math.rsqrt %303 : vector<16x1xf32>
    %305 = vector.broadcast %304 : vector<16x1xf32> to vector<16x32xf32>
    %306 = arith.mulf %301, %305 : vector<16x32xf32>
    %c0_109 = arith.constant 0 : index
    %c0_110 = arith.constant 0 : index
    %307 = vector.load %arg13[%c0_109, %c0_110] : memref<1x32xf32, #tpu.memory_space<vmem>>, vector<1x32xf32>
    %308 = vector.shape_cast %307 : vector<1x32xf32> to vector<32xf32>
    %309 = vector.shape_cast %308 : vector<32xf32> to vector<1x32xf32>
    %310 = vector.broadcast %309 : vector<1x32xf32> to vector<16x32xf32>
    %311 = arith.mulf %306, %310 : vector<16x32xf32>
    %c0_111 = arith.constant 0 : index
    %c0_112 = arith.constant 0 : index
    %312 = vector.load %arg14[%c0_111, %c0_112] : memref<1x32xf32, #tpu.memory_space<vmem>>, vector<1x32xf32>
    %313 = vector.shape_cast %312 : vector<1x32xf32> to vector<32xf32>
    %314 = vector.shape_cast %313 : vector<32xf32> to vector<1x32xf32>
    %315 = vector.broadcast %314 : vector<1x32xf32> to vector<16x32xf32>
    %316 = arith.addf %311, %315 : vector<16x32xf32>
    %317 = vector.shape_cast %316 : vector<16x32xf32> to vector<2x8x32xf32>
    %c0_113 = arith.constant 0 : index
    %c0_114 = arith.constant 0 : index
    %c0_115 = arith.constant 0 : index
    %318 = vector.load %arg15[%c0_113, %c0_114, %c0_115] : memref<2x8x32xf32, #tpu.memory_space<vmem>>, vector<2x8x32xf32>
    tpu.vector_store %arg15[%c0_113, %c0_114, %c0_115], %317 {strides = array<i32>} : memref<2x8x32xf32, #tpu.memory_space<vmem>>, vector<2x8x32xf32>,
    return
  }
  func.func @transform_0(%arg0: i32) -> (i32, i32, i32) {
    %c0_i32 = arith.constant 0 : i32
    %c0_i32_0 = arith.constant 0 : i32
    %c0_i32_1 = arith.constant 0 : i32
    return %arg0, %c0_i32, %c0_i32_0 : i32, i32, i32
  }
  func.func @transform_1(%arg0: i32) -> (i32, i32, i32) {
    %c0_i32 = arith.constant 0 : i32
    %c0_i32_0 = arith.constant 0 : i32
    %c0_i32_1 = arith.constant 0 : i32
    return %arg0, %c0_i32, %c0_i32_0 : i32, i32, i32
  }
  func.func @transform_2(%arg0: i32) -> (i32, i32) {
    %c0_i32 = arith.constant 0 : i32
    %c0_i32_0 = arith.constant 0 : i32
    %c0_i32_1 = arith.constant 0 : i32
    return %c0_i32, %c0_i32_0 : i32, i32
  }
  func.func @transform_3(%arg0: i32) -> (i32, i32) {
    %c0_i32 = arith.constant 0 : i32
    %c0_i32_0 = arith.constant 0 : i32
    %c0_i32_1 = arith.constant 0 : i32
    return %c0_i32, %c0_i32_0 : i32, i32
  }
  func.func @transform_4(%arg0: i32) -> (i32, i32) {
    %c0_i32 = arith.constant 0 : i32
    %c0_i32_0 = arith.constant 0 : i32
    %c0_i32_1 = arith.constant 0 : i32
    return %c0_i32, %c0_i32_0 : i32, i32
  }
  func.func @transform_5(%arg0: i32) -> (i32, i32) {
    %c0_i32 = arith.constant 0 : i32
    %c0_i32_0 = arith.constant 0 : i32
    %c0_i32_1 = arith.constant 0 : i32
    return %c0_i32, %c0_i32_0 : i32, i32
  }
  func.func @transform_6(%arg0: i32) -> (i32, i32) {
    %c0_i32 = arith.constant 0 : i32
    %c0_i32_0 = arith.constant 0 : i32
    %c0_i32_1 = arith.constant 0 : i32
    return %c0_i32, %c0_i32_0 : i32, i32
  }
  func.func @transform_7(%arg0: i32) -> (i32, i32) {
    %c0_i32 = arith.constant 0 : i32
    %c0_i32_0 = arith.constant 0 : i32
    %c0_i32_1 = arith.constant 0 : i32
    return %c0_i32, %c0_i32_0 : i32, i32
  }
  func.func @transform_8(%arg0: i32) -> (i32, i32) {
    %c0_i32 = arith.constant 0 : i32
    %c0_i32_0 = arith.constant 0 : i32
    %c0_i32_1 = arith.constant 0 : i32
    return %c0_i32, %c0_i32_0 : i32, i32
  }
  func.func @transform_9(%arg0: i32) -> (i32, i32) {
    %c0_i32 = arith.constant 0 : i32
    %c0_i32_0 = arith.constant 0 : i32
    %c0_i32_1 = arith.constant 0 : i32
    return %c0_i32, %c0_i32_0 : i32, i32
  }
  func.func @transform_10(%arg0: i32) -> (i32, i32) {
    %c0_i32 = arith.constant 0 : i32
    %c0_i32_0 = arith.constant 0 : i32
    %c0_i32_1 = arith.constant 0 : i32
    return %c0_i32, %c0_i32_0 : i32, i32
  }
  func.func @transform_11(%arg0: i32) -> (i32, i32) {
    %c0_i32 = arith.constant 0 : i32
    %c0_i32_0 = arith.constant 0 : i32
    %c0_i32_1 = arith.constant 0 : i32
    return %c0_i32, %c0_i32_0 : i32, i32
  }
  func.func @transform_12(%arg0: i32) -> (i32, i32) {
    %c0_i32 = arith.constant 0 : i32
    %c0_i32_0 = arith.constant 0 : i32
    %c0_i32_1 = arith.constant 0 : i32
    return %c0_i32, %c0_i32_0 : i32, i32
  }
  func.func @transform_13(%arg0: i32) -> (i32, i32) {
    %c0_i32 = arith.constant 0 : i32
    %c0_i32_0 = arith.constant 0 : i32
    %c0_i32_1 = arith.constant 0 : i32
    return %c0_i32, %c0_i32_0 : i32, i32
  }
  func.func @transform_14(%arg0: i32) -> (i32, i32, i32) {
    %c0_i32 = arith.constant 0 : i32
    %c0_i32_0 = arith.constant 0 : i32
    %c0_i32_1 = arith.constant 0 : i32
    return %arg0, %c0_i32, %c0_i32_0 : i32, i32, i32
  }
  func.func @transform_15(%arg0: i32) -> (i32, i32, i32) {
    %c0_i32 = arith.constant 0 : i32
    %c0_i32_0 = arith.constant 0 : i32
    %c0_i32_1 = arith.constant 0 : i32
    return %arg0, %c0_i32, %c0_i32_0 : i32, i32, i32
  }
}

</mosaic_0001>

<llo_original>
// kernel: tpu_custom_call.1
$region0: #{tpu_custom_call.1}
  #allocation0 [shape = 'u32[]', space=smem, size = 0x4, offset = 0x4, fixed_abs, tag = 'smem constant byte address 0x4 - core index']
  #allocation1 [shape = 'u32[72,128]{1,0:T(1,128)}', space=vmem, size = 0x9000, scoped, tag = 'internal scratch']
  %s0 = inlined_call_operand.vmem [shape: f32[4,8,32], index: 0, kind: input, shape index: {}]
  %s1 = inlined_call_operand.hbm [shape: f32[4,1,8], index: 1, kind: input, shape index: {}]
  %s2 = inlined_call_operand.vmem [shape: bf16[32,96], index: 2, kind: input, shape index: {}]
  %s3 = inlined_call_operand.vmem [shape: f32[1,96], index: 3, kind: input, shape index: {}]
  %s4 = inlined_call_operand.hbm [shape: bf16[32,32], index: 4, kind: input, shape index: {}]
  %s5 = inlined_call_operand.vmem [shape: f32[1,32], index: 5, kind: input, shape index: {}]
  %s6 = inlined_call_operand.hbm [shape: bf16[32,64], index: 6, kind: input, shape index: {}]
  %s7 = inlined_call_operand.vmem [shape: f32[1,64], index: 7, kind: input, shape index: {}]
  %s8 = inlined_call_operand.vmem [shape: bf16[64,32], index: 8, kind: input, shape index: {}]
  %s9 = inlined_call_operand.vmem [shape: f32[1,32], index: 9, kind: input, shape index: {}]
  %s10 = inlined_call_operand.vmem [shape: f32[1,32], index: 10, kind: input, shape index: {}]
  %s11 = inlined_call_operand.vmem [shape: f32[1,32], index: 11, kind: input, shape index: {}]
  %s12 = inlined_call_operand.vmem [shape: f32[1,32], index: 12, kind: input, shape index: {}]
  %s13 = inlined_call_operand.vmem [shape: f32[1,32], index: 13, kind: input, shape index: {}]
  %s14 = inlined_call_operand.hbm [shape: f32[4,8,32], index: 14, kind: output, shape index: {0}]
  %s15 = inlined_call_operand.hbm [shape: f32[4,8,32], index: 15, kind: output, shape index: {1}]
  %16 = xla_tuple %s14, %s15
  %s17 = sld [smem:[#allocation0]]
  $region109: #{tpu_custom_call.1} parent=0
    _
  %s19 = ssub.s32 1, %s17
  %s20 = scalar_select 0, %s19, %s17
  $region1: #{tpu_custom_call.1} parent=0
    #allocation2 [shape = 'u8[2048]{0}', space=vmem, size = 0x800, scoped, tag = 'input window, operand 1']
    #allocation3 [shape = 's32[2]{0}', space=sflag, size = 0x8, scoped, tag = 'scoped memory for tpu_custom_call.1']
    #allocation4 [shape = 's32[2]{0}', space=sflag, size = 0x8, scoped, tag = 'scoped memory for tpu_custom_call.1']
    #allocation5 [shape = 'u8[8192]{0}', space=vmem, size = 0x2000, scoped, tag = 'input window, operand 4, single buffered']
    #allocation6 [shape = 's32[1]{0}', space=sflag, size = 0x4, scoped, tag = 'scoped memory for tpu_custom_call.1']
    #allocation7 [shape = 'u8[8192]{0}', space=vmem, size = 0x2000, scoped, tag = 'input window, operand 6, single buffered']
    #allocation8 [shape = 'u8[16384]{0}', space=vmem, size = 0x4000, scoped, tag = 'output window, operand 0']
    #allocation9 [shape = 'u8[16384]{0}', space=vmem, size = 0x4000, scoped, tag = 'output window, operand 1']
    #allocation10 [shape = 's32[2]{0}', space=sflag, size = 0x8, scoped, tag = 'scoped memory for tpu_custom_call.1']
    %21 = vsyncpa [#allocation3], 0
    %s22 = scalar_lea.sflag [#allocation3], 1
    %23 = vsyncpa %s22, 0
    %24 = vsyncpa [#allocation6], 0
    %25 = vsyncpa [#allocation4], 0
    %s26 = scalar_lea.sflag [#allocation4], 1
    %27 = vsyncpa %s26, 0
    %28 = vsyncpa [#allocation10], 0
    %s29 = scalar_lea.sflag [#allocation10], 1
    %30 = vsyncpa %s29, 0
    loop: start=0, step=1, limit=4
    $region2: #{tpu_custom_call.1} parent=1 // loop_pre_header
      _
    $region3: #{tpu_custom_call.1} parent=1 // loop_header
      %s32 = sphi 0, %s36
      %p33 = scmp.ge.s32.totalorder %s32, 4
      %s42 = sphi 0, %s44
      %s45 = sphi 0, %s42
      %s46 = sphi 0, %s45
      %s62 = sphi 0, %s46
      %s68 = sphi 0, %s70
      %s71 = sphi 0, %s68
      %s72 = sphi 0, %s71
      %s88 = sphi 0, %s72
      %s92 = sphi 0, %s92
      %s94 = sphi 0, %s92
      %s95 = sphi 0, %s94
      %s109 = sphi 0, %s95
      %s113 = sphi 0, %s113
      %s115 = sphi 0, %s113
      %s116 = sphi 0, %s115
      %s130 = sphi 0, %s116
      %s134 = sphi 0, %s134
      %s136 = sphi 0, %s134
      %s137 = sphi 0, %s136
      %s151 = sphi 0, %s137
      %s155 = sphi 0, %s155
      %s157 = sphi 0, %s155
      %s158 = sphi 0, %s157
      %s172 = sphi 0, %s158
      %s176 = sphi 0, %s176
      %s178 = sphi 0, %s176
      %s179 = sphi 0, %s178
      %s193 = sphi 0, %s179
      %s197 = sphi 0, %s197
      %s199 = sphi 0, %s197
      %s200 = sphi 0, %s199
      %s214 = sphi 0, %s200
      %s218 = sphi 0, %s218
      %s220 = sphi 0, %s218
      %s221 = sphi 0, %s220
      %s235 = sphi 0, %s221
      %s239 = sphi 0, %s239
      %s241 = sphi 0, %s239
      %s242 = sphi 0, %s241
      %s256 = sphi 0, %s242
      %s260 = sphi 0, %s260
      %s262 = sphi 0, %s260
      %s263 = sphi 0, %s262
      %s277 = sphi 0, %s263
      %s281 = sphi 0, %s281
      %s283 = sphi 0, %s281
      %s284 = sphi 0, %s283
      %s298 = sphi 0, %s284
      %s302 = sphi 0, %s302
      %s304 = sphi 0, %s302
      %s305 = sphi 0, %s304
      %s319 = sphi 0, %s305
      %s323 = sphi 0, %s323
      %s325 = sphi 0, %s323
      %s326 = sphi 0, %s325
      %s340 = sphi 0, %s326
      %s346 = sphi 0, %s348
      %s349 = sphi 0, %s346
      %s350 = sphi 0, %s349
      %s366 = sphi 0, %s350
      %s372 = sphi 0, %s374
      %s375 = sphi 0, %s372
      %s376 = sphi 0, %s375
      %s392 = sphi 0, %s376
    $region4: #{tpu_custom_call.1} parent=1 // loop_header_branch
      %35 = sbr.rel (%p33) target = $region8
    $region5: #{tpu_custom_call.1} parent=1 // loop_body
      %s37 = ssub.s32 %s32, 1
      %s38 = ssub.s32 %s32, 2
      %s39 = sadd.s32 %s32, 1
      %s40 = ssub.s32 %s32, %s39
      %p41 = scmp.eq.s32.totalorder %s40, 0
      %s43 = sadd.s32 %s42, 1
      %s44 = scalar_select %p41, %s42, %s43
      %p47 = pneg %p41
      %p48 = scmp.eq.s32.totalorder %s32, 1
      %p49 = por %p47, %p48
      %p50 = scmp.ne.s32.totalorder %s42, %s45
      %p51 = scmp.eq.s32.totalorder %s32, 0
      %p52 = por %p50, %p51
      %p53 = scmp.ne.s32.totalorder %s42, %s45
      %p54 = scmp.eq.s32.totalorder %s37, 1
      %p55 = por %p53, %p54
      %p56 = scmp.ne.s32.totalorder %s45, %s46
      %p57 = scmp.eq.s32.totalorder %s37, 0
      %p58 = por %p56, %p57
      %p59 = scmp.ne.s32.totalorder %s45, %s46
      %p60 = scmp.eq.s32.totalorder %s38, 1
      %p61 = por %p59, %p60
      %p63 = scmp.ne.s32.totalorder %s46, %s62
      %p64 = scmp.eq.s32.totalorder %s38, 0
      %p65 = por %p63, %p64
      %s66 = ssub.s32 %s32, %s39
      %p67 = scmp.eq.s32.totalorder %s66, 0
      %s69 = sadd.s32 %s68, 1
      %s70 = scalar_select %p67, %s68, %s69
      %p73 = pneg %p67
      %p74 = scmp.eq.s32.totalorder %s32, 1
      %p75 = por %p73, %p74
      %p76 = scmp.ne.s32.totalorder %s68, %s71
      %p77 = scmp.eq.s32.totalorder %s32, 0
      %p78 = por %p76, %p77
      %p79 = scmp.ne.s32.totalorder %s68, %s71
      %p80 = scmp.eq.s32.totalorder %s37, 1
      %p81 = por %p79, %p80
      %p82 = scmp.ne.s32.totalorder %s71, %s72
      %p83 = scmp.eq.s32.totalorder %s37, 0
      %p84 = por %p82, %p83
      %p85 = scmp.ne.s32.totalorder %s71, %s72
      %p86 = scmp.eq.s32.totalorder %s38, 1
      %p87 = por %p85, %p86
      %p89 = scmp.ne.s32.totalorder %s72, %s88
      %p90 = scmp.eq.s32.totalorder %s38, 0
      %p91 = por %p89, %p90
      %s93 = sadd.s32 %s92, 1
      %p96 = scmp.eq.s32.totalorder %s32, 1
      %p97 = scmp.ne.s32.totalorder %s92, %s94
      %p98 = scmp.eq.s32.totalorder %s32, 0
      %p99 = por %p97, %p98
      %p100 = scmp.ne.s32.totalorder %s92, %s94
      %p101 = scmp.eq.s32.totalorder %s37, 1
      %p102 = por %p100, %p101
      %p103 = scmp.ne.s32.totalorder %s94, %s95
      %p104 = scmp.eq.s32.totalorder %s37, 0
      %p105 = por %p103, %p104
      %p106 = scmp.ne.s32.totalorder %s94, %s95
      %p107 = scmp.eq.s32.totalorder %s38, 1
      %p108 = por %p106, %p107
      %p110 = scmp.ne.s32.totalorder %s95, %s109
      %p111 = scmp.eq.s32.totalorder %s38, 0
      %p112 = por %p110, %p111
      %s114 = sadd.s32 %s113, 1
      %p117 = scmp.eq.s32.totalorder %s32, 1
      %p118 = scmp.ne.s32.totalorder %s113, %s115
      %p119 = scmp.eq.s32.totalorder %s32, 0
      %p120 = por %p118, %p119
      %p121 = scmp.ne.s32.totalorder %s113, %s115
      %p122 = scmp.eq.s32.totalorder %s37, 1
      %p123 = por %p121, %p122
      %p124 = scmp.ne.s32.totalorder %s115, %s116
      %p125 = scmp.eq.s32.totalorder %s37, 0
      %p126 = por %p124, %p125
      %p127 = scmp.ne.s32.totalorder %s115, %s116
      %p128 = scmp.eq.s32.totalorder %s38, 1
      %p129 = por %p127, %p128
      %p131 = scmp.ne.s32.totalorder %s116, %s130
      %p132 = scmp.eq.s32.totalorder %s38, 0
      %p133 = por %p131, %p132
      %s135 = sadd.s32 %s134, 1
      %p138 = scmp.eq.s32.totalorder %s32, 1
      %p139 = scmp.ne.s32.totalorder %s134, %s136
      %p140 = scmp.eq.s32.totalorder %s32, 0
      %p141 = por %p139, %p140
      %p142 = scmp.ne.s32.totalorder %s134, %s136
      %p143 = scmp.eq.s32.totalorder %s37, 1
      %p144 = por %p142, %p143
      %p145 = scmp.ne.s32.totalorder %s136, %s137
      %p146 = scmp.eq.s32.totalorder %s37, 0
      %p147 = por %p145, %p146
      %p148 = scmp.ne.s32.totalorder %s136, %s137
      %p149 = scmp.eq.s32.totalorder %s38, 1
      %p150 = por %p148, %p149
      %p152 = scmp.ne.s32.totalorder %s137, %s151
      %p153 = scmp.eq.s32.totalorder %s38, 0
      %p154 = por %p152, %p153
      %s156 = sadd.s32 %s155, 1
      %p159 = scmp.eq.s32.totalorder %s32, 1
      %p160 = scmp.ne.s32.totalorder %s155, %s157
      %p161 = scmp.eq.s32.totalorder %s32, 0
      %p162 = por %p160, %p161
      %p163 = scmp.ne.s32.totalorder %s155, %s157
      %p164 = scmp.eq.s32.totalorder %s37, 1
      %p165 = por %p163, %p164
      %p166 = scmp.ne.s32.totalorder %s157, %s158
      %p167 = scmp.eq.s32.totalorder %s37, 0
      %p168 = por %p166, %p167
      %p169 = scmp.ne.s32.totalorder %s157, %s158
      %p170 = scmp.eq.s32.totalorder %s38, 1
      %p171 = por %p169, %p170
      %p173 = scmp.ne.s32.totalorder %s158, %s172
      %p174 = scmp.eq.s32.totalorder %s38, 0
      %p175 = por %p173, %p174
      %s177 = sadd.s32 %s176, 1
      %p180 = scmp.eq.s32.totalorder %s32, 1
      %p181 = scmp.ne.s32.totalorder %s176, %s178
      %p182 = scmp.eq.s32.totalorder %s32, 0
      %p183 = por %p181, %p182
      %p184 = scmp.ne.s32.totalorder %s176, %s178
      %p185 = scmp.eq.s32.totalorder %s37, 1
      %p186 = por %p184, %p185
      %p187 = scmp.ne.s32.totalorder %s178, %s179
      %p188 = scmp.eq.s32.totalorder %s37, 0
      %p189 = por %p187, %p188
      %p190 = scmp.ne.s32.totalorder %s178, %s179
      %p191 = scmp.eq.s32.totalorder %s38, 1
      %p192 = por %p190, %p191
      %p194 = scmp.ne.s32.totalorder %s179, %s193
      %p195 = scmp.eq.s32.totalorder %s38, 0
      %p196 = por %p194, %p195
      %s198 = sadd.s32 %s197, 1
      %p201 = scmp.eq.s32.totalorder %s32, 1
      %p202 = scmp.ne.s32.totalorder %s197, %s199
      %p203 = scmp.eq.s32.totalorder %s32, 0
      %p204 = por %p202, %p203
      %p205 = scmp.ne.s32.totalorder %s197, %s199
      %p206 = scmp.eq.s32.totalorder %s37, 1
      %p207 = por %p205, %p206
      %p208 = scmp.ne.s32.totalorder %s199, %s200
      %p209 = scmp.eq.s32.totalorder %s37, 0
      %p210 = por %p208, %p209
      %p211 = scmp.ne.s32.totalorder %s199, %s200
      %p212 = scmp.eq.s32.totalorder %s38, 1
      %p213 = por %p211, %p212
      %p215 = scmp.ne.s32.totalorder %s200, %s214
      %p216 = scmp.eq.s32.totalorder %s38, 0
      %p217 = por %p215, %p216
      %s219 = sadd.s32 %s218, 1
      %p222 = scmp.eq.s32.totalorder %s32, 1
      %p223 = scmp.ne.s32.totalorder %s218, %s220
      %p224 = scmp.eq.s32.totalorder %s32, 0
      %p225 = por %p223, %p224
      %p226 = scmp.ne.s32.totalorder %s218, %s220
      %p227 = scmp.eq.s32.totalorder %s37, 1
      %p228 = por %p226, %p227
      %p229 = scmp.ne.s32.totalorder %s220, %s221
      %p230 = scmp.eq.s32.totalorder %s37, 0
      %p231 = por %p229, %p230
      %p232 = scmp.ne.s32.totalorder %s220, %s221
      %p233 = scmp.eq.s32.totalorder %s38, 1
      %p234 = por %p232, %p233
      %p236 = scmp.ne.s32.totalorder %s221, %s235
      %p237 = scmp.eq.s32.totalorder %s38, 0
      %p238 = por %p236, %p237
      %s240 = sadd.s32 %s239, 1
      %p243 = scmp.eq.s32.totalorder %s32, 1
      %p244 = scmp.ne.s32.totalorder %s239, %s241
      %p245 = scmp.eq.s32.totalorder %s32, 0
      %p246 = por %p244, %p245
      %p247 = scmp.ne.s32.totalorder %s239, %s241
      %p248 = scmp.eq.s32.totalorder %s37, 1
      %p249 = por %p247, %p248
      %p250 = scmp.ne.s32.totalorder %s241, %s242
      %p251 = scmp.eq.s32.totalorder %s37, 0
      %p252 = por %p250, %p251
      %p253 = scmp.ne.s32.totalorder %s241, %s242
      %p254 = scmp.eq.s32.totalorder %s38, 1
      %p255 = por %p253, %p254
      %p257 = scmp.ne.s32.totalorder %s242, %s256
      %p258 = scmp.eq.s32.totalorder %s38, 0
      %p259 = por %p257, %p258
      %s261 = sadd.s32 %s260, 1
      %p264 = scmp.eq.s32.totalorder %s32, 1
      %p265 = scmp.ne.s32.totalorder %s260, %s262
      %p266 = scmp.eq.s32.totalorder %s32, 0
      %p267 = por %p265, %p266
      %p268 = scmp.ne.s32.totalorder %s260, %s262
      %p269 = scmp.eq.s32.totalorder %s37, 1
      %p270 = por %p268, %p269
      %p271 = scmp.ne.s32.totalorder %s262, %s263
      %p272 = scmp.eq.s32.totalorder %s37, 0
      %p273 = por %p271, %p272
      %p274 = scmp.ne.s32.totalorder %s262, %s263
      %p275 = scmp.eq.s32.totalorder %s38, 1
      %p276 = por %p274, %p275
      %p278 = scmp.ne.s32.totalorder %s263, %s277
      %p279 = scmp.eq.s32.totalorder %s38, 0
      %p280 = por %p278, %p279
      %s282 = sadd.s32 %s281, 1
      %p285 = scmp.eq.s32.totalorder %s32, 1
      %p286 = scmp.ne.s32.totalorder %s281, %s283
      %p287 = scmp.eq.s32.totalorder %s32, 0
      %p288 = por %p286, %p287
      %p289 = scmp.ne.s32.totalorder %s281, %s283
      %p290 = scmp.eq.s32.totalorder %s37, 1
      %p291 = por %p289, %p290
      %p292 = scmp.ne.s32.totalorder %s283, %s284
      %p293 = scmp.eq.s32.totalorder %s37, 0
      %p294 = por %p292, %p293
      %p295 = scmp.ne.s32.totalorder %s283, %s284
      %p296 = scmp.eq.s32.totalorder %s38, 1
      %p297 = por %p295, %p296
      %p299 = scmp.ne.s32.totalorder %s284, %s298
      %p300 = scmp.eq.s32.totalorder %s38, 0
      %p301 = por %p299, %p300
      %s303 = sadd.s32 %s302, 1
      %p306 = scmp.eq.s32.totalorder %s32, 1
      %p307 = scmp.ne.s32.totalorder %s302, %s304
      %p308 = scmp.eq.s32.totalorder %s32, 0
      %p309 = por %p307, %p308
      %p310 = scmp.ne.s32.totalorder %s302, %s304
      %p311 = scmp.eq.s32.totalorder %s37, 1
      %p312 = por %p310, %p311
      %p313 = scmp.ne.s32.totalorder %s304, %s305
      %p314 = scmp.eq.s32.totalorder %s37, 0
      %p315 = por %p313, %p314
      %p316 = scmp.ne.s32.totalorder %s304, %s305
      %p317 = scmp.eq.s32.totalorder %s38, 1
      %p318 = por %p316, %p317
      %p320 = scmp.ne.s32.totalorder %s305, %s319
      %p321 = scmp.eq.s32.totalorder %s38, 0
      %p322 = por %p320, %p321
      %s324 = sadd.s32 %s323, 1
      %p327 = scmp.eq.s32.totalorder %s32, 1
      %p328 = scmp.ne.s32.totalorder %s323, %s325
      %p329 = scmp.eq.s32.totalorder %s32, 0
      %p330 = por %p328, %p329
      %p331 = scmp.ne.s32.totalorder %s323, %s325
      %p332 = scmp.eq.s32.totalorder %s37, 1
      %p333 = por %p331, %p332
      %p334 = scmp.ne.s32.totalorder %s325, %s326
      %p335 = scmp.eq.s32.totalorder %s37, 0
      %p336 = por %p334, %p335
      %p337 = scmp.ne.s32.totalorder %s325, %s326
      %p338 = scmp.eq.s32.totalorder %s38, 1
      %p339 = por %p337, %p338
      %p341 = scmp.ne.s32.totalorder %s326, %s340
      %p342 = scmp.eq.s32.totalorder %s38, 0
      %p343 = por %p341, %p342
      %s344 = ssub.s32 %s32, %s39
      %p345 = scmp.eq.s32.totalorder %s344, 0
      %s347 = sadd.s32 %s346, 1
      %s348 = scalar_select %p345, %s346, %s347
      %p351 = pneg %p345
      %p352 = scmp.eq.s32.totalorder %s32, 1
      %p353 = por %p351, %p352
      %p354 = scmp.ne.s32.totalorder %s346, %s349
      %p355 = scmp.eq.s32.totalorder %s32, 0
      %p356 = por %p354, %p355
      %p357 = scmp.ne.s32.totalorder %s346, %s349
      %p358 = scmp.eq.s32.totalorder %s37, 1
      %p359 = por %p357, %p358
      %p360 = scmp.ne.s32.totalorder %s349, %s350
      %p361 = scmp.eq.s32.totalorder %s37, 0
      %p362 = por %p360, %p361
      %p363 = scmp.ne.s32.totalorder %s349, %s350
      %p364 = scmp.eq.s32.totalorder %s38, 1
      %p365 = por %p363, %p364
      %p367 = scmp.ne.s32.totalorder %s350, %s366
      %p368 = scmp.eq.s32.totalorder %s38, 0
      %p369 = por %p367, %p368
      %s370 = ssub.s32 %s32, %s39
      %p371 = scmp.eq.s32.totalorder %s370, 0
      %s373 = sadd.s32 %s372, 1
      %s374 = scalar_select %p371, %s372, %s373
      %p377 = pneg %p371
      %p378 = scmp.eq.s32.totalorder %s32, 1
      %p379 = por %p377, %p378
      %p380 = scmp.ne.s32.totalorder %s372, %s375
      %p381 = scmp.eq.s32.totalorder %s32, 0
      %p382 = por %p380, %p381
      %p383 = scmp.ne.s32.totalorder %s372, %s375
      %p384 = scmp.eq.s32.totalorder %s37, 1
      %p385 = por %p383, %p384
      %p386 = scmp.ne.s32.totalorder %s375, %s376
      %p387 = scmp.eq.s32.totalorder %s37, 0
      %p388 = por %p386, %p387
      %p389 = scmp.ne.s32.totalorder %s375, %s376
      %p390 = scmp.eq.s32.totalorder %s38, 1
      %p391 = por %p389, %p390
      %p393 = scmp.ne.s32.totalorder %s376, %s392
      %p394 = scmp.eq.s32.totalorder %s38, 0
      %p395 = por %p393, %p394
      %p396 = scmp.le.s32.totalorder 1, %s32
      %p397 = scmp.lt.s32.totalorder %s32, 3
      %p398 = pnand %p396, %p397
      %p399 = pneg %p398
      // Predicated region
      $region9: #{tpu_custom_call.1} parent=5 // pred_check
        _
      $region10: #{tpu_custom_call.1} parent=5 // pred_check_branch
        %401 = sbr.rel (%p398) target = $region12
      $region11: #{tpu_custom_call.1} parent=5 // pred_region
        %s402 = ssub.s32 %s32, 1
        // Predicated region
        $region13: #{tpu_custom_call.1} parent=11 // pred_check
          %p403 = pneg %p105
        $region14: #{tpu_custom_call.1} parent=11 // pred_check_branch
          %405 = sbr.rel (%p403) target = $region16
        $region15: #{tpu_custom_call.1} parent=11 // pred_region
          _
        $region16: #{tpu_custom_call.1} parent=11 // pred_fallthru
          _
        // Predicated region
        $region17: #{tpu_custom_call.1} parent=11 // pred_check
          %p406 = pneg %p126
        $region18: #{tpu_custom_call.1} parent=11 // pred_check_branch
          %408 = sbr.rel (%p406) target = $region20
        $region19: #{tpu_custom_call.1} parent=11 // pred_region
          _
        $region20: #{tpu_custom_call.1} parent=11 // pred_fallthru
          _
        // Predicated region
        $region21: #{tpu_custom_call.1} parent=11 // pred_check
          %p409 = pneg %p147
        $region22: #{tpu_custom_call.1} parent=11 // pred_check_branch
          %411 = sbr.rel (%p409) target = $region24
        $region23: #{tpu_custom_call.1} parent=11 // pred_region
          %413 = vsyncadd [#allocation6], 0
          %s414 = sshll.u32 %s4, 4
          %s415 = int_to_ptr.hbm [resolvable:$true] %s414
          %s416 = sshll.u32 [#allocation5], 4
          %s417 = int_to_ptr.vmem [resolvable:$true] %s416
          %422 = dma.hbm_to_vmem [thread:$0]  %s415, 256, %s417, [#allocation6], 64, 64, 4
        $region24: #{tpu_custom_call.1} parent=11 // pred_fallthru
          _
        // Predicated region
        $region25: #{tpu_custom_call.1} parent=11 // pred_check
          %p423 = pneg %p168
        $region26: #{tpu_custom_call.1} parent=11 // pred_check_branch
          %425 = sbr.rel (%p423) target = $region28
        $region27: #{tpu_custom_call.1} parent=11 // pred_region
          _
        $region28: #{tpu_custom_call.1} parent=11 // pred_fallthru
          _
        // Predicated region
        $region29: #{tpu_custom_call.1} parent=11 // pred_check
          %p426 = pneg %p189
        $region30: #{tpu_custom_call.1} parent=11 // pred_check_branch
          %428 = sbr.rel (%p426) target = $region32
        $region31: #{tpu_custom_call.1} parent=11 // pred_region
          %430 = vsyncadd [#allocation6], 0
          %s431 = sshll.u32 %s6, 4
          %s432 = int_to_ptr.hbm [resolvable:$true] %s431
          %s433 = sshll.u32 [#allocation7], 4
          %s434 = int_to_ptr.vmem [resolvable:$true] %s433
          %439 = dma.hbm_to_vmem [thread:$0]  %s432, 256, %s434, [#allocation6], 64, 64, 4
        $region32: #{tpu_custom_call.1} parent=11 // pred_fallthru
          _
        // Predicated region
        $region33: #{tpu_custom_call.1} parent=11 // pred_check
          %p440 = pneg %p210
        $region34: #{tpu_custom_call.1} parent=11 // pred_check_branch
          %442 = sbr.rel (%p440) target = $region36
        $region35: #{tpu_custom_call.1} parent=11 // pred_region
          _
        $region36: #{tpu_custom_call.1} parent=11 // pred_fallthru
          _
        // Predicated region
        $region37: #{tpu_custom_call.1} parent=11 // pred_check
          %p443 = pneg %p231
        $region38: #{tpu_custom_call.1} parent=11 // pred_check_branch
          %445 = sbr.rel (%p443) target = $region40
        $region39: #{tpu_custom_call.1} parent=11 // pred_region
          _
        $region40: #{tpu_custom_call.1} parent=11 // pred_fallthru
          _
        // Predicated region
        $region41: #{tpu_custom_call.1} parent=11 // pred_check
          %p446 = pneg %p252
        $region42: #{tpu_custom_call.1} parent=11 // pred_check_branch
          %448 = sbr.rel (%p446) target = $region44
        $region43: #{tpu_custom_call.1} parent=11 // pred_region
          _
        $region44: #{tpu_custom_call.1} parent=11 // pred_fallthru
          _
        // Predicated region
        $region45: #{tpu_custom_call.1} parent=11 // pred_check
          %p449 = pneg %p273
        $region46: #{tpu_custom_call.1} parent=11 // pred_check_branch
          %451 = sbr.rel (%p449) target = $region48
        $region47: #{tpu_custom_call.1} parent=11 // pred_region
          _
        $region48: #{tpu_custom_call.1} parent=11 // pred_fallthru
          _
        // Predicated region
        $region49: #{tpu_custom_call.1} parent=11 // pred_check
          %p452 = pneg %p294
        $region50: #{tpu_custom_call.1} parent=11 // pred_check_branch
          %454 = sbr.rel (%p452) target = $region52
        $region51: #{tpu_custom_call.1} parent=11 // pred_region
          _
        $region52: #{tpu_custom_call.1} parent=11 // pred_fallthru
          _
        // Predicated region
        $region53: #{tpu_custom_call.1} parent=11 // pred_check
          %p455 = pneg %p315
        $region54: #{tpu_custom_call.1} parent=11 // pred_check_branch
          %457 = sbr.rel (%p455) target = $region56
        $region55: #{tpu_custom_call.1} parent=11 // pred_region
          _
        $region56: #{tpu_custom_call.1} parent=11 // pred_fallthru
          _
        // Predicated region
        $region57: #{tpu_custom_call.1} parent=11 // pred_check
          %p458 = pneg %p336
        $region58: #{tpu_custom_call.1} parent=11 // pred_check_branch
          %460 = sbr.rel (%p458) target = $region60
        $region59: #{tpu_custom_call.1} parent=11 // pred_region
          _
        $region60: #{tpu_custom_call.1} parent=11 // pred_fallthru
          _
      $region12: #{tpu_custom_call.1} parent=5 // pred_fallthru
        _
      %p461 = scmp.lt.s32.totalorder %s32, 2
      // Predicated region
      $region61: #{tpu_custom_call.1} parent=5 // pred_check
        %p462 = pneg %p461
      $region62: #{tpu_custom_call.1} parent=5 // pred_check_branch
        %464 = sbr.rel (%p462) target = $region64
      $region63: #{tpu_custom_call.1} parent=5 // pred_region
        // Predicated region
        $region65: #{tpu_custom_call.1} parent=63 // pred_check
          %p465 = pneg %p52
        $region66: #{tpu_custom_call.1} parent=63 // pred_check_branch
          %467 = sbr.rel (%p465) target = $region68
        $region67: #{tpu_custom_call.1} parent=63 // pred_region
          %s468 = smul.u32 2, %s32
          %p469 = scmp.lt.s32.totalorder %s468, 3
          %s470 = scalar_select %p469, %s468, 3
          %s471 = smul.addr %s470, 8
          %s472 = scalar_lea.vmem %s0, %s471
          %s473 = smul.u32 2, %s32
        $region68: #{tpu_custom_call.1} parent=63 // pred_fallthru
          _
        // Predicated region
        $region69: #{tpu_custom_call.1} parent=63 // pred_check
          %p474 = pneg %p78
        $region70: #{tpu_custom_call.1} parent=63 // pred_check_branch
          %476 = sbr.rel (%p474) target = $region72
        $region71: #{tpu_custom_call.1} parent=63 // pred_region
          %s477 = sand.u32 %s68, 1
          %s478 = scalar_lea.sflag [#allocation3], %s477
          %s479 = sand.u32 %s68, 1
          %s480 = smul.addr %s479, 2
          %s481 = scalar_lea.vmem [#allocation2], %s480
          %s482 = smul.u32 2, %s32
          %484 = vsyncadd %s478, 0
          %s485 = scalar_lea.hbm %s1, %s482
          %s486 = sshll.u32 %s485, 4
          %s487 = int_to_ptr.hbm [resolvable:$true] %s486
          %s488 = sshll.u32 %s481, 4
          %s489 = int_to_ptr.vmem [resolvable:$true] %s488
          %494 = dma.hbm_to_vmem [thread:$0]  %s487, 32, %s489, %s478, 16, 16, 1
        $region72: #{tpu_custom_call.1} parent=63 // pred_fallthru
          _
      $region64: #{tpu_custom_call.1} parent=5 // pred_fallthru
        _
      %p495 = scmp.le.s32.totalorder 1, %s32
      %p496 = scmp.lt.s32.totalorder %s32, 3
      %p497 = pnand %p495, %p496
      %p498 = pneg %p497
      // Predicated region
      $region73: #{tpu_custom_call.1} parent=5 // pred_check
        _
      $region74: #{tpu_custom_call.1} parent=5 // pred_check_branch
        %500 = sbr.rel (%p497) target = $region76
      $region75: #{tpu_custom_call.1} parent=5 // pred_region
        %s501 = ssub.s32 %s32, 1
        %s502 = sand.u32 %s71, 1
        %s503 = scalar_lea.sflag [#allocation3], %s502
        %s504 = sand.u32 %s71, 1
        %s505 = smul.addr %s504, 2
        %s506 = scalar_lea.vmem [#allocation2], %s505
        // Predicated region
        $region77: #{tpu_custom_call.1} parent=75 // pred_check
          %p507 = pneg %p84
        $region78: #{tpu_custom_call.1} parent=75 // pred_check_branch
          %509 = sbr.rel (%p507) target = $region80
        $region79: #{tpu_custom_call.1} parent=75 // pred_region
          %511 = dma.done %s503, 32
        $region80: #{tpu_custom_call.1} parent=75 // pred_fallthru
          _
        // Predicated region
        $region81: #{tpu_custom_call.1} parent=75 // pred_check
          %p512 = pneg %p147
        $region82: #{tpu_custom_call.1} parent=75 // pred_check_branch
          %514 = sbr.rel (%p512) target = $region84
        $region83: #{tpu_custom_call.1} parent=75 // pred_region
          %516 = dma.done [#allocation6], 256
        $region84: #{tpu_custom_call.1} parent=75 // pred_fallthru
          _
        // Predicated region
        $region85: #{tpu_custom_call.1} parent=75 // pred_check
          %p517 = pneg %p189
        $region86: #{tpu_custom_call.1} parent=75 // pred_check_branch
          %519 = sbr.rel (%p517) target = $region88
        $region87: #{tpu_custom_call.1} parent=75 // pred_region
          %521 = dma.done [#allocation6], 256
        $region88: #{tpu_custom_call.1} parent=75 // pred_fallthru
          _
        %s522 = smul.u32 2, %s37
        %p523 = scmp.lt.s32.totalorder %s522, 3
        %s524 = scalar_select %p523, %s522, 3
        %s525 = smul.addr %s524, 8
        %s526 = scalar_lea.vmem %s0, %s525
        %p527 = pneg %p58
        %p528 = pneg %p55
        %s529 = sand.u32 %s71, 1
        %s530 = scalar_lea.sflag [#allocation3], %s529
        %s531 = sand.u32 %s71, 1
        %s532 = smul.addr %s531, 2
        %s533 = scalar_lea.vmem [#allocation2], %s532
        %p534 = pneg %p84
        %p535 = pneg %p81
        %p536 = pneg %p105
        %p537 = pneg %p102
        %p538 = pneg %p126
        %p539 = pneg %p123
        %p540 = pneg %p147
        %p541 = pneg %p144
        %p542 = pneg %p168
        %p543 = pneg %p165
        %p544 = pneg %p189
        %p545 = pneg %p186
        %p546 = pneg %p210
        %p547 = pneg %p207
        %p548 = pneg %p231
        %p549 = pneg %p228
        %p550 = pneg %p252
        %p551 = pneg %p249
        %p552 = pneg %p273
        %p553 = pneg %p270
        %p554 = pneg %p294
        %p555 = pneg %p291
        %p556 = pneg %p315
        %p557 = pneg %p312
        %p558 = pneg %p336
        %p559 = pneg %p333
        %p560 = pneg %p362
        %p561 = pneg %p359
        %s562 = sand.u32 %s349, 1
        %s563 = scalar_lea.sflag [#allocation4], %s562
        %s564 = sand.u32 %s349, 1
        %s565 = smul.addr %s564, 16
        %s566 = scalar_lea.vmem [#allocation8], %s565
        %p567 = pneg %p388
        %p568 = pneg %p385
        %s569 = sand.u32 %s375, 1
        %s570 = scalar_lea.sflag [#allocation10], %s569
        %s571 = sand.u32 %s375, 1
        %s572 = smul.addr %s571, 16
        %s573 = scalar_lea.vmem [#allocation9], %s572
        %s574 = smul.u32 2, %s37
        %p575 = scmp.lt.s32.totalorder %s574, 3
        %s576 = scalar_select %p575, %s574, 3
        %s577 = smul.addr %s576, 8
        %s578 = scalar_lea.vmem %s0, %s577
        %s579 = smul.u32 2, %s37
        %s580 = smul.u32 2, %s37
        %s581 = smul.u32 2, %s37
        %s582 = smul.u32 2, %s37
        %v584 = vld [vmem:[%s578] sm:$0xff]
        %v585 = vld [vmem:[%s578 + $0x8] sm:$0xff]
        %v586 = vpack.c.bf16 %v585, %v584
        %v587 = vld [vmem:[%s2] sm:$0xf]
        %v588 = vld [vmem:[%s2 + $0x4] sm:$0xf]
        %v589 = vld [vmem:[%s2 + $0x8] sm:$0xf]
        %v590 = vld [vmem:[%s2 + $0xc] sm:$0xf]
        %v591 = vld [vmem:[%s3] sm:$0x1]
        %v593 = vperm.slane %v591, 0
        %v599 = vunpack.c.l.b16 %v587
        %v600 = vunpack.c.l.b16 %v588
        %v601 = vunpack.c.l.b16 %v589
        %v602 = vunpack.c.l.b16 %v590
        %v603 = vpack.c.b16 %v600, %v599
        %v604 = vpack.c.b16 %v602, %v601
        %vm607 = vcmask 261120
        %v609 = vsel %vm607, %v586, 0
        %611 = vmatpush.bf16.msra.mxu0 0
        %612 = vmatpush.bf16.msra.mxu0 0
        %613 = vmatpush.bf16.msra.mxu0 0
        %614 = vmatpush.bf16.msra.mxu0 0
        %615 = vmatpush.bf16.msra.mxu0 0
        %616 = vmatpush.bf16.msra.mxu0 0
        %617 = vmatpush.bf16.msra.mxu0 %v604
        %618 = vmatpush.bf16.msra.mxu0 %v603
        %619 = vmatmul.bf16.gmra.mxu0 %v609
        %v620 = vpop.f32.mrf.mxu0
        %v621 = vadd.f32 %v593, %v620
        %v622 = vpop.f32.mrf.mxu0
        %v623 = vadd.f32 %v593, %v622
        %624 = vdwg.mxu0
        %v625 = vpack.c.bf16 %v621, %v621
        %v626 = vpack.c.bf16 %v623, %v623
        %v627 = vld [vmem:[#allocation5] sm:$0xf]
        %v628 = vld [vmem:[#allocation5 + $0x4] sm:$0xf]
        %v629 = vld [vmem:[#allocation5 + $0x8] sm:$0xf]
        %v630 = vld [vmem:[#allocation5 + $0xc] sm:$0xf]
        %v631 = vld [vmem:[%s506] sm:$0x1]
        %v633 = vunpack.c.l.b16 %v625
        %v634 = vpack.c.b16 %v633, %v633
        %635 = vrot.lane.b32.xlu0 %v634, 96
        %v636 = vpop.permute.xlu0 %635
        %vm637 = vcmask 64512
        %v639 = vsel %vm637, %v625, 0
        %v642 = vsel %vm637, %v636, 0
        %644 = vmatpush.bf16.xpose.msra.mxu0 0
        %645 = vmatpush.bf16.xpose.msra.mxu0 0
        %646 = vmatpush.bf16.xpose.msra.mxu0 0
        %647 = vmatpush.bf16.xpose.msra.mxu0 0
        %648 = vmatpush.bf16.xpose.msra.mxu0 0
        %649 = vmatpush.bf16.xpose.msra.mxu0 0
        %650 = vmatpush.bf16.xpose.msra.mxu0 0
        %651 = vmatpush.bf16.xpose.msra.mxu0 %v642
        %652 = vmatmul.bf16.gmra.mxu0 %v639
        %v653 = vpop.f32.mrf.mxu0
        %v654 = vadd.f32 0.0, %v653
        %v655 = vpop.f32.mrf.mxu0
        %656 = vdwg.mxu0
        %v657 = vmul.f32 %v654, 0.35355338
        %v659 = vperm.slane %v631, 0
        %v661 = vadd.f32 %v657, %v659
        %662 = vst.msk [vmem:[%s573] sm:$0xff] %vm637, %v661
        %v663 = vsel %vm637, %v661, -inf
        %664 = vmax.xlane.f32.xlu0 %v663
        %v665 = vpop.xlane.xlu0 %664
        %v666 = vsub.f32 %v661, %v665
        %v667 = vmul.f32 %v666, 1.442695
        %v668 = vpow.pop %v667
        %v669 = vsel %vm637, %v668, 0.0
        %670 = vadd.xlane.f32.xlu0 %v669
        %v671 = vpop.xlane.xlu0 %670
        %v672 = vrcp.pop %v671
        %v673 = vmul.f32 %v668, %v672
        %v674 = vpack.c.bf16 %v673, %v673
        %675 = vrot.lane.b32.xlu0 %v634, 64
        %v676 = vpop.permute.xlu0 %675
        %v678 = vsel %vm637, %v674, 0
        %vm680 = vcmask 1043456
        %v682 = vsel %vm680, %v676, 0
        %684 = vmatpush.bf16.msra.mxu0 0
        %685 = vmatpush.bf16.msra.mxu0 0
        %686 = vmatpush.bf16.msra.mxu0 0
        %687 = vmatpush.bf16.msra.mxu0 0
        %688 = vmatpush.bf16.msra.mxu0 0
        %689 = vmatpush.bf16.msra.mxu0 0
        %690 = vmatpush.bf16.msra.mxu0 0
        %691 = vmatpush.bf16.msra.mxu0 %v682
        %692 = vmatmul.bf16.gmra.mxu0 %v678
        %v693 = vpop.f32.mrf.mxu0
        %v694 = vadd.f32 0.0, %v693
        %v695 = vpop.f32.mrf.mxu0
        %696 = vdwg.mxu0
        %v697 = vpack.c.bf16 %v694, %v694
        %698 = vrot.lane.b32.xlu0 %v634, 120
        %v699 = vpop.permute.xlu0 %698
        %700 = vrot.lane.b32.xlu0 %v634, 88
        %v701 = vpop.permute.xlu0 %700
        %v703 = vsel %vm637, %v699, 0
        %v706 = vsel %vm637, %v701, 0
        %708 = vmatpush.bf16.xpose.msra.mxu0 0
        %709 = vmatpush.bf16.xpose.msra.mxu0 0
        %710 = vmatpush.bf16.xpose.msra.mxu0 0
        %711 = vmatpush.bf16.xpose.msra.mxu0 0
        %712 = vmatpush.bf16.xpose.msra.mxu0 0
        %713 = vmatpush.bf16.xpose.msra.mxu0 0
        %714 = vmatpush.bf16.xpose.msra.mxu0 0
        %715 = vmatpush.bf16.xpose.msra.mxu0 %v706
        %716 = vmatmul.bf16.gmra.mxu0 %v703
        %v717 = vpop.f32.mrf.mxu0
        %v718 = vadd.f32 0.0, %v717
        %v719 = vpop.f32.mrf.mxu0
        %720 = vdwg.mxu0
        %v721 = vmul.f32 %v718, 0.35355338
        %v722 = vadd.f32 %v721, %v659
        %724 = vrot.lane.b32.xlu0 %v722, 8
        %v725 = vpop.permute.xlu0 %724
        %vm727 = vcmask 130112
        %728 = vst.msk [vmem:[%s573] sm:$0xff] %vm727, %v725
        %v729 = vsel %vm637, %v722, -inf
        %730 = vmax.xlane.f32.xlu0 %v729
        %v731 = vpop.xlane.xlu0 %730
        %v732 = vsub.f32 %v722, %v731
        %v733 = vmul.f32 %v732, 1.442695
        %v734 = vpow.pop %v733
        %v735 = vsel %vm637, %v734, 0.0
        %736 = vadd.xlane.f32.xlu0 %v735
        %v737 = vpop.xlane.xlu0 %736
        %v738 = vrcp.pop %v737
        %v739 = vmul.f32 %v734, %v738
        %v740 = vpack.c.bf16 %v739, %v739
        %741 = vrot.lane.b32.xlu0 %v634, 56
        %v742 = vpop.permute.xlu0 %741
        %v744 = vsel %vm637, %v740, 0
        %v747 = vsel %vm680, %v742, 0
        %749 = vmatpush.bf16.msra.mxu0 0
        %750 = vmatpush.bf16.msra.mxu0 0
        %751 = vmatpush.bf16.msra.mxu0 0
        %752 = vmatpush.bf16.msra.mxu0 0
        %753 = vmatpush.bf16.msra.mxu0 0
        %754 = vmatpush.bf16.msra.mxu0 0
        %755 = vmatpush.bf16.msra.mxu0 0
        %756 = vmatpush.bf16.msra.mxu0 %v747
        %757 = vmatmul.bf16.gmra.mxu0 %v744
        %v758 = vpop.f32.mrf.mxu0
        %v759 = vadd.f32 0.0, %v758
        %v760 = vpop.f32.mrf.mxu0
        %761 = vdwg.mxu0
        %v762 = vpack.c.bf16 %v759, %v759
        %v764 = vsel %vm637, %v762, 0
        %v767 = vsel %vm680, %v628, 0
        %769 = vmatpush.bf16.msra.mxu0 0
        %770 = vmatpush.bf16.msra.mxu0 0
        %771 = vmatpush.bf16.msra.mxu0 0
        %772 = vmatpush.bf16.msra.mxu0 0
        %773 = vmatpush.bf16.msra.mxu0 0
        %774 = vmatpush.bf16.msra.mxu0 0
        %775 = vmatpush.bf16.msra.mxu0 0
        %776 = vmatpush.bf16.msra.mxu0 %v767
        %777 = vmatmul.bf16.gmra.mxu0 %v764
        %v778 = vpop.f32.mrf.mxu0
        %v779 = vadd.f32 0.0, %v778
        %v780 = vpop.f32.mrf.mxu0
        %781 = vdwg.mxu0
        %v783 = vsel %vm637, %v697, 0
        %v786 = vsel %vm680, %v627, 0
        %788 = vmatpush.bf16.msra.mxu0 0
        %789 = vmatpush.bf16.msra.mxu0 0
        %790 = vmatpush.bf16.msra.mxu0 0
        %791 = vmatpush.bf16.msra.mxu0 0
        %792 = vmatpush.bf16.msra.mxu0 0
        %793 = vmatpush.bf16.msra.mxu0 0
        %794 = vmatpush.bf16.msra.mxu0 0
        %795 = vmatpush.bf16.msra.mxu0 %v786
        %796 = vmatmul.bf16.gmra.mxu0 %v783
        %v797 = vpop.f32.mrf.mxu0
        %v798 = vadd.f32 %v779, %v797
        %v799 = vpop.f32.mrf.mxu0
        %800 = vdwg.mxu0
        %801 = vrot.lane.b32.xlu0 %v634, 112
        %v802 = vpop.permute.xlu0 %801
        %803 = vrot.lane.b32.xlu0 %v634, 80
        %v804 = vpop.permute.xlu0 %803
        %v806 = vsel %vm637, %v802, 0
        %v809 = vsel %vm637, %v804, 0
        %811 = vmatpush.bf16.xpose.msra.mxu0 0
        %812 = vmatpush.bf16.xpose.msra.mxu0 0
        %813 = vmatpush.bf16.xpose.msra.mxu0 0
        %814 = vmatpush.bf16.xpose.msra.mxu0 0
        %815 = vmatpush.bf16.xpose.msra.mxu0 0
        %816 = vmatpush.bf16.xpose.msra.mxu0 0
        %817 = vmatpush.bf16.xpose.msra.mxu0 0
        %818 = vmatpush.bf16.xpose.msra.mxu0 %v809
        %819 = vmatmul.bf16.gmra.mxu0 %v806
        %v820 = vpop.f32.mrf.mxu0
        %v821 = vadd.f32 0.0, %v820
        %v822 = vpop.f32.mrf.mxu0
        %823 = vdwg.mxu0
        %v824 = vmul.f32 %v821, 0.35355338
        %v825 = vadd.f32 %v824, %v659
        %827 = vrot.lane.b32.xlu0 %v825, 16
        %v828 = vpop.permute.xlu0 %827
        %vm830 = vcmask 195712
        %831 = vst.msk [vmem:[%s573] sm:$0xff] %vm830, %v828
        %v832 = vsel %vm637, %v825, -inf
        %833 = vmax.xlane.f32.xlu0 %v832
        %v834 = vpop.xlane.xlu0 %833
        %v835 = vsub.f32 %v825, %v834
        %v836 = vmul.f32 %v835, 1.442695
        %v837 = vpow.pop %v836
        %v838 = vsel %vm637, %v837, 0.0
        %839 = vadd.xlane.f32.xlu0 %v838
        %v840 = vpop.xlane.xlu0 %839
        %v841 = vrcp.pop %v840
        %v842 = vmul.f32 %v837, %v841
        %v843 = vpack.c.bf16 %v842, %v842
        %844 = vrot.lane.b32.xlu0 %v634, 48
        %v845 = vpop.permute.xlu0 %844
        %v847 = vsel %vm637, %v843, 0
        %v850 = vsel %vm680, %v845, 0
        %852 = vmatpush.bf16.msra.mxu0 0
        %853 = vmatpush.bf16.msra.mxu0 0
        %854 = vmatpush.bf16.msra.mxu0 0
        %855 = vmatpush.bf16.msra.mxu0 0
        %856 = vmatpush.bf16.msra.mxu0 0
        %857 = vmatpush.bf16.msra.mxu0 0
        %858 = vmatpush.bf16.msra.mxu0 0
        %859 = vmatpush.bf16.msra.mxu0 %v850
        %860 = vmatmul.bf16.gmra.mxu0 %v847
        %v861 = vpop.f32.mrf.mxu0
        %v862 = vadd.f32 0.0, %v861
        %v863 = vpop.f32.mrf.mxu0
        %864 = vdwg.mxu0
        %v865 = vpack.c.bf16 %v862, %v862
        %v867 = vsel %vm637, %v865, 0
        %v870 = vsel %vm680, %v629, 0
        %872 = vmatpush.bf16.msra.mxu0 0
        %873 = vmatpush.bf16.msra.mxu0 0
        %874 = vmatpush.bf16.msra.mxu0 0
        %875 = vmatpush.bf16.msra.mxu0 0
        %876 = vmatpush.bf16.msra.mxu0 0
        %877 = vmatpush.bf16.msra.mxu0 0
        %878 = vmatpush.bf16.msra.mxu0 0
        %879 = vmatpush.bf16.msra.mxu0 %v870
        %880 = vmatmul.bf16.gmra.mxu0 %v867
        %v881 = vpop.f32.mrf.mxu0
        %v882 = vadd.f32 0.0, %v881
        %v883 = vpop.f32.mrf.mxu0
        %884 = vdwg.mxu0
        %v885 = vadd.f32 %v798, %v882
        %886 = vrot.lane.b32.xlu0 %v634, 104
        %v887 = vpop.permute.xlu0 %886
        %888 = vrot.lane.b32.xlu0 %v634, 72
        %v889 = vpop.permute.xlu0 %888
        %v891 = vsel %vm637, %v887, 0
        %v894 = vsel %vm637, %v889, 0
        %896 = vmatpush.bf16.xpose.msra.mxu0 0
        %897 = vmatpush.bf16.xpose.msra.mxu0 0
        %898 = vmatpush.bf16.xpose.msra.mxu0 0
        %899 = vmatpush.bf16.xpose.msra.mxu0 0
        %900 = vmatpush.bf16.xpose.msra.mxu0 0
        %901 = vmatpush.bf16.xpose.msra.mxu0 0
        %902 = vmatpush.bf16.xpose.msra.mxu0 0
        %903 = vmatpush.bf16.xpose.msra.mxu0 %v894
        %904 = vmatmul.bf16.gmra.mxu0 %v891
        %v905 = vpop.f32.mrf.mxu0
        %v906 = vadd.f32 0.0, %v905
        %v907 = vpop.f32.mrf.mxu0
        %908 = vdwg.mxu0
        %v909 = vmul.f32 %v906, 0.35355338
        %v910 = vadd.f32 %v909, %v659
        %912 = vrot.lane.b32.xlu0 %v910, 24
        %v913 = vpop.permute.xlu0 %912
        %vm915 = vcmask 261312
        %916 = vst.msk [vmem:[%s573] sm:$0xff] %vm915, %v913
        %v917 = vsel %vm637, %v910, -inf
        %918 = vmax.xlane.f32.xlu0 %v917
        %v919 = vpop.xlane.xlu0 %918
        %v920 = vsub.f32 %v910, %v919
        %v921 = vmul.f32 %v920, 1.442695
        %v922 = vpow.pop %v921
        %v923 = vsel %vm637, %v922, 0.0
        %924 = vadd.xlane.f32.xlu0 %v923
        %v925 = vpop.xlane.xlu0 %924
        %v926 = vrcp.pop %v925
        %v927 = vmul.f32 %v922, %v926
        %v928 = vpack.c.bf16 %v927, %v927
        %929 = vrot.lane.b32.xlu0 %v634, 40
        %v930 = vpop.permute.xlu0 %929
        %v932 = vsel %vm637, %v928, 0
        %v935 = vsel %vm680, %v930, 0
        %937 = vmatpush.bf16.msra.mxu0 0
        %938 = vmatpush.bf16.msra.mxu0 0
        %939 = vmatpush.bf16.msra.mxu0 0
        %940 = vmatpush.bf16.msra.mxu0 0
        %941 = vmatpush.bf16.msra.mxu0 0
        %942 = vmatpush.bf16.msra.mxu0 0
        %943 = vmatpush.bf16.msra.mxu0 0
        %944 = vmatpush.bf16.msra.mxu0 %v935
        %945 = vmatmul.bf16.gmra.mxu0 %v932
        %v946 = vpop.f32.mrf.mxu0
        %v947 = vadd.f32 0.0, %v946
        %v948 = vpop.f32.mrf.mxu0
        %949 = vdwg.mxu0
        %v950 = vpack.c.bf16 %v947, %v947
        %v952 = vsel %vm637, %v950, 0
        %v955 = vsel %vm680, %v630, 0
        %957 = vmatpush.bf16.msra.mxu0 0
        %958 = vmatpush.bf16.msra.mxu0 0
        %959 = vmatpush.bf16.msra.mxu0 0
        %960 = vmatpush.bf16.msra.mxu0 0
        %961 = vmatpush.bf16.msra.mxu0 0
        %962 = vmatpush.bf16.msra.mxu0 0
        %963 = vmatpush.bf16.msra.mxu0 0
        %964 = vmatpush.bf16.msra.mxu0 %v955
        %965 = vmatmul.bf16.gmra.mxu0 %v952
        %v966 = vpop.f32.mrf.mxu0
        %v967 = vadd.f32 0.0, %v966
        %v968 = vpop.f32.mrf.mxu0
        %969 = vdwg.mxu0
        %v970 = vadd.f32 %v885, %v967
        %s971 = scalar_lea.vmem %s506, 1 [#allocation2]
        %v972 = vld [vmem:[%s971] sm:$0x1]
        %v974 = vunpack.c.l.b16 %v626
        %v975 = vpack.c.b16 %v974, %v974
        %976 = vrot.lane.b32.xlu0 %v975, 96
        %v977 = vpop.permute.xlu0 %976
        %v979 = vsel %vm637, %v626, 0
        %v982 = vsel %vm637, %v977, 0
        %984 = vmatpush.bf16.xpose.msra.mxu0 0
        %985 = vmatpush.bf16.xpose.msra.mxu0 0
        %986 = vmatpush.bf16.xpose.msra.mxu0 0
        %987 = vmatpush.bf16.xpose.msra.mxu0 0
        %988 = vmatpush.bf16.xpose.msra.mxu0 0
        %989 = vmatpush.bf16.xpose.msra.mxu0 0
        %990 = vmatpush.bf16.xpose.msra.mxu0 0
        %991 = vmatpush.bf16.xpose.msra.mxu0 %v982
        %992 = vmatmul.bf16.gmra.mxu0 %v979
        %v993 = vpop.f32.mrf.mxu0
        %v994 = vadd.f32 0.0, %v993
        %v995 = vpop.f32.mrf.mxu0
        %996 = vdwg.mxu0
        %v997 = vmul.f32 %v994, 0.35355338
        %v999 = vperm.slane %v972, 0
        %v1001 = vadd.f32 %v997, %v999
        %s1002 = scalar_lea.vmem %s573, 8 [#allocation9]
        %1003 = vst.msk [vmem:[%s1002] sm:$0xff] %vm637, %v1001
        %v1004 = vsel %vm637, %v1001, -inf
        %1005 = vmax.xlane.f32.xlu0 %v1004
        %v1006 = vpop.xlane.xlu0 %1005
        %v1007 = vsub.f32 %v1001, %v1006
        %v1008 = vmul.f32 %v1007, 1.442695
        %v1009 = vpow.pop %v1008
        %v1010 = vsel %vm637, %v1009, 0.0
        %1011 = vadd.xlane.f32.xlu0 %v1010
        %v1012 = vpop.xlane.xlu0 %1011
        %v1013 = vrcp.pop %v1012
        %v1014 = vmul.f32 %v1009, %v1013
        %v1015 = vpack.c.bf16 %v1014, %v1014
        %1016 = vrot.lane.b32.xlu0 %v975, 64
        %v1017 = vpop.permute.xlu0 %1016
        %v1019 = vsel %vm637, %v1015, 0
        %v1022 = vsel %vm680, %v1017, 0
        %1024 = vmatpush.bf16.msra.mxu0 0
        %1025 = vmatpush.bf16.msra.mxu0 0
        %1026 = vmatpush.bf16.msra.mxu0 0
        %1027 = vmatpush.bf16.msra.mxu0 0
        %1028 = vmatpush.bf16.msra.mxu0 0
        %1029 = vmatpush.bf16.msra.mxu0 0
        %1030 = vmatpush.bf16.msra.mxu0 0
        %1031 = vmatpush.bf16.msra.mxu0 %v1022
        %1032 = vmatmul.bf16.gmra.mxu0 %v1019
        %v1033 = vpop.f32.mrf.mxu0
        %v1034 = vadd.f32 0.0, %v1033
        %v1035 = vpop.f32.mrf.mxu0
        %1036 = vdwg.mxu0
        %v1037 = vpack.c.bf16 %v1034, %v1034
        %1038 = vrot.lane.b32.xlu0 %v975, 120
        %v1039 = vpop.permute.xlu0 %1038
        %1040 = vrot.lane.b32.xlu0 %v975, 88
        %v1041 = vpop.permute.xlu0 %1040
        %v1043 = vsel %vm637, %v1039, 0
        %v1046 = vsel %vm637, %v1041, 0
        %1048 = vmatpush.bf16.xpose.msra.mxu0 0
        %1049 = vmatpush.bf16.xpose.msra.mxu0 0
        %1050 = vmatpush.bf16.xpose.msra.mxu0 0
        %1051 = vmatpush.bf16.xpose.msra.mxu0 0
        %1052 = vmatpush.bf16.xpose.msra.mxu0 0
        %1053 = vmatpush.bf16.xpose.msra.mxu0 0
        %1054 = vmatpush.bf16.xpose.msra.mxu0 0
        %1055 = vmatpush.bf16.xpose.msra.mxu0 %v1046
        %1056 = vmatmul.bf16.gmra.mxu0 %v1043
        %v1057 = vpop.f32.mrf.mxu0
        %v1058 = vadd.f32 0.0, %v1057
        %v1059 = vpop.f32.mrf.mxu0
        %1060 = vdwg.mxu0
        %v1061 = vmul.f32 %v1058, 0.35355338
        %v1062 = vadd.f32 %v1061, %v999
        %1064 = vrot.lane.b32.xlu0 %v1062, 8
        %v1065 = vpop.permute.xlu0 %1064
        %1067 = vst.msk [vmem:[%s1002] sm:$0xff] %vm727, %v1065
        %v1068 = vsel %vm637, %v1062, -inf
        %1069 = vmax.xlane.f32.xlu0 %v1068
        %v1070 = vpop.xlane.xlu0 %1069
        %v1071 = vsub.f32 %v1062, %v1070
        %v1072 = vmul.f32 %v1071, 1.442695
        %v1073 = vpow.pop %v1072
        %v1074 = vsel %vm637, %v1073, 0.0
        %1075 = vadd.xlane.f32.xlu0 %v1074
        %v1076 = vpop.xlane.xlu0 %1075
        %v1077 = vrcp.pop %v1076
        %v1078 = vmul.f32 %v1073, %v1077
        %v1079 = vpack.c.bf16 %v1078, %v1078
        %1080 = vrot.lane.b32.xlu0 %v975, 56
        %v1081 = vpop.permute.xlu0 %1080
        %v1083 = vsel %vm637, %v1079, 0
        %v1086 = vsel %vm680, %v1081, 0
        %1088 = vmatpush.bf16.msra.mxu0 0
        %1089 = vmatpush.bf16.msra.mxu0 0
        %1090 = vmatpush.bf16.msra.mxu0 0
        %1091 = vmatpush.bf16.msra.mxu0 0
        %1092 = vmatpush.bf16.msra.mxu0 0
        %1093 = vmatpush.bf16.msra.mxu0 0
        %1094 = vmatpush.bf16.msra.mxu0 0
        %1095 = vmatpush.bf16.msra.mxu0 %v1086
        %1096 = vmatmul.bf16.gmra.mxu0 %v1083
        %v1097 = vpop.f32.mrf.mxu0
        %v1098 = vadd.f32 0.0, %v1097
        %v1099 = vpop.f32.mrf.mxu0
        %1100 = vdwg.mxu0
        %v1101 = vpack.c.bf16 %v1098, %v1098
        %v1103 = vsel %vm637, %v1101, 0
        %1105 = vmatpush.bf16.msra.mxu0 0
        %1106 = vmatpush.bf16.msra.mxu0 0
        %1107 = vmatpush.bf16.msra.mxu0 0
        %1108 = vmatpush.bf16.msra.mxu0 0
        %1109 = vmatpush.bf16.msra.mxu0 0
        %1110 = vmatpush.bf16.msra.mxu0 0
        %1111 = vmatpush.bf16.msra.mxu0 0
        %1112 = vmatpush.bf16.msra.mxu0 %v767
        %1113 = vmatmul.bf16.gmra.mxu0 %v1103
        %v1114 = vpop.f32.mrf.mxu0
        %v1115 = vadd.f32 0.0, %v1114
        %v1116 = vpop.f32.mrf.mxu0
        %1117 = vdwg.mxu0
        %v1119 = vsel %vm637, %v1037, 0
        %1121 = vmatpush.bf16.msra.mxu0 0
        %1122 = vmatpush.bf16.msra.mxu0 0
        %1123 = vmatpush.bf16.msra.mxu0 0
        %1124 = vmatpush.bf16.msra.mxu0 0
        %1125 = vmatpush.bf16.msra.mxu0 0
        %1126 = vmatpush.bf16.msra.mxu0 0
        %1127 = vmatpush.bf16.msra.mxu0 0
        %1128 = vmatpush.bf16.msra.mxu0 %v786
        %1129 = vmatmul.bf16.gmra.mxu0 %v1119
        %v1130 = vpop.f32.mrf.mxu0
        %v1131 = vadd.f32 %v1115, %v1130
        %v1132 = vpop.f32.mrf.mxu0
        %1133 = vdwg.mxu0
        %1134 = vrot.lane.b32.xlu0 %v975, 112
        %v1135 = vpop.permute.xlu0 %1134
        %1136 = vrot.lane.b32.xlu0 %v975, 80
        %v1137 = vpop.permute.xlu0 %1136
        %v1139 = vsel %vm637, %v1135, 0
        %v1142 = vsel %vm637, %v1137, 0
        %1144 = vmatpush.bf16.xpose.msra.mxu0 0
        %1145 = vmatpush.bf16.xpose.msra.mxu0 0
        %1146 = vmatpush.bf16.xpose.msra.mxu0 0
        %1147 = vmatpush.bf16.xpose.msra.mxu0 0
        %1148 = vmatpush.bf16.xpose.msra.mxu0 0
        %1149 = vmatpush.bf16.xpose.msra.mxu0 0
        %1150 = vmatpush.bf16.xpose.msra.mxu0 0
        %1151 = vmatpush.bf16.xpose.msra.mxu0 %v1142
        %1152 = vmatmul.bf16.gmra.mxu0 %v1139
        %v1153 = vpop.f32.mrf.mxu0
        %v1154 = vadd.f32 0.0, %v1153
        %v1155 = vpop.f32.mrf.mxu0
        %1156 = vdwg.mxu0
        %v1157 = vmul.f32 %v1154, 0.35355338
        %v1158 = vadd.f32 %v1157, %v999
        %1160 = vrot.lane.b32.xlu0 %v1158, 16
        %v1161 = vpop.permute.xlu0 %1160
        %1163 = vst.msk [vmem:[%s1002] sm:$0xff] %vm830, %v1161
        %v1164 = vsel %vm637, %v1158, -inf
        %1165 = vmax.xlane.f32.xlu0 %v1164
        %v1166 = vpop.xlane.xlu0 %1165
        %v1167 = vsub.f32 %v1158, %v1166
        %v1168 = vmul.f32 %v1167, 1.442695
        %v1169 = vpow.pop %v1168
        %v1170 = vsel %vm637, %v1169, 0.0
        %1171 = vadd.xlane.f32.xlu0 %v1170
        %v1172 = vpop.xlane.xlu0 %1171
        %v1173 = vrcp.pop %v1172
        %v1174 = vmul.f32 %v1169, %v1173
        %v1175 = vpack.c.bf16 %v1174, %v1174
        %1176 = vrot.lane.b32.xlu0 %v975, 48
        %v1177 = vpop.permute.xlu0 %1176
        %v1179 = vsel %vm637, %v1175, 0
        %v1182 = vsel %vm680, %v1177, 0
        %1184 = vmatpush.bf16.msra.mxu0 0
        %1185 = vmatpush.bf16.msra.mxu0 0
        %1186 = vmatpush.bf16.msra.mxu0 0
        %1187 = vmatpush.bf16.msra.mxu0 0
        %1188 = vmatpush.bf16.msra.mxu0 0
        %1189 = vmatpush.bf16.msra.mxu0 0
        %1190 = vmatpush.bf16.msra.mxu0 0
        %1191 = vmatpush.bf16.msra.mxu0 %v1182
        %1192 = vmatmul.bf16.gmra.mxu0 %v1179
        %v1193 = vpop.f32.mrf.mxu0
        %v1194 = vadd.f32 0.0, %v1193
        %v1195 = vpop.f32.mrf.mxu0
        %1196 = vdwg.mxu0
        %v1197 = vpack.c.bf16 %v1194, %v1194
        %v1199 = vsel %vm637, %v1197, 0
        %1201 = vmatpush.bf16.msra.mxu0 0
        %1202 = vmatpush.bf16.msra.mxu0 0
        %1203 = vmatpush.bf16.msra.mxu0 0
        %1204 = vmatpush.bf16.msra.mxu0 0
        %1205 = vmatpush.bf16.msra.mxu0 0
        %1206 = vmatpush.bf16.msra.mxu0 0
        %1207 = vmatpush.bf16.msra.mxu0 0
        %1208 = vmatpush.bf16.msra.mxu0 %v870
        %1209 = vmatmul.bf16.gmra.mxu0 %v1199
        %v1210 = vpop.f32.mrf.mxu0
        %v1211 = vadd.f32 0.0, %v1210
        %v1212 = vpop.f32.mrf.mxu0
        %1213 = vdwg.mxu0
        %v1214 = vadd.f32 %v1131, %v1211
        %1215 = vrot.lane.b32.xlu0 %v975, 104
        %v1216 = vpop.permute.xlu0 %1215
        %1217 = vrot.lane.b32.xlu0 %v975, 72
        %v1218 = vpop.permute.xlu0 %1217
        %v1220 = vsel %vm637, %v1216, 0
        %v1223 = vsel %vm637, %v1218, 0
        %1225 = vmatpush.bf16.xpose.msra.mxu0 0
        %1226 = vmatpush.bf16.xpose.msra.mxu0 0
        %1227 = vmatpush.bf16.xpose.msra.mxu0 0
        %1228 = vmatpush.bf16.xpose.msra.mxu0 0
        %1229 = vmatpush.bf16.xpose.msra.mxu0 0
        %1230 = vmatpush.bf16.xpose.msra.mxu0 0
        %1231 = vmatpush.bf16.xpose.msra.mxu0 0
        %1232 = vmatpush.bf16.xpose.msra.mxu0 %v1223
        %1233 = vmatmul.bf16.gmra.mxu0 %v1220
        %v1234 = vpop.f32.mrf.mxu0
        %v1235 = vadd.f32 0.0, %v1234
        %v1236 = vpop.f32.mrf.mxu0
        %1237 = vdwg.mxu0
        %v1238 = vmul.f32 %v1235, 0.35355338
        %v1239 = vadd.f32 %v1238, %v999
        %1241 = vrot.lane.b32.xlu0 %v1239, 24
        %v1242 = vpop.permute.xlu0 %1241
        %1244 = vst.msk [vmem:[%s1002] sm:$0xff] %vm915, %v1242
        %v1245 = vsel %vm637, %v1239, -inf
        %1246 = vmax.xlane.f32.xlu0 %v1245
        %v1247 = vpop.xlane.xlu0 %1246
        %v1248 = vsub.f32 %v1239, %v1247
        %v1249 = vmul.f32 %v1248, 1.442695
        %v1250 = vpow.pop %v1249
        %v1251 = vsel %vm637, %v1250, 0.0
        %1252 = vadd.xlane.f32.xlu0 %v1251
        %v1253 = vpop.xlane.xlu0 %1252
        %v1254 = vrcp.pop %v1253
        %v1255 = vmul.f32 %v1250, %v1254
        %v1256 = vpack.c.bf16 %v1255, %v1255
        %1257 = vrot.lane.b32.xlu0 %v975, 40
        %v1258 = vpop.permute.xlu0 %1257
        %v1260 = vsel %vm637, %v1256, 0
        %v1263 = vsel %vm680, %v1258, 0
        %1265 = vmatpush.bf16.msra.mxu0 0
        %1266 = vmatpush.bf16.msra.mxu0 0
        %1267 = vmatpush.bf16.msra.mxu0 0
        %1268 = vmatpush.bf16.msra.mxu0 0
        %1269 = vmatpush.bf16.msra.mxu0 0
        %1270 = vmatpush.bf16.msra.mxu0 0
        %1271 = vmatpush.bf16.msra.mxu0 0
        %1272 = vmatpush.bf16.msra.mxu0 %v1263
        %1273 = vmatmul.bf16.gmra.mxu0 %v1260
        %v1274 = vpop.f32.mrf.mxu0
        %v1275 = vadd.f32 0.0, %v1274
        %v1276 = vpop.f32.mrf.mxu0
        %1277 = vdwg.mxu0
        %v1278 = vpack.c.bf16 %v1275, %v1275
        %v1280 = vsel %vm637, %v1278, 0
        %1282 = vmatpush.bf16.msra.mxu0 0
        %1283 = vmatpush.bf16.msra.mxu0 0
        %1284 = vmatpush.bf16.msra.mxu0 0
        %1285 = vmatpush.bf16.msra.mxu0 0
        %1286 = vmatpush.bf16.msra.mxu0 0
        %1287 = vmatpush.bf16.msra.mxu0 0
        %1288 = vmatpush.bf16.msra.mxu0 0
        %1289 = vmatpush.bf16.msra.mxu0 %v955
        %1290 = vmatmul.bf16.gmra.mxu0 %v1280
        %v1291 = vpop.f32.mrf.mxu0
        %v1292 = vadd.f32 0.0, %v1291
        %v1293 = vpop.f32.mrf.mxu0
        %1294 = vdwg.mxu0
        %v1295 = vadd.f32 %v1214, %v1292
        %v1296 = vld [vmem:[%s5] sm:$0x1]
        %v1298 = vperm.slane %v1296, 0
        %v1300 = vadd.f32 %v970, %v1298
        %v1301 = vadd.f32 %v1295, %v1298
        %v1302 = vadd.f32 %v584, %v1300
        %v1303 = vadd.f32 %v585, %v1301
        %v1304 = vsel %vm607, %v1302, 0.0
        %1305 = vadd.xlane.f32.xlu0 %v1304
        %v1306 = vpop.xlane.xlu0 %1305
        %v1307 = vsel %vm607, %v1303, 0.0
        %1308 = vadd.xlane.f32.xlu0 %v1307
        %v1309 = vpop.xlane.xlu0 %1308
        %v1310 = vrcp.pop 32.0
        %v1311 = vmul.f32 32.0, %v1310
        %v1312 = vsub.f32 1.0, %v1311
        %v1313 = vmul.f32 %v1310, %v1312
        %v1314 = vadd.f32 %v1310, %v1313
        %vm1315 = vweird.f32 %v1310
        %v1316 = vsel %vm1315, %v1310, %v1314
        %v1317 = vmul.f32 %v1306, %v1316
        %v1318 = vmul.f32 %v1309, %v1316
        %v1319 = vsub.f32 %v1302, %v1317
        %v1320 = vsub.f32 %v1303, %v1318
        %v1321 = vmul.f32 %v1319, %v1319
        %v1322 = vmul.f32 %v1320, %v1320
        %v1323 = vsel %vm607, %v1321, 0.0
        %1324 = vadd.xlane.f32.xlu0 %v1323
        %v1325 = vpop.xlane.xlu0 %1324
        %v1326 = vsel %vm607, %v1322, 0.0
        %1327 = vadd.xlane.f32.xlu0 %v1326
        %v1328 = vpop.xlane.xlu0 %1327
        %v1329 = vmul.f32 %v1325, %v1316
        %v1330 = vmul.f32 %v1328, %v1316
        %v1331 = vadd.f32 %v1329, 1e-12
        %v1332 = vadd.f32 %v1330, 1e-12
        %v1333 = vrsqrt.pop %v1331
        %v1334 = vmul.f32 %v1333, %v1331
        %v1335 = vmul.f32 %v1334, %v1333
        %v1336 = vmul.f32 0.5, %v1335
        %v1337 = vsub.f32 1.5, %v1336
        %v1338 = vmul.f32 %v1333, %v1337
        %vm1339 = vweird.f32 %v1331
        %vm1340 = vweird.f32 %v1333
        %vm1341 = vmor %vm1339, %vm1340
        %v1342 = vsel %vm1341, %v1333, %v1338
        %v1343 = vrsqrt.pop %v1332
        %v1344 = vmul.f32 %v1343, %v1332
        %v1345 = vmul.f32 %v1344, %v1343
        %v1346 = vmul.f32 0.5, %v1345
        %v1347 = vsub.f32 1.5, %v1346
        %v1348 = vmul.f32 %v1343, %v1347
        %vm1349 = vweird.f32 %v1332
        %vm1350 = vweird.f32 %v1343
        %vm1351 = vmor %vm1349, %vm1350
        %v1352 = vsel %vm1351, %v1343, %v1348
        %v1353 = vmul.f32 %v1319, %v1342
        %v1354 = vmul.f32 %v1320, %v1352
        %v1355 = vld [vmem:[%s10] sm:$0x1]
        %v1357 = vperm.slane %v1355, 0
        %v1359 = vmul.f32 %v1353, %v1357
        %v1360 = vmul.f32 %v1354, %v1357
        %v1361 = vld [vmem:[%s11] sm:$0x1]
        %v1363 = vperm.slane %v1361, 0
        %v1365 = vadd.f32 %v1359, %v1363
        %v1366 = vadd.f32 %v1360, %v1363
        %v1367 = vpack.c.bf16 %v1366, %v1365
        %v1368 = vld [vmem:[#allocation7] sm:$0xf]
        %v1369 = vld [vmem:[#allocation7 + $0x4] sm:$0xf]
        %v1370 = vld [vmem:[#allocation7 + $0x8] sm:$0xf]
        %v1371 = vld [vmem:[#allocation7 + $0xc] sm:$0xf]
        %v1372 = vld [vmem:[%s7] sm:$0x1]
        %v1374 = vperm.slane %v1372, 0
        %v1380 = vunpack.c.l.b16 %v1368
        %v1381 = vunpack.c.l.b16 %v1369
        %v1382 = vunpack.c.l.b16 %v1370
        %v1383 = vunpack.c.l.b16 %v1371
        %v1384 = vpack.c.b16 %v1381, %v1380
        %v1385 = vpack.c.b16 %v1383, %v1382
        %v1389 = vsel %vm607, %v1367, 0
        %1391 = vmatpush.bf16.msra.mxu0 0
        %1392 = vmatpush.bf16.msra.mxu0 0
        %1393 = vmatpush.bf16.msra.mxu0 0
        %1394 = vmatpush.bf16.msra.mxu0 0
        %1395 = vmatpush.bf16.msra.mxu0 0
        %1396 = vmatpush.bf16.msra.mxu0 0
        %1397 = vmatpush.bf16.msra.mxu0 %v1385
        %1398 = vmatpush.bf16.msra.mxu0 %v1384
        %1399 = vmatmul.bf16.gmra.mxu0 %v1389
        %v1400 = vpop.f32.mrf.mxu0
        %v1401 = vadd.f32 %v1374, %v1400
        %v1402 = vpop.f32.mrf.mxu0
        %v1403 = vadd.f32 %v1374, %v1402
        %1404 = vdwg.mxu0
        %v1405 = vmax.f32 %v1401, 0.0
        %v1406 = vmax.f32 %v1403, 0.0
        %v1407 = vpack.c.bf16 %v1406, %v1405
        %v1408 = vld [vmem:[%s8] sm:$0xf]
        %v1409 = vld [vmem:[%s8 + $0x4] sm:$0xf]
        %v1410 = vld [vmem:[%s8 + $0x8] sm:$0xf]
        %v1411 = vld [vmem:[%s8 + $0xc] sm:$0xf]
        %v1412 = vld [vmem:[%s8 + $0x10] sm:$0xf]
        %v1413 = vld [vmem:[%s8 + $0x14] sm:$0xf]
        %v1414 = vld [vmem:[%s8 + $0x18] sm:$0xf]
        %v1415 = vld [vmem:[%s8 + $0x1c] sm:$0xf]
        %v1416 = vld [vmem:[%s9] sm:$0x1]
        %v1418 = vperm.slane %v1416, 0
        %v1428 = vunpack.c.l.b16 %v1408
        %v1429 = vunpack.c.l.b16 %v1409
        %v1430 = vunpack.c.l.b16 %v1410
        %v1431 = vunpack.c.l.b16 %v1411
        %v1432 = vunpack.c.l.b16 %v1412
        %v1433 = vunpack.c.l.b16 %v1413
        %v1434 = vunpack.c.l.b16 %v1414
        %v1435 = vunpack.c.l.b16 %v1415
        %v1436 = vpack.c.b16 %v1429, %v1428
        %v1437 = vpack.c.b16 %v1431, %v1430
        %v1438 = vpack.c.b16 %v1433, %v1432
        %v1439 = vpack.c.b16 %v1435, %v1434
        %vm1444 = vcmask 523264
        %v1446 = vsel %vm1444, %v1407, 0
        %1448 = vmatpush.bf16.msra.mxu0 0
        %1449 = vmatpush.bf16.msra.mxu0 0
        %1450 = vmatpush.bf16.msra.mxu0 0
        %1451 = vmatpush.bf16.msra.mxu0 0
        %1452 = vmatpush.bf16.msra.mxu0 %v1439
        %1453 = vmatpush.bf16.msra.mxu0 %v1438
        %1454 = vmatpush.bf16.msra.mxu0 %v1437
        %1455 = vmatpush.bf16.msra.mxu0 %v1436
        %1456 = vmatmul.bf16.gmra.mxu0 %v1446
        %v1457 = vpop.f32.mrf.mxu0
        %v1458 = vadd.f32 %v1418, %v1457
        %v1459 = vpop.f32.mrf.mxu0
        %v1460 = vadd.f32 %v1418, %v1459
        %1461 = vdwg.mxu0
        %v1462 = vadd.f32 %v1365, %v1458
        %v1463 = vadd.f32 %v1366, %v1460
        %v1464 = vsel %vm607, %v1462, 0.0
        %1465 = vadd.xlane.f32.xlu0 %v1464
        %v1466 = vpop.xlane.xlu0 %1465
        %v1467 = vsel %vm607, %v1463, 0.0
        %1468 = vadd.xlane.f32.xlu0 %v1467
        %v1469 = vpop.xlane.xlu0 %1468
        %v1470 = vmul.f32 %v1466, %v1316
        %v1471 = vmul.f32 %v1469, %v1316
        %v1472 = vsub.f32 %v1462, %v1470
        %v1473 = vsub.f32 %v1463, %v1471
        %v1474 = vmul.f32 %v1472, %v1472
        %v1475 = vmul.f32 %v1473, %v1473
        %v1476 = vsel %vm607, %v1474, 0.0
        %1477 = vadd.xlane.f32.xlu0 %v1476
        %v1478 = vpop.xlane.xlu0 %1477
        %v1479 = vsel %vm607, %v1475, 0.0
        %1480 = vadd.xlane.f32.xlu0 %v1479
        %v1481 = vpop.xlane.xlu0 %1480
        %v1482 = vmul.f32 %v1478, %v1316
        %v1483 = vmul.f32 %v1481, %v1316
        %v1484 = vadd.f32 %v1482, 1e-12
        %v1485 = vadd.f32 %v1483, 1e-12
        %v1486 = vrsqrt.pop %v1484
        %v1487 = vmul.f32 %v1486, %v1484
        %v1488 = vmul.f32 %v1487, %v1486
        %v1489 = vmul.f32 0.5, %v1488
        %v1490 = vsub.f32 1.5, %v1489
        %v1491 = vmul.f32 %v1486, %v1490
        %vm1492 = vweird.f32 %v1484
        %vm1493 = vweird.f32 %v1486
        %vm1494 = vmor %vm1492, %vm1493
        %v1495 = vsel %vm1494, %v1486, %v1491
        %v1496 = vrsqrt.pop %v1485
        %v1497 = vmul.f32 %v1496, %v1485
        %v1498 = vmul.f32 %v1497, %v1496
        %v1499 = vmul.f32 0.5, %v1498
        %v1500 = vsub.f32 1.5, %v1499
        %v1501 = vmul.f32 %v1496, %v1500
        %vm1502 = vweird.f32 %v1485
        %vm1503 = vweird.f32 %v1496
        %vm1504 = vmor %vm1502, %vm1503
        %v1505 = vsel %vm1504, %v1496, %v1501
        %v1506 = vmul.f32 %v1472, %v1495
        %v1507 = vmul.f32 %v1473, %v1505
        %v1508 = vld [vmem:[%s12] sm:$0x1]
        %v1510 = vperm.slane %v1508, 0
        %v1512 = vmul.f32 %v1506, %v1510
        %v1513 = vmul.f32 %v1507, %v1510
        %v1514 = vld [vmem:[%s13] sm:$0x1]
        %v1516 = vperm.slane %v1514, 0
        %v1518 = vadd.f32 %v1512, %v1516
        %v1519 = vadd.f32 %v1513, %v1516
        %1520 = vst.msk [vmem:[%s566] sm:$0xff] %vm607, %v1518
        %1521 = vst.msk [vmem:[%s566 + $0x8] sm:$0xff] %vm607, %v1519
        %s1522 = sand.u32 %s349, 1
        %s1523 = scalar_lea.sflag [#allocation4], %s1522
        %s1524 = sand.u32 %s349, 1
        %s1525 = smul.addr %s1524, 16
        %s1526 = scalar_lea.vmem [#allocation8], %s1525
        %s1527 = sand.u32 %s375, 1
        %s1528 = scalar_lea.sflag [#allocation10], %s1527
        %s1529 = sand.u32 %s375, 1
        %s1530 = smul.addr %s1529, 16
        %s1531 = scalar_lea.vmem [#allocation9], %s1530
        // Predicated region
        $region89: #{tpu_custom_call.1} parent=75 // pred_check
          %p1532 = pneg %p359
        $region90: #{tpu_custom_call.1} parent=75 // pred_check_branch
          %1534 = sbr.rel (%p1532) target = $region92
        $region91: #{tpu_custom_call.1} parent=75 // pred_region
          %s1535 = smul.u32 2, %s37
          %1537 = vsyncadd %s1523, 0
          %s1538 = smul.addr %s1535, 8
          %s1539 = scalar_lea.hbm %s14, %s1538
          %s1540 = sshll.u32 %s1526, 4
          %s1541 = int_to_ptr.vmem [resolvable:$true] %s1540
          %s1542 = sshll.u32 %s1539, 4
          %s1543 = int_to_ptr.hbm [resolvable:$true] %s1542
          %1548 = dma.vmem_to_hbm [thread:$0]  %s1541, 256, %s1543, %s1523, 128, 128, 8
        $region92: #{tpu_custom_call.1} parent=75 // pred_fallthru
          _
        // Predicated region
        $region93: #{tpu_custom_call.1} parent=75 // pred_check
          %p1549 = pneg %p385
        $region94: #{tpu_custom_call.1} parent=75 // pred_check_branch
          %1551 = sbr.rel (%p1549) target = $region96
        $region95: #{tpu_custom_call.1} parent=75 // pred_region
          %s1552 = smul.u32 2, %s37
          %1554 = vsyncadd %s1528, 0
          %s1555 = smul.addr %s1552, 8
          %s1556 = scalar_lea.hbm %s15, %s1555
          %s1557 = sshll.u32 %s1531, 4
          %s1558 = int_to_ptr.vmem [resolvable:$true] %s1557
          %s1559 = sshll.u32 %s1556, 4
          %s1560 = int_to_ptr.hbm [resolvable:$true] %s1559
          %1565 = dma.vmem_to_hbm [thread:$0]  %s1558, 256, %s1560, %s1528, 128, 128, 8
        $region96: #{tpu_custom_call.1} parent=75 // pred_fallthru
          _
      $region76: #{tpu_custom_call.1} parent=5 // pred_fallthru
        _
      %p1566 = scmp.le.s32.totalorder 2, %s32
      // Predicated region
      $region97: #{tpu_custom_call.1} parent=5 // pred_check
        %p1567 = pneg %p1566
      $region98: #{tpu_custom_call.1} parent=5 // pred_check_branch
        %1569 = sbr.rel (%p1567) target = $region100
      $region99: #{tpu_custom_call.1} parent=5 // pred_region
        %s1570 = ssub.s32 %s32, 2
        // Predicated region
        $region101: #{tpu_custom_call.1} parent=99 // pred_check
          %p1571 = pneg %p365
        $region102: #{tpu_custom_call.1} parent=99 // pred_check_branch
          %1573 = sbr.rel (%p1571) target = $region104
        $region103: #{tpu_custom_call.1} parent=99 // pred_region
          %s1574 = sand.u32 %s350, 1
          %s1575 = scalar_lea.sflag [#allocation4], %s1574
          %s1576 = sand.u32 %s350, 1
          %s1577 = smul.addr %s1576, 16
          %s1578 = scalar_lea.vmem [#allocation8], %s1577
          %1580 = dma.done %s1575, 256
        $region104: #{tpu_custom_call.1} parent=99 // pred_fallthru
          _
        // Predicated region
        $region105: #{tpu_custom_call.1} parent=99 // pred_check
          %p1581 = pneg %p391
        $region106: #{tpu_custom_call.1} parent=99 // pred_check_branch
          %1583 = sbr.rel (%p1581) target = $region108
        $region107: #{tpu_custom_call.1} parent=99 // pred_region
          %s1584 = sand.u32 %s376, 1
          %s1585 = scalar_lea.sflag [#allocation10], %s1584
          %s1586 = sand.u32 %s376, 1
          %s1587 = smul.addr %s1586, 16
          %s1588 = scalar_lea.vmem [#allocation9], %s1587
          %1590 = dma.done %s1585, 256
        $region108: #{tpu_custom_call.1} parent=99 // pred_fallthru
          _
      $region100: #{tpu_custom_call.1} parent=5 // pred_fallthru
        _
    $region6: #{tpu_custom_call.1} parent=1 // loop_footer
      %s36 = sadd.s32 1, %s32
    $region7: #{tpu_custom_call.1} parent=1 // loop_footer_branch
      %31 = sbr.rel target = $region3
    $region8: #{tpu_custom_call.1} parent=1 // loop_exit
      _
    %1591 = vsyncpa [#allocation3], 1
    %s1592 = scalar_lea.sflag [#allocation3], 1
    %1593 = vsyncpa %s1592, 1
    %1594 = vsyncpa [#allocation6], 1
    %1595 = vsyncpa [#allocation4], 1
    %s1596 = scalar_lea.sflag [#allocation4], 1
    %1597 = vsyncpa %s1596, 1
    %1598 = vsyncpa [#allocation10], 1
    %s1599 = scalar_lea.sflag [#allocation10], 1
    %1600 = vsyncpa %s1599, 1

// kernel: tpu_custom_call.1
$region0: #{tpu_custom_call.1}
  #allocation0 [shape = 'u32[]', space=smem, size = 0x4, offset = 0x4, fixed_abs, tag = 'smem constant byte address 0x4 - core index']
  #allocation1 [shape = 'u32[72,128]{1,0:T(1,128)}', space=vmem, size = 0x9000, scoped, tag = 'internal scratch']
  %s0 = inlined_call_operand.vmem [shape: f32[4,8,32], index: 0, kind: input, shape index: {}]
  %s1 = inlined_call_operand.hbm [shape: f32[4,1,8], index: 1, kind: input, shape index: {}]
  %s2 = inlined_call_operand.vmem [shape: bf16[32,96], index: 2, kind: input, shape index: {}]
  %s3 = inlined_call_operand.vmem [shape: f32[1,96], index: 3, kind: input, shape index: {}]
  %s4 = inlined_call_operand.hbm [shape: bf16[32,32], index: 4, kind: input, shape index: {}]
  %s5 = inlined_call_operand.vmem [shape: f32[1,32], index: 5, kind: input, shape index: {}]
  %s6 = inlined_call_operand.hbm [shape: bf16[32,64], index: 6, kind: input, shape index: {}]
  %s7 = inlined_call_operand.vmem [shape: f32[1,64], index: 7, kind: input, shape index: {}]
  %s8 = inlined_call_operand.vmem [shape: bf16[64,32], index: 8, kind: input, shape index: {}]
  %s9 = inlined_call_operand.vmem [shape: f32[1,32], index: 9, kind: input, shape index: {}]
  %s10 = inlined_call_operand.vmem [shape: f32[1,32], index: 10, kind: input, shape index: {}]
  %s11 = inlined_call_operand.vmem [shape: f32[1,32], index: 11, kind: input, shape index: {}]
  %s12 = inlined_call_operand.vmem [shape: f32[1,32], index: 12, kind: input, shape index: {}]
  %s13 = inlined_call_operand.vmem [shape: f32[1,32], index: 13, kind: input, shape index: {}]
  %s14 = inlined_call_operand.hbm [shape: f32[4,8,32], index: 14, kind: output, shape index: {0}]
  %s15 = inlined_call_operand.hbm [shape: f32[4,8,32], index: 15, kind: output, shape index: {1}]
  %16 = xla_tuple %s14, %s15
  %s17 = sld [smem:[#allocation0]]
  $region109: #{tpu_custom_call.1} parent=0
    _
  %s19 = ssub.s32 1, %s17
  %s20 = scalar_select 0, %s19, %s17
  $region1: #{tpu_custom_call.1} parent=0
    #allocation2 [shape = 'u8[2048]{0}', space=vmem, size = 0x800, scoped, tag = 'input window, operand 1']
    #allocation3 [shape = 's32[2]{0}', space=sflag, size = 0x8, scoped, tag = 'scoped memory for tpu_custom_call.1']
    #allocation4 [shape = 's32[2]{0}', space=sflag, size = 0x8, scoped, tag = 'scoped memory for tpu_custom_call.1']
    #allocation5 [shape = 'u8[8192]{0}', space=vmem, size = 0x2000, scoped, tag = 'input window, operand 4, single buffered']
    #allocation6 [shape = 's32[1]{0}', space=sflag, size = 0x4, scoped, tag = 'scoped memory for tpu_custom_call.1']
    #allocation7 [shape = 'u8[8192]{0}', space=vmem, size = 0x2000, scoped, tag = 'input window, operand 6, single buffered']
    #allocation8 [shape = 'u8[16384]{0}', space=vmem, size = 0x4000, scoped, tag = 'output window, operand 0']
    #allocation9 [shape = 'u8[16384]{0}', space=vmem, size = 0x4000, scoped, tag = 'output window, operand 1']
    #allocation10 [shape = 's32[2]{0}', space=sflag, size = 0x8, scoped, tag = 'scoped memory for tpu_custom_call.1']
    %21 = vsyncpa [#allocation3], 0
    %s22 = scalar_lea.sflag [#allocation3], 1
    %23 = vsyncpa %s22, 0
    %24 = vsyncpa [#allocation6], 0
    %25 = vsyncpa [#allocation4], 0
    %s26 = scalar_lea.sflag [#allocation4], 1
    %27 = vsyncpa %s26, 0
    %28 = vsyncpa [#allocation10], 0
    %s29 = scalar_lea.sflag [#allocation10], 1
    %30 = vsyncpa %s29, 0
    loop: start=0, step=1, limit=4
    $region2: #{tpu_custom_call.1} parent=1 // loop_pre_header
      _
    $region3: #{tpu_custom_call.1} parent=1 // loop_header
      %s32 = sphi 0, %s36
      %p33 = scmp.ge.s32.totalorder %s32, 4
      %s42 = sphi 0, %s44
      %s45 = sphi 0, %s42
      %s46 = sphi 0, %s45
      %s62 = sphi 0, %s46
      %s68 = sphi 0, %s70
      %s71 = sphi 0, %s68
      %s72 = sphi 0, %s71
      %s88 = sphi 0, %s72
      %s92 = sphi 0, %s92
      %s94 = sphi 0, %s92
      %s95 = sphi 0, %s94
      %s109 = sphi 0, %s95
      %s113 = sphi 0, %s113
      %s115 = sphi 0, %s113
      %s116 = sphi 0, %s115
      %s130 = sphi 0, %s116
      %s134 = sphi 0, %s134
      %s136 = sphi 0, %s134
      %s137 = sphi 0, %s136
      %s151 = sphi 0, %s137
      %s155 = sphi 0, %s155
      %s157 = sphi 0, %s155
      %s158 = sphi 0, %s157
      %s172 = sphi 0, %s158
      %s176 = sphi 0, %s176
      %s178 = sphi 0, %s176
      %s179 = sphi 0, %s178
      %s193 = sphi 0, %s179
      %s197 = sphi 0, %s197
      %s199 = sphi 0, %s197
      %s200 = sphi 0, %s199
      %s214 = sphi 0, %s200
      %s218 = sphi 0, %s218
      %s220 = sphi 0, %s218
      %s221 = sphi 0, %s220
      %s235 = sphi 0, %s221
      %s239 = sphi 0, %s239
      %s241 = sphi 0, %s239
      %s242 = sphi 0, %s241
      %s256 = sphi 0, %s242
      %s260 = sphi 0, %s260
      %s262 = sphi 0, %s260
      %s263 = sphi 0, %s262
      %s277 = sphi 0, %s263
      %s281 = sphi 0, %s281
      %s283 = sphi 0, %s281
      %s284 = sphi 0, %s283
      %s298 = sphi 0, %s284
      %s302 = sphi 0, %s302
      %s304 = sphi 0, %s302
      %s305 = sphi 0, %s304
      %s319 = sphi 0, %s305
      %s323 = sphi 0, %s323
      %s325 = sphi 0, %s323
      %s326 = sphi 0, %s325
      %s340 = sphi 0, %s326
      %s346 = sphi 0, %s348
      %s349 = sphi 0, %s346
      %s350 = sphi 0, %s349
      %s366 = sphi 0, %s350
      %s372 = sphi 0, %s374
      %s375 = sphi 0, %s372
      %s376 = sphi 0, %s375
      %s392 = sphi 0, %s376
    $region4: #{tpu_custom_call.1} parent=1 // loop_header_branch
      %35 = sbr.rel (%p33) target = $region8
    $region5: #{tpu_custom_call.1} parent=1 // loop_body
      %s37 = ssub.s32 %s32, 1
      %s38 = ssub.s32 %s32, 2
      %s39 = sadd.s32 %s32, 1
      %s40 = ssub.s32 %s32, %s39
      %p41 = scmp.eq.s32.totalorder %s40, 0
      %s43 = sadd.s32 %s42, 1
      %s44 = scalar_select %p41, %s42, %s43
      %p47 = pneg %p41
      %p48 = scmp.eq.s32.totalorder %s32, 1
      %p49 = por %p47, %p48
      %p50 = scmp.ne.s32.totalorder %s42, %s45
      %p51 = scmp.eq.s32.totalorder %s32, 0
      %p52 = por %p50, %p51
      %p53 = scmp.ne.s32.totalorder %s42, %s45
      %p54 = scmp.eq.s32.totalorder %s37, 1
      %p55 = por %p53, %p54
      %p56 = scmp.ne.s32.totalorder %s45, %s46
      %p57 = scmp.eq.s32.totalorder %s37, 0
      %p58 = por %p56, %p57
      %p59 = scmp.ne.s32.totalorder %s45, %s46
      %p60 = scmp.eq.s32.totalorder %s38, 1
      %p61 = por %p59, %p60
      %p63 = scmp.ne.s32.totalorder %s46, %s62
      %p64 = scmp.eq.s32.totalorder %s38, 0
      %p65 = por %p63, %p64
      %s66 = ssub.s32 %s32, %s39
      %p67 = scmp.eq.s32.totalorder %s66, 0
      %s69 = sadd.s32 %s68, 1
      %s70 = scalar_select %p67, %s68, %s69
      %p73 = pneg %p67
      %p74 = scmp.eq.s32.totalorder %s32, 1
      %p75 = por %p73, %p74
      %p76 = scmp.ne.s32.totalorder %s68, %s71
      %p77 = scmp.eq.s32.totalorder %s32, 0
      %p78 = por %p76, %p77
      %p79 = scmp.ne.s32.totalorder %s68, %s71
      %p80 = scmp.eq.s32.totalorder %s37, 1
      %p81 = por %p79, %p80
      %p82 = scmp.ne.s32.totalorder %s71, %s72
      %p83 = scmp.eq.s32.totalorder %s37, 0
      %p84 = por %p82, %p83
      %p85 = scmp.ne.s32.totalorder %s71, %s72
      %p86 = scmp.eq.s32.totalorder %s38, 1
      %p87 = por %p85, %p86
      %p89 = scmp.ne.s32.totalorder %s72, %s88
      %p90 = scmp.eq.s32.totalorder %s38, 0
      %p91 = por %p89, %p90
      %s93 = sadd.s32 %s92, 1
      %p96 = scmp.eq.s32.totalorder %s32, 1
      %p97 = scmp.ne.s32.totalorder %s92, %s94
      %p98 = scmp.eq.s32.totalorder %s32, 0
      %p99 = por %p97, %p98
      %p100 = scmp.ne.s32.totalorder %s92, %s94
      %p101 = scmp.eq.s32.totalorder %s37, 1
      %p102 = por %p100, %p101
      %p103 = scmp.ne.s32.totalorder %s94, %s95
      %p104 = scmp.eq.s32.totalorder %s37, 0
      %p105 = por %p103, %p104
      %p106 = scmp.ne.s32.totalorder %s94, %s95
      %p107 = scmp.eq.s32.totalorder %s38, 1
      %p108 = por %p106, %p107
      %p110 = scmp.ne.s32.totalorder %s95, %s109
      %p111 = scmp.eq.s32.totalorder %s38, 0
      %p112 = por %p110, %p111
      %s114 = sadd.s32 %s113, 1
      %p117 = scmp.eq.s32.totalorder %s32, 1
      %p118 = scmp.ne.s32.totalorder %s113, %s115
      %p119 = scmp.eq.s32.totalorder %s32, 0
      %p120 = por %p118, %p119
      %p121 = scmp.ne.s32.totalorder %s113, %s115
      %p122 = scmp.eq.s32.totalorder %s37, 1
      %p123 = por %p121, %p122
      %p124 = scmp.ne.s32.totalorder %s115, %s116
      %p125 = scmp.eq.s32.totalorder %s37, 0
      %p126 = por %p124, %p125
      %p127 = scmp.ne.s32.totalorder %s115, %s116
      %p128 = scmp.eq.s32.totalorder %s38, 1
      %p129 = por %p127, %p128
      %p131 = scmp.ne.s32.totalorder %s116, %s130
      %p132 = scmp.eq.s32.totalorder %s38, 0
      %p133 = por %p131, %p132
      %s135 = sadd.s32 %s134, 1
      %p138 = scmp.eq.s32.totalorder %s32, 1
      %p139 = scmp.ne.s32.totalorder %s134, %s136
      %p140 = scmp.eq.s32.totalorder %s32, 0
      %p141 = por %p139, %p140
      %p142 = scmp.ne.s32.totalorder %s134, %s136
      %p143 = scmp.eq.s32.totalorder %s37, 1
      %p144 = por %p142, %p143
      %p145 = scmp.ne.s32.totalorder %s136, %s137
      %p146 = scmp.eq.s32.totalorder %s37, 0
      %p147 = por %p145, %p146
      %p148 = scmp.ne.s32.totalorder %s136, %s137
      %p149 = scmp.eq.s32.totalorder %s38, 1
      %p150 = por %p148, %p149
      %p152 = scmp.ne.s32.totalorder %s137, %s151
      %p153 = scmp.eq.s32.totalorder %s38, 0
      %p154 = por %p152, %p153
      %s156 = sadd.s32 %s155, 1
      %p159 = scmp.eq.s32.totalorder %s32, 1
      %p160 = scmp.ne.s32.totalorder %s155, %s157
      %p161 = scmp.eq.s32.totalorder %s32, 0
      %p162 = por %p160, %p161
      %p163 = scmp.ne.s32.totalorder %s155, %s157
      %p164 = scmp.eq.s32.totalorder %s37, 1
      %p165 = por %p163, %p164
      %p166 = scmp.ne.s32.totalorder %s157, %s158
      %p167 = scmp.eq.s32.totalorder %s37, 0
      %p168 = por %p166, %p167
      %p169 = scmp.ne.s32.totalorder %s157, %s158
      %p170 = scmp.eq.s32.totalorder %s38, 1
      %p171 = por %p169, %p170
      %p173 = scmp.ne.s32.totalorder %s158, %s172
      %p174 = scmp.eq.s32.totalorder %s38, 0
      %p175 = por %p173, %p174
      %s177 = sadd.s32 %s176, 1
      %p180 = scmp.eq.s32.totalorder %s32, 1
      %p181 = scmp.ne.s32.totalorder %s176, %s178
      %p182 = scmp.eq.s32.totalorder %s32, 0
      %p183 = por %p181, %p182
      %p184 = scmp.ne.s32.totalorder %s176, %s178
      %p185 = scmp.eq.s32.totalorder %s37, 1
      %p186 = por %p184, %p185
      %p187 = scmp.ne.s32.totalorder %s178, %s179
      %p188 = scmp.eq.s32.totalorder %s37, 0
      %p189 = por %p187, %p188
      %p190 = scmp.ne.s32.totalorder %s178, %s179
      %p191 = scmp.eq.s32.totalorder %s38, 1
      %p192 = por %p190, %p191
      %p194 = scmp.ne.s32.totalorder %s179, %s193
      %p195 = scmp.eq.s32.totalorder %s38, 0
      %p196 = por %p194, %p195
      %s198 = sadd.s32 %s197, 1
      %p201 = scmp.eq.s32.totalorder %s32, 1
      %p202 = scmp.ne.s32.totalorder %s197, %s199
      %p203 = scmp.eq.s32.totalorder %s32, 0
      %p204 = por %p202, %p203
      %p205 = scmp.ne.s32.totalorder %s197, %s199
      %p206 = scmp.eq.s32.totalorder %s37, 1
      %p207 = por %p205, %p206
      %p208 = scmp.ne.s32.totalorder %s199, %s200
      %p209 = scmp.eq.s32.totalorder %s37, 0
      %p210 = por %p208, %p209
      %p211 = scmp.ne.s32.totalorder %s199, %s200
      %p212 = scmp.eq.s32.totalorder %s38, 1
      %p213 = por %p211, %p212
      %p215 = scmp.ne.s32.totalorder %s200, %s214
      %p216 = scmp.eq.s32.totalorder %s38, 0
      %p217 = por %p215, %p216
      %s219 = sadd.s32 %s218, 1
      %p222 = scmp.eq.s32.totalorder %s32, 1
      %p223 = scmp.ne.s32.totalorder %s218, %s220
      %p224 = scmp.eq.s32.totalorder %s32, 0
      %p225 = por %p223, %p224
      %p226 = scmp.ne.s32.totalorder %s218, %s220
      %p227 = scmp.eq.s32.totalorder %s37, 1
      %p228 = por %p226, %p227
      %p229 = scmp.ne.s32.totalorder %s220, %s221
      %p230 = scmp.eq.s32.totalorder %s37, 0
      %p231 = por %p229, %p230
      %p232 = scmp.ne.s32.totalorder %s220, %s221
      %p233 = scmp.eq.s32.totalorder %s38, 1
      %p234 = por %p232, %p233
      %p236 = scmp.ne.s32.totalorder %s221, %s235
      %p237 = scmp.eq.s32.totalorder %s38, 0
      %p238 = por %p236, %p237
      %s240 = sadd.s32 %s239, 1
      %p243 = scmp.eq.s32.totalorder %s32, 1
      %p244 = scmp.ne.s32.totalorder %s239, %s241
      %p245 = scmp.eq.s32.totalorder %s32, 0
      %p246 = por %p244, %p245
      %p247 = scmp.ne.s32.totalorder %s239, %s241
      %p248 = scmp.eq.s32.totalorder %s37, 1
      %p249 = por %p247, %p248
      %p250 = scmp.ne.s32.totalorder %s241, %s242
      %p251 = scmp.eq.s32.totalorder %s37, 0
      %p252 = por %p250, %p251
      %p253 = scmp.ne.s32.totalorder %s241, %s242
      %p254 = scmp.eq.s32.totalorder %s38, 1
      %p255 = por %p253, %p254
      %p257 = scmp.ne.s32.totalorder %s242, %s256
      %p258 = scmp.eq.s32.totalorder %s38, 0
      %p259 = por %p257, %p258
      %s261 = sadd.s32 %s260, 1
      %p264 = scmp.eq.s32.totalorder %s32, 1
      %p265 = scmp.ne.s32.totalorder %s260, %s262
      %p266 = scmp.eq.s32.totalorder %s32, 0
      %p267 = por %p265, %p266
      %p268 = scmp.ne.s32.totalorder %s260, %s262
      %p269 = scmp.eq.s32.totalorder %s37, 1
      %p270 = por %p268, %p269
      %p271 = scmp.ne.s32.totalorder %s262, %s263
      %p272 = scmp.eq.s32.totalorder %s37, 0
      %p273 = por %p271, %p272
      %p274 = scmp.ne.s32.totalorder %s262, %s263
      %p275 = scmp.eq.s32.totalorder %s38, 1
      %p276 = por %p274, %p275
      %p278 = scmp.ne.s32.totalorder %s263, %s277
      %p279 = scmp.eq.s32.totalorder %s38, 0
      %p280 = por %p278, %p279
      %s282 = sadd.s32 %s281, 1
      %p285 = scmp.eq.s32.totalorder %s32, 1
      %p286 = scmp.ne.s32.totalorder %s281, %s283
      %p287 = scmp.eq.s32.totalorder %s32, 0
      %p288 = por %p286, %p287
      %p289 = scmp.ne.s32.totalorder %s281, %s283
      %p290 = scmp.eq.s32.totalorder %s37, 1
      %p291 = por %p289, %p290
      %p292 = scmp.ne.s32.totalorder %s283, %s284
      %p293 = scmp.eq.s32.totalorder %s37, 0
      %p294 = por %p292, %p293
      %p295 = scmp.ne.s32.totalorder %s283, %s284
      %p296 = scmp.eq.s32.totalorder %s38, 1
      %p297 = por %p295, %p296
      %p299 = scmp.ne.s32.totalorder %s284, %s298
      %p300 = scmp.eq.s32.totalorder %s38, 0
      %p301 = por %p299, %p300
      %s303 = sadd.s32 %s302, 1
      %p306 = scmp.eq.s32.totalorder %s32, 1
      %p307 = scmp.ne.s32.totalorder %s302, %s304
      %p308 = scmp.eq.s32.totalorder %s32, 0
      %p309 = por %p307, %p308
      %p310 = scmp.ne.s32.totalorder %s302, %s304
      %p311 = scmp.eq.s32.totalorder %s37, 1
      %p312 = por %p310, %p311
      %p313 = scmp.ne.s32.totalorder %s304, %s305
      %p314 = scmp.eq.s32.totalorder %s37, 0
      %p315 = por %p313, %p314
      %p316 = scmp.ne.s32.totalorder %s304, %s305
      %p317 = scmp.eq.s32.totalorder %s38, 1
      %p318 = por %p316, %p317
      %p320 = scmp.ne.s32.totalorder %s305, %s319
      %p321 = scmp.eq.s32.totalorder %s38, 0
      %p322 = por %p320, %p321
      %s324 = sadd.s32 %s323, 1
      %p327 = scmp.eq.s32.totalorder %s32, 1
      %p328 = scmp.ne.s32.totalorder %s323, %s325
      %p329 = scmp.eq.s32.totalorder %s32, 0
      %p330 = por %p328, %p329
      %p331 = scmp.ne.s32.totalorder %s323, %s325
      %p332 = scmp.eq.s32.totalorder %s37, 1
      %p333 = por %p331, %p332
      %p334 = scmp.ne.s32.totalorder %s325, %s326
      %p335 = scmp.eq.s32.totalorder %s37, 0
      %p336 = por %p334, %p335
      %p337 = scmp.ne.s32.totalorder %s325, %s326
      %p338 = scmp.eq.s32.totalorder %s38, 1
      %p339 = por %p337, %p338
      %p341 = scmp.ne.s32.totalorder %s326, %s340
      %p342 = scmp.eq.s32.totalorder %s38, 0
      %p343 = por %p341, %p342
      %s344 = ssub.s32 %s32, %s39
      %p345 = scmp.eq.s32.totalorder %s344, 0
      %s347 = sadd.s32 %s346, 1
      %s348 = scalar_select %p345, %s346, %s347
      %p351 = pneg %p345
      %p352 = scmp.eq.s32.totalorder %s32, 1
      %p353 = por %p351, %p352
      %p354 = scmp.ne.s32.totalorder %s346, %s349
      %p355 = scmp.eq.s32.totalorder %s32, 0
      %p356 = por %p354, %p355
      %p357 = scmp.ne.s32.totalorder %s346, %s349
      %p358 = scmp.eq.s32.totalorder %s37, 1
      %p359 = por %p357, %p358
      %p360 = scmp.ne.s32.totalorder %s349, %s350
      %p361 = scmp.eq.s32.totalorder %s37, 0
      %p362 = por %p360, %p361
      %p363 = scmp.ne.s32.totalorder %s349, %s350
      %p364 = scmp.eq.s32.totalorder %s38, 1
      %p365 = por %p363, %p364
      %p367 = scmp.ne.s32.totalorder %s350, %s366
      %p368 = scmp.eq.s32.totalorder %s38, 0
      %p369 = por %p367, %p368
      %s370 = ssub.s32 %s32, %s39
      %p371 = scmp.eq.s32.totalorder %s370, 0
      %s373 = sadd.s32 %s372, 1
      %s374 = scalar_select %p371, %s372, %s373
      %p377 = pneg %p371
      %p378 = scmp.eq.s32.totalorder %s32, 1
      %p379 = por %p377, %p378
      %p380 = scmp.ne.s32.totalorder %s372, %s375
      %p381 = scmp.eq.s32.totalorder %s32, 0
      %p382 = por %p380, %p381
      %p383 = scmp.ne.s32.totalorder %s372, %s375
      %p384 = scmp.eq.s32.totalorder %s37, 1
      %p385 = por %p383, %p384
      %p386 = scmp.ne.s32.totalorder %s375, %s376
      %p387 = scmp.eq.s32.totalorder %s37, 0
      %p388 = por %p386, %p387
      %p389 = scmp.ne.s32.totalorder %s375, %s376
      %p390 = scmp.eq.s32.totalorder %s38, 1
      %p391 = por %p389, %p390
      %p393 = scmp.ne.s32.totalorder %s376, %s392
      %p394 = scmp.eq.s32.totalorder %s38, 0
      %p395 = por %p393, %p394
      %p396 = scmp.le.s32.totalorder 1, %s32
      %p397 = scmp.lt.s32.totalorder %s32, 3
      %p398 = pnand %p396, %p397
      %p399 = pneg %p398
      // Predicated region
      $region9: #{tpu_custom_call.1} parent=5 // pred_check
        _
      $region10: #{tpu_custom_call.1} parent=5 // pred_check_branch
        %401 = sbr.rel (%p398) target = $region12
      $region11: #{tpu_custom_call.1} parent=5 // pred_region
        %s402 = ssub.s32 %s32, 1
        // Predicated region
        $region13: #{tpu_custom_call.1} parent=11 // pred_check
          %p403 = pneg %p105
        $region14: #{tpu_custom_call.1} parent=11 // pred_check_branch
          %405 = sbr.rel (%p403) target = $region16
        $region15: #{tpu_custom_call.1} parent=11 // pred_region
          _
        $region16: #{tpu_custom_call.1} parent=11 // pred_fallthru
          _
        // Predicated region
        $region17: #{tpu_custom_call.1} parent=11 // pred_check
          %p406 = pneg %p126
        $region18: #{tpu_custom_call.1} parent=11 // pred_check_branch
          %408 = sbr.rel (%p406) target = $region20
        $region19: #{tpu_custom_call.1} parent=11 // pred_region
          _
        $region20: #{tpu_custom_call.1} parent=11 // pred_fallthru
          _
        // Predicated region
        $region21: #{tpu_custom_call.1} parent=11 // pred_check
          %p409 = pneg %p147
        $region22: #{tpu_custom_call.1} parent=11 // pred_check_branch
          %411 = sbr.rel (%p409) target = $region24
        $region23: #{tpu_custom_call.1} parent=11 // pred_region
          %413 = vsyncadd [#allocation6], 0
          %s414 = sshll.u32 %s4, 4
          %s415 = int_to_ptr.hbm [resolvable:$true] %s414
          %s416 = sshll.u32 [#allocation5], 4
          %s417 = int_to_ptr.vmem [resolvable:$true] %s416
          %422 = dma.hbm_to_vmem [thread:$0]  %s415, 256, %s417, [#allocation6], 64, 64, 4
        $region24: #{tpu_custom_call.1} parent=11 // pred_fallthru
          _
        // Predicated region
        $region25: #{tpu_custom_call.1} parent=11 // pred_check
          %p423 = pneg %p168
        $region26: #{tpu_custom_call.1} parent=11 // pred_check_branch
          %425 = sbr.rel (%p423) target = $region28
        $region27: #{tpu_custom_call.1} parent=11 // pred_region
          _
        $region28: #{tpu_custom_call.1} parent=11 // pred_fallthru
          _
        // Predicated region
        $region29: #{tpu_custom_call.1} parent=11 // pred_check
          %p426 = pneg %p189
        $region30: #{tpu_custom_call.1} parent=11 // pred_check_branch
          %428 = sbr.rel (%p426) target = $region32
        $region31: #{tpu_custom_call.1} parent=11 // pred_region
          %430 = vsyncadd [#allocation6], 0
          %s431 = sshll.u32 %s6, 4
          %s432 = int_to_ptr.hbm [resolvable:$true] %s431
          %s433 = sshll.u32 [#allocation7], 4
          %s434 = int_to_ptr.vmem [resolvable:$true] %s433
          %439 = dma.hbm_to_vmem [thread:$0]  %s432, 256, %s434, [#allocation6], 64, 64, 4
        $region32: #{tpu_custom_call.1} parent=11 // pred_fallthru
          _
        // Predicated region
        $region33: #{tpu_custom_call.1} parent=11 // pred_check
          %p440 = pneg %p210
        $region34: #{tpu_custom_call.1} parent=11 // pred_check_branch
          %442 = sbr.rel (%p440) target = $region36
        $region35: #{tpu_custom_call.1} parent=11 // pred_region
          _
        $region36: #{tpu_custom_call.1} parent=11 // pred_fallthru
          _
        // Predicated region
        $region37: #{tpu_custom_call.1} parent=11 // pred_check
          %p443 = pneg %p231
        $region38: #{tpu_custom_call.1} parent=11 // pred_check_branch
          %445 = sbr.rel (%p443) target = $region40
        $region39: #{tpu_custom_call.1} parent=11 // pred_region
          _
        $region40: #{tpu_custom_call.1} parent=11 // pred_fallthru
          _
        // Predicated region
        $region41: #{tpu_custom_call.1} parent=11 // pred_check
          %p446 = pneg %p252
        $region42: #{tpu_custom_call.1} parent=11 // pred_check_branch
          %448 = sbr.rel (%p446) target = $region44
        $region43: #{tpu_custom_call.1} parent=11 // pred_region
          _
        $region44: #{tpu_custom_call.1} parent=11 // pred_fallthru
          _
        // Predicated region
        $region45: #{tpu_custom_call.1} parent=11 // pred_check
          %p449 = pneg %p273
        $region46: #{tpu_custom_call.1} parent=11 // pred_check_branch
          %451 = sbr.rel (%p449) target = $region48
        $region47: #{tpu_custom_call.1} parent=11 // pred_region
          _
        $region48: #{tpu_custom_call.1} parent=11 // pred_fallthru
          _
        // Predicated region
        $region49: #{tpu_custom_call.1} parent=11 // pred_check
          %p452 = pneg %p294
        $region50: #{tpu_custom_call.1} parent=11 // pred_check_branch
          %454 = sbr.rel (%p452) target = $region52
        $region51: #{tpu_custom_call.1} parent=11 // pred_region
          _
        $region52: #{tpu_custom_call.1} parent=11 // pred_fallthru
          _
        // Predicated region
        $region53: #{tpu_custom_call.1} parent=11 // pred_check
          %p455 = pneg %p315
        $region54: #{tpu_custom_call.1} parent=11 // pred_check_branch
          %457 = sbr.rel (%p455) target = $region56
        $region55: #{tpu_custom_call.1} parent=11 // pred_region
          _
        $region56: #{tpu_custom_call.1} parent=11 // pred_fallthru
          _
        // Predicated region
        $region57: #{tpu_custom_call.1} parent=11 // pred_check
          %p458 = pneg %p336
        $region58: #{tpu_custom_call.1} parent=11 // pred_check_branch
          %460 = sbr.rel (%p458) target = $region60
        $region59: #{tpu_custom_call.1} parent=11 // pred_region
          _
        $region60: #{tpu_custom_call.1} parent=11 // pred_fallthru
          _
      $region12: #{tpu_custom_call.1} parent=5 // pred_fallthru
        _
      %p461 = scmp.lt.s32.totalorder %s32, 2
      // Predicated region
      $region61: #{tpu_custom_call.1} parent=5 // pred_check
        %p462 = pneg %p461
      $region62: #{tpu_custom_call.1} parent=5 // pred_check_branch
        %464 = sbr.rel (%p462) target = $region64
      $region63: #{tpu_custom_call.1} parent=5 // pred_region
        // Predicated region
        $region65: #{tpu_custom_call.1} parent=63 // pred_check
          %p465 = pneg %p52
        $region66: #{tpu_custom_call.1} parent=63 // pred_check_branch
          %467 = sbr.rel (%p465) target = $region68
        $region67: #{tpu_custom_call.1} parent=63 // pred_region
          %s468 = smul.u32 2, %s32
          %p469 = scmp.lt.s32.totalorder %s468, 3
          %s470 = scalar_select %p469, %s468, 3
          %s471 = smul.addr %s470, 8
          %s472 = scalar_lea.vmem %s0, %s471
          %s473 = smul.u32 2, %s32
        $region68: #{tpu_custom_call.1} parent=63 // pred_fallthru
          _
        // Predicated region
        $region69: #{tpu_custom_call.1} parent=63 // pred_check
          %p474 = pneg %p78
        $region70: #{tpu_custom_call.1} parent=63 // pred_check_branch
          %476 = sbr.rel (%p474) target = $region72
        $region71: #{tpu_custom_call.1} parent=63 // pred_region
          %s477 = sand.u32 %s68, 1
          %s478 = scalar_lea.sflag [#allocation3], %s477
          %s479 = sand.u32 %s68, 1
          %s480 = smul.addr %s479, 2
          %s481 = scalar_lea.vmem [#allocation2], %s480
          %s482 = smul.u32 2, %s32
          %484 = vsyncadd %s478, 0
          %s485 = scalar_lea.hbm %s1, %s482
          %s486 = sshll.u32 %s485, 4
          %s487 = int_to_ptr.hbm [resolvable:$true] %s486
          %s488 = sshll.u32 %s481, 4
          %s489 = int_to_ptr.vmem [resolvable:$true] %s488
          %494 = dma.hbm_to_vmem [thread:$0]  %s487, 32, %s489, %s478, 16, 16, 1
        $region72: #{tpu_custom_call.1} parent=63 // pred_fallthru
          _
      $region64: #{tpu_custom_call.1} parent=5 // pred_fallthru
        _
      %p495 = scmp.le.s32.totalorder 1, %s32
      %p496 = scmp.lt.s32.totalorder %s32, 3
      %p497 = pnand %p495, %p496
      %p498 = pneg %p497
      // Predicated region
      $region73: #{tpu_custom_call.1} parent=5 // pred_check
        _
      $region74: #{tpu_custom_call.1} parent=5 // pred_check_branch
        %500 = sbr.rel (%p497) target = $region76
      $region75: #{tpu_custom_call.1} parent=5 // pred_region
        %s501 = ssub.s32 %s32, 1
        %s502 = sand.u32 %s71, 1
        %s503 = scalar_lea.sflag [#allocation3], %s502
        %s504 = sand.u32 %s71, 1
        %s505 = smul.addr %s504, 2
        %s506 = scalar_lea.vmem [#allocation2], %s505
        // Predicated region
        $region77: #{tpu_custom_call.1} parent=75 // pred_check
          %p507 = pneg %p84
        $region78: #{tpu_custom_call.1} parent=75 // pred_check_branch
          %509 = sbr.rel (%p507) target = $region80
        $region79: #{tpu_custom_call.1} parent=75 // pred_region
          %511 = dma.done %s503, 32
        $region80: #{tpu_custom_call.1} parent=75 // pred_fallthru
          _
        // Predicated region
        $region81: #{tpu_custom_call.1} parent=75 // pred_check
          %p512 = pneg %p147
        $region82: #{tpu_custom_call.1} parent=75 // pred_check_branch
          %514 = sbr.rel (%p512) target = $region84
        $region83: #{tpu_custom_call.1} parent=75 // pred_region
          %516 = dma.done [#allocation6], 256
        $region84: #{tpu_custom_call.1} parent=75 // pred_fallthru
          _
        // Predicated region
        $region85: #{tpu_custom_call.1} parent=75 // pred_check
          %p517 = pneg %p189
        $region86: #{tpu_custom_call.1} parent=75 // pred_check_branch
          %519 = sbr.rel (%p517) target = $region88
        $region87: #{tpu_custom_call.1} parent=75 // pred_region
          %521 = dma.done [#allocation6], 256
        $region88: #{tpu_custom_call.1} parent=75 // pred_fallthru
          _
        %s522 = smul.u32 2, %s37
        %p523 = scmp.lt.s32.totalorder %s522, 3
        %s524 = scalar_select %p523, %s522, 3
        %s525 = smul.addr %s524, 8
        %s526 = scalar_lea.vmem %s0, %s525
        %p527 = pneg %p58
        %p528 = pneg %p55
        %s529 = sand.u32 %s71, 1
        %s530 = scalar_lea.sflag [#allocation3], %s529
        %s531 = sand.u32 %s71, 1
        %s532 = smul.addr %s531, 2
        %s533 = scalar_lea.vmem [#allocation2], %s532
        %p534 = pneg %p84
        %p535 = pneg %p81
        %p536 = pneg %p105
        %p537 = pneg %p102
        %p538 = pneg %p126
        %p539 = pneg %p123
        %p540 = pneg %p147
        %p541 = pneg %p144
        %p542 = pneg %p168
        %p543 = pneg %p165
        %p544 = pneg %p189
        %p545 = pneg %p186
        %p546 = pneg %p210
        %p547 = pneg %p207
        %p548 = pneg %p231
        %p549 = pneg %p228
        %p550 = pneg %p252
        %p551 = pneg %p249
        %p552 = pneg %p273
        %p553 = pneg %p270
        %p554 = pneg %p294
        %p555 = pneg %p291
        %p556 = pneg %p315
        %p557 = pneg %p312
        %p558 = pneg %p336
        %p559 = pneg %p333
        %p560 = pneg %p362
        %p561 = pneg %p359
        %s562 = sand.u32 %s349, 1
        %s563 = scalar_lea.sflag [#allocation4], %s562
        %s564 = sand.u32 %s349, 1
        %s565 = smul.addr %s564, 16
        %s566 = scalar_lea.vmem [#allocation8], %s565
        %p567 = pneg %p388
        %p568 = pneg %p385
        %s569 = sand.u32 %s375, 1
        %s570 = scalar_lea.sflag [#allocation10], %s569
        %s571 = sand.u32 %s375, 1
        %s572 = smul.addr %s571, 16
        %s573 = scalar_lea.vmem [#allocation9], %s572
        %s574 = smul.u32 2, %s37
        %p575 = scmp.lt.s32.totalorder %s574, 3
        %s576 = scalar_select %p575, %s574, 3
        %s577 = smul.addr %s576, 8
        %s578 = scalar_lea.vmem %s0, %s577
        %s579 = smul.u32 2, %s37
        %s580 = smul.u32 2, %s37
        %s581 = smul.u32 2, %s37
        %s582 = smul.u32 2, %s37
        %v584 = vld [vmem:[%s578] sm:$0xff]
        %v585 = vld [vmem:[%s578 + $0x8] sm:$0xff]
        %v586 = vpack.c.bf16 %v585, %v584
        %v587 = vld [vmem:[%s2] sm:$0xf]
        %v588 = vld [vmem:[%s2 + $0x4] sm:$0xf]
        %v589 = vld [vmem:[%s2 + $0x8] sm:$0xf]
        %v590 = vld [vmem:[%s2 + $0xc] sm:$0xf]
        %v591 = vld [vmem:[%s3] sm:$0x1]
        %v593 = vperm.slane %v591, 0
        %v599 = vunpack.c.l.b16 %v587
        %v600 = vunpack.c.l.b16 %v588
        %v601 = vunpack.c.l.b16 %v589
        %v602 = vunpack.c.l.b16 %v590
        %v603 = vpack.c.b16 %v600, %v599
        %v604 = vpack.c.b16 %v602, %v601
        %vm607 = vcmask 261120
        %v609 = vsel %vm607, %v586, 0
        %611 = vmatpush.bf16.msra.mxu0 0
        %612 = vmatpush.bf16.msra.mxu0 0
        %613 = vmatpush.bf16.msra.mxu0 0
        %614 = vmatpush.bf16.msra.mxu0 0
        %615 = vmatpush.bf16.msra.mxu0 0
        %616 = vmatpush.bf16.msra.mxu0 0
        %617 = vmatpush.bf16.msra.mxu0 %v604
        %618 = vmatpush.bf16.msra.mxu0 %v603
        %619 = vmatmul.bf16.gmra.mxu0 %v609
        %v620 = vpop.f32.mrf.mxu0
        %v621 = vadd.f32 %v593, %v620
        %v622 = vpop.f32.mrf.mxu0
        %v623 = vadd.f32 %v593, %v622
        %624 = vdwg.mxu0
        %v625 = vpack.c.bf16 %v621, %v621
        %v626 = vpack.c.bf16 %v623, %v623
        %v627 = vld [vmem:[#allocation5] sm:$0xf]
        %v628 = vld [vmem:[#allocation5 + $0x4] sm:$0xf]
        %v629 = vld [vmem:[#allocation5 + $0x8] sm:$0xf]
        %v630 = vld [vmem:[#allocation5 + $0xc] sm:$0xf]
        %v631 = vld [vmem:[%s506] sm:$0x1]
        %v633 = vunpack.c.l.b16 %v625
        %v634 = vpack.c.b16 %v633, %v633
        %635 = vrot.lane.b32.xlu0 %v634, 96
        %v636 = vpop.permute.xlu0 %635
        %vm637 = vcmask 64512
        %v639 = vsel %vm637, %v625, 0
        %v642 = vsel %vm637, %v636, 0
        %644 = vmatpush.bf16.xpose.msra.mxu0 0
        %645 = vmatpush.bf16.xpose.msra.mxu0 0
        %646 = vmatpush.bf16.xpose.msra.mxu0 0
        %647 = vmatpush.bf16.xpose.msra.mxu0 0
        %648 = vmatpush.bf16.xpose.msra.mxu0 0
        %649 = vmatpush.bf16.xpose.msra.mxu0 0
        %650 = vmatpush.bf16.xpose.msra.mxu0 0
        %651 = vmatpush.bf16.xpose.msra.mxu0 %v642
        %652 = vmatmul.bf16.gmra.mxu0 %v639
        %v653 = vpop.f32.mrf.mxu0
        %v654 = vadd.f32 0.0, %v653
        %v655 = vpop.f32.mrf.mxu0
        %656 = vdwg.mxu0
        %v657 = vmul.f32 %v654, 0.35355338
        %v659 = vperm.slane %v631, 0
        %v661 = vadd.f32 %v657, %v659
        %662 = vst.msk [vmem:[%s573] sm:$0xff] %vm637, %v661
        %v663 = vsel %vm637, %v661, -inf
        %664 = vmax.xlane.f32.xlu0 %v663
        %v665 = vpop.xlane.xlu0 %664
        %v666 = vsub.f32 %v661, %v665
        %v667 = vmul.f32 %v666, 1.442695
        %v668 = vpow.pop %v667
        %v669 = vsel %vm637, %v668, 0.0
        %670 = vadd.xlane.f32.xlu0 %v669
        %v671 = vpop.xlane.xlu0 %670
        %v672 = vrcp.pop %v671
        %v673 = vmul.f32 %v668, %v672
        %v674 = vpack.c.bf16 %v673, %v673
        %675 = vrot.lane.b32.xlu0 %v634, 64
        %v676 = vpop.permute.xlu0 %675
        %v678 = vsel %vm637, %v674, 0
        %vm680 = vcmask 1043456
        %v682 = vsel %vm680, %v676, 0
        %684 = vmatpush.bf16.msra.mxu0 0
        %685 = vmatpush.bf16.msra.mxu0 0
        %686 = vmatpush.bf16.msra.mxu0 0
        %687 = vmatpush.bf16.msra.mxu0 0
        %688 = vmatpush.bf16.msra.mxu0 0
        %689 = vmatpush.bf16.msra.mxu0 0
        %690 = vmatpush.bf16.msra.mxu0 0
        %691 = vmatpush.bf16.msra.mxu0 %v682
        %692 = vmatmul.bf16.gmra.mxu0 %v678
        %v693 = vpop.f32.mrf.mxu0
        %v694 = vadd.f32 0.0, %v693
        %v695 = vpop.f32.mrf.mxu0
        %696 = vdwg.mxu0
        %v697 = vpack.c.bf16 %v694, %v694
        %698 = vrot.lane.b32.xlu0 %v634, 120
        %v699 = vpop.permute.xlu0 %698
        %700 = vrot.lane.b32.xlu0 %v634, 88
        %v701 = vpop.permute.xlu0 %700
        %v703 = vsel %vm637, %v699, 0
        %v706 = vsel %vm637, %v701, 0
        %708 = vmatpush.bf16.xpose.msra.mxu0 0
        %709 = vmatpush.bf16.xpose.msra.mxu0 0
        %710 = vmatpush.bf16.xpose.msra.mxu0 0
        %711 = vmatpush.bf16.xpose.msra.mxu0 0
        %712 = vmatpush.bf16.xpose.msra.mxu0 0
        %713 = vmatpush.bf16.xpose.msra.mxu0 0
        %714 = vmatpush.bf16.xpose.msra.mxu0 0
        %715 = vmatpush.bf16.xpose.msra.mxu0 %v706
        %716 = vmatmul.bf16.gmra.mxu0 %v703
        %v717 = vpop.f32.mrf.mxu0
        %v718 = vadd.f32 0.0, %v717
        %v719 = vpop.f32.mrf.mxu0
        %720 = vdwg.mxu0
        %v721 = vmul.f32 %v718, 0.35355338
        %v722 = vadd.f32 %v721, %v659
        %724 = vrot.lane.b32.xlu0 %v722, 8
        %v725 = vpop.permute.xlu0 %724
        %vm727 = vcmask 130112
        %728 = vst.msk [vmem:[%s573] sm:$0xff] %vm727, %v725
        %v729 = vsel %vm637, %v722, -inf
        %730 = vmax.xlane.f32.xlu0 %v729
        %v731 = vpop.xlane.xlu0 %730
        %v732 = vsub.f32 %v722, %v731
        %v733 = vmul.f32 %v732, 1.442695
        %v734 = vpow.pop %v733
        %v735 = vsel %vm637, %v734, 0.0
        %736 = vadd.xlane.f32.xlu0 %v735
        %v737 = vpop.xlane.xlu0 %736
        %v738 = vrcp.pop %v737
        %v739 = vmul.f32 %v734, %v738
        %v740 = vpack.c.bf16 %v739, %v739
        %741 = vrot.lane.b32.xlu0 %v634, 56
        %v742 = vpop.permute.xlu0 %741
        %v744 = vsel %vm637, %v740, 0
        %v747 = vsel %vm680, %v742, 0
        %749 = vmatpush.bf16.msra.mxu0 0
        %750 = vmatpush.bf16.msra.mxu0 0
        %751 = vmatpush.bf16.msra.mxu0 0
        %752 = vmatpush.bf16.msra.mxu0 0
        %753 = vmatpush.bf16.msra.mxu0 0
        %754 = vmatpush.bf16.msra.mxu0 0
        %755 = vmatpush.bf16.msra.mxu0 0
        %756 = vmatpush.bf16.msra.mxu0 %v747
        %757 = vmatmul.bf16.gmra.mxu0 %v744
        %v758 = vpop.f32.mrf.mxu0
        %v759 = vadd.f32 0.0, %v758
        %v760 = vpop.f32.mrf.mxu0
        %761 = vdwg.mxu0
        %v762 = vpack.c.bf16 %v759, %v759
        %v764 = vsel %vm637, %v762, 0
        %v767 = vsel %vm680, %v628, 0
        %769 = vmatpush.bf16.msra.mxu0 0
        %770 = vmatpush.bf16.msra.mxu0 0
        %771 = vmatpush.bf16.msra.mxu0 0
        %772 = vmatpush.bf16.msra.mxu0 0
        %773 = vmatpush.bf16.msra.mxu0 0
        %774 = vmatpush.bf16.msra.mxu0 0
        %775 = vmatpush.bf16.msra.mxu0 0
        %776 = vmatpush.bf16.msra.mxu0 %v767
        %777 = vmatmul.bf16.gmra.mxu0 %v764
        %v778 = vpop.f32.mrf.mxu0
        %v779 = vadd.f32 0.0, %v778
        %v780 = vpop.f32.mrf.mxu0
        %781 = vdwg.mxu0
        %v783 = vsel %vm637, %v697, 0
        %v786 = vsel %vm680, %v627, 0
        %788 = vmatpush.bf16.msra.mxu0 0
        %789 = vmatpush.bf16.msra.mxu0 0
        %790 = vmatpush.bf16.msra.mxu0 0
        %791 = vmatpush.bf16.msra.mxu0 0
        %792 = vmatpush.bf16.msra.mxu0 0
        %793 = vmatpush.bf16.msra.mxu0 0
        %794 = vmatpush.bf16.msra.mxu0 0
        %795 = vmatpush.bf16.msra.mxu0 %v786
        %796 = vmatmul.bf16.gmra.mxu0 %v783
        %v797 = vpop.f32.mrf.mxu0
        %v798 = vadd.f32 %v779, %v797
        %v799 = vpop.f32.mrf.mxu0
        %800 = vdwg.mxu0
        %801 = vrot.lane.b32.xlu0 %v634, 112
        %v802 = vpop.permute.xlu0 %801
        %803 = vrot.lane.b32.xlu0 %v634, 80
        %v804 = vpop.permute.xlu0 %803
        %v806 = vsel %vm637, %v802, 0
        %v809 = vsel %vm637, %v804, 0
        %811 = vmatpush.bf16.xpose.msra.mxu0 0
        %812 = vmatpush.bf16.xpose.msra.mxu0 0
        %813 = vmatpush.bf16.xpose.msra.mxu0 0
        %814 = vmatpush.bf16.xpose.msra.mxu0 0
        %815 = vmatpush.bf16.xpose.msra.mxu0 0
        %816 = vmatpush.bf16.xpose.msra.mxu0 0
        %817 = vmatpush.bf16.xpose.msra.mxu0 0
        %818 = vmatpush.bf16.xpose.msra.mxu0 %v809
        %819 = vmatmul.bf16.gmra.mxu0 %v806
        %v820 = vpop.f32.mrf.mxu0
        %v821 = vadd.f32 0.0, %v820
        %v822 = vpop.f32.mrf.mxu0
        %823 = vdwg.mxu0
        %v824 = vmul.f32 %v821, 0.35355338
        %v825 = vadd.f32 %v824, %v659
        %827 = vrot.lane.b32.xlu0 %v825, 16
        %v828 = vpop.permute.xlu0 %827
        %vm830 = vcmask 195712
        %831 = vst.msk [vmem:[%s573] sm:$0xff] %vm830, %v828
        %v832 = vsel %vm637, %v825, -inf
        %833 = vmax.xlane.f32.xlu0 %v832
        %v834 = vpop.xlane.xlu0 %833
        %v835 = vsub.f32 %v825, %v834
        %v836 = vmul.f32 %v835, 1.442695
        %v837 = vpow.pop %v836
        %v838 = vsel %vm637, %v837, 0.0
        %839 = vadd.xlane.f32.xlu0 %v838
        %v840 = vpop.xlane.xlu0 %839
        %v841 = vrcp.pop %v840
        %v842 = vmul.f32 %v837, %v841
        %v843 = vpack.c.bf16 %v842, %v842
        %844 = vrot.lane.b32.xlu0 %v634, 48
        %v845 = vpop.permute.xlu0 %844
        %v847 = vsel %vm637, %v843, 0
        %v850 = vsel %vm680, %v845, 0
        %852 = vmatpush.bf16.msra.mxu0 0
        %853 = vmatpush.bf16.msra.mxu0 0
        %854 = vmatpush.bf16.msra.mxu0 0
        %855 = vmatpush.bf16.msra.mxu0 0
        %856 = vmatpush.bf16.msra.mxu0 0
        %857 = vmatpush.bf16.msra.mxu0 0
        %858 = vmatpush.bf16.msra.mxu0 0
        %859 = vmatpush.bf16.msra.mxu0 %v850
        %860 = vmatmul.bf16.gmra.mxu0 %v847
        %v861 = vpop.f32.mrf.mxu0
        %v862 = vadd.f32 0.0, %v861
        %v863 = vpop.f32.mrf.mxu0
        %864 = vdwg.mxu0
        %v865 = vpack.c.bf16 %v862, %v862
        %v867 = vsel %vm637, %v865, 0
        %v870 = vsel %vm680, %v629, 0
        %872 = vmatpush.bf16.msra.mxu0 0
        %873 = vmatpush.bf16.msra.mxu0 0
        %874 = vmatpush.bf16.msra.mxu0 0
        %875 = vmatpush.bf16.msra.mxu0 0
        %876 = vmatpush.bf16.msra.mxu0 0
        %877 = vmatpush.bf16.msra.mxu0 0
        %878 = vmatpush.bf16.msra.mxu0 0
        %879 = vmatpush.bf16.msra.mxu0 %v870
        %880 = vmatmul.bf16.gmra.mxu0 %v867
        %v881 = vpop.f32.mrf.mxu0
        %v882 = vadd.f32 0.0, %v881
        %v883 = vpop.f32.mrf.mxu0
        %884 = vdwg.mxu0
        %v885 = vadd.f32 %v798, %v882
        %886 = vrot.lane.b32.xlu0 %v634, 104
        %v887 = vpop.permute.xlu0 %886
        %888 = vrot.lane.b32.xlu0 %v634, 72
        %v889 = vpop.permute.xlu0 %888
        %v891 = vsel %vm637, %v887, 0
        %v894 = vsel %vm637, %v889, 0
        %896 = vmatpush.bf16.xpose.msra.mxu0 0
        %897 = vmatpush.bf16.xpose.msra.mxu0 0
        %898 = vmatpush.bf16.xpose.msra.mxu0 0
        %899 = vmatpush.bf16.xpose.msra.mxu0 0
        %900 = vmatpush.bf16.xpose.msra.mxu0 0
        %901 = vmatpush.bf16.xpose.msra.mxu0 0
        %902 = vmatpush.bf16.xpose.msra.mxu0 0
        %903 = vmatpush.bf16.xpose.msra.mxu0 %v894
        %904 = vmatmul.bf16.gmra.mxu0 %v891
        %v905 = vpop.f32.mrf.mxu0
        %v906 = vadd.f32 0.0, %v905
        %v907 = vpop.f32.mrf.mxu0
        %908 = vdwg.mxu0
        %v909 = vmul.f32 %v906, 0.35355338
        %v910 = vadd.f32 %v909, %v659
        %912 = vrot.lane.b32.xlu0 %v910, 24
        %v913 = vpop.permute.xlu0 %912
        %vm915 = vcmask 261312
        %916 = vst.msk [vmem:[%s573] sm:$0xff] %vm915, %v913
        %v917 = vsel %vm637, %v910, -inf
        %918 = vmax.xlane.f32.xlu0 %v917
        %v919 = vpop.xlane.xlu0 %918
        %v920 = vsub.f32 %v910, %v919
        %v921 = vmul.f32 %v920, 1.442695
        %v922 = vpow.pop %v921
        %v923 = vsel %vm637, %v922, 0.0
        %924 = vadd.xlane.f32.xlu0 %v923
        %v925 = vpop.xlane.xlu0 %924
        %v926 = vrcp.pop %v925
        %v927 = vmul.f32 %v922, %v926
        %v928 = vpack.c.bf16 %v927, %v927
        %929 = vrot.lane.b32.xlu0 %v634, 40
        %v930 = vpop.permute.xlu0 %929
        %v932 = vsel %vm637, %v928, 0
        %v935 = vsel %vm680, %v930, 0
        %937 = vmatpush.bf16.msra.mxu0 0
        %938 = vmatpush.bf16.msra.mxu0 0
        %939 = vmatpush.bf16.msra.mxu0 0
        %940 = vmatpush.bf16.msra.mxu0 0
        %941 = vmatpush.bf16.msra.mxu0 0
        %942 = vmatpush.bf16.msra.mxu0 0
        %943 = vmatpush.bf16.msra.mxu0 0
        %944 = vmatpush.bf16.msra.mxu0 %v935
        %945 = vmatmul.bf16.gmra.mxu0 %v932
        %v946 = vpop.f32.mrf.mxu0
        %v947 = vadd.f32 0.0, %v946
        %v948 = vpop.f32.mrf.mxu0
        %949 = vdwg.mxu0
        %v950 = vpack.c.bf16 %v947, %v947
        %v952 = vsel %vm637, %v950, 0
        %v955 = vsel %vm680, %v630, 0
        %957 = vmatpush.bf16.msra.mxu0 0
        %958 = vmatpush.bf16.msra.mxu0 0
        %959 = vmatpush.bf16.msra.mxu0 0
        %960 = vmatpush.bf16.msra.mxu0 0
        %961 = vmatpush.bf16.msra.mxu0 0
        %962 = vmatpush.bf16.msra.mxu0 0
        %963 = vmatpush.bf16.msra.mxu0 0
        %964 = vmatpush.bf16.msra.mxu0 %v955
        %965 = vmatmul.bf16.gmra.mxu0 %v952
        %v966 = vpop.f32.mrf.mxu0
        %v967 = vadd.f32 0.0, %v966
        %v968 = vpop.f32.mrf.mxu0
        %969 = vdwg.mxu0
        %v970 = vadd.f32 %v885, %v967
        %s971 = scalar_lea.vmem %s506, 1 [#allocation2]
        %v972 = vld [vmem:[%s971] sm:$0x1]
        %v974 = vunpack.c.l.b16 %v626
        %v975 = vpack.c.b16 %v974, %v974
        %976 = vrot.lane.b32.xlu0 %v975, 96
        %v977 = vpop.permute.xlu0 %976
        %v979 = vsel %vm637, %v626, 0
        %v982 = vsel %vm637, %v977, 0
        %984 = vmatpush.bf16.xpose.msra.mxu0 0
        %985 = vmatpush.bf16.xpose.msra.mxu0 0
        %986 = vmatpush.bf16.xpose.msra.mxu0 0
        %987 = vmatpush.bf16.xpose.msra.mxu0 0
        %988 = vmatpush.bf16.xpose.msra.mxu0 0
        %989 = vmatpush.bf16.xpose.msra.mxu0 0
        %990 = vmatpush.bf16.xpose.msra.mxu0 0
        %991 = vmatpush.bf16.xpose.msra.mxu0 %v982
        %992 = vmatmul.bf16.gmra.mxu0 %v979
        %v993 = vpop.f32.mrf.mxu0
        %v994 = vadd.f32 0.0, %v993
        %v995 = vpop.f32.mrf.mxu0
        %996 = vdwg.mxu0
        %v997 = vmul.f32 %v994, 0.35355338
        %v999 = vperm.slane %v972, 0
        %v1001 = vadd.f32 %v997, %v999
        %s1002 = scalar_lea.vmem %s573, 8 [#allocation9]
        %1003 = vst.msk [vmem:[%s1002] sm:$0xff] %vm637, %v1001
        %v1004 = vsel %vm637, %v1001, -inf
        %1005 = vmax.xlane.f32.xlu0 %v1004
        %v1006 = vpop.xlane.xlu0 %1005
        %v1007 = vsub.f32 %v1001, %v1006
        %v1008 = vmul.f32 %v1007, 1.442695
        %v1009 = vpow.pop %v1008
        %v1010 = vsel %vm637, %v1009, 0.0
        %1011 = vadd.xlane.f32.xlu0 %v1010
        %v1012 = vpop.xlane.xlu0 %1011
        %v1013 = vrcp.pop %v1012
        %v1014 = vmul.f32 %v1009, %v1013
        %v1015 = vpack.c.bf16 %v1014, %v1014
        %1016 = vrot.lane.b32.xlu0 %v975, 64
        %v1017 = vpop.permute.xlu0 %1016
        %v1019 = vsel %vm637, %v1015, 0
        %v1022 = vsel %vm680, %v1017, 0
        %1024 = vmatpush.bf16.msra.mxu0 0
        %1025 = vmatpush.bf16.msra.mxu0 0
        %1026 = vmatpush.bf16.msra.mxu0 0
        %1027 = vmatpush.bf16.msra.mxu0 0
        %1028 = vmatpush.bf16.msra.mxu0 0
        %1029 = vmatpush.bf16.msra.mxu0 0
        %1030 = vmatpush.bf16.msra.mxu0 0
        %1031 = vmatpush.bf16.msra.mxu0 %v1022
        %1032 = vmatmul.bf16.gmra.mxu0 %v1019
        %v1033 = vpop.f32.mrf.mxu0
        %v1034 = vadd.f32 0.0, %v1033
        %v1035 = vpop.f32.mrf.mxu0
        %1036 = vdwg.mxu0
        %v1037 = vpack.c.bf16 %v1034, %v1034
        %1038 = vrot.lane.b32.xlu0 %v975, 120
        %v1039 = vpop.permute.xlu0 %1038
        %1040 = vrot.lane.b32.xlu0 %v975, 88
        %v1041 = vpop.permute.xlu0 %1040
        %v1043 = vsel %vm637, %v1039, 0
        %v1046 = vsel %vm637, %v1041, 0
        %1048 = vmatpush.bf16.xpose.msra.mxu0 0
        %1049 = vmatpush.bf16.xpose.msra.mxu0 0
        %1050 = vmatpush.bf16.xpose.msra.mxu0 0
        %1051 = vmatpush.bf16.xpose.msra.mxu0 0
        %1052 = vmatpush.bf16.xpose.msra.mxu0 0
        %1053 = vmatpush.bf16.xpose.msra.mxu0 0
        %1054 = vmatpush.bf16.xpose.msra.mxu0 0
        %1055 = vmatpush.bf16.xpose.msra.mxu0 %v1046
        %1056 = vmatmul.bf16.gmra.mxu0 %v1043
        %v1057 = vpop.f32.mrf.mxu0
        %v1058 = vadd.f32 0.0, %v1057
        %v1059 = vpop.f32.mrf.mxu0
        %1060 = vdwg.mxu0
        %v1061 = vmul.f32 %v1058, 0.35355338
        %v1062 = vadd.f32 %v1061, %v999
        %1064 = vrot.lane.b32.xlu0 %v1062, 8
        %v1065 = vpop.permute.xlu0 %1064
        %1067 = vst.msk [vmem:[%s1002] sm:$0xff] %vm727, %v1065
        %v1068 = vsel %vm637, %v1062, -inf
        %1069 = vmax.xlane.f32.xlu0 %v1068
        %v1070 = vpop.xlane.xlu0 %1069
        %v1071 = vsub.f32 %v1062, %v1070
        %v1072 = vmul.f32 %v1071, 1.442695
        %v1073 = vpow.pop %v1072
        %v1074 = vsel %vm637, %v1073, 0.0
        %1075 = vadd.xlane.f32.xlu0 %v1074
        %v1076 = vpop.xlane.xlu0 %1075
        %v1077 = vrcp.pop %v1076
        %v1078 = vmul.f32 %v1073, %v1077
        %v1079 = vpack.c.bf16 %v1078, %v1078
        %1080 = vrot.lane.b32.xlu0 %v975, 56
        %v1081 = vpop.permute.xlu0 %1080
        %v1083 = vsel %vm637, %v1079, 0
        %v1086 = vsel %vm680, %v1081, 0
        %1088 = vmatpush.bf16.msra.mxu0 0
        %1089 = vmatpush.bf16.msra.mxu0 0
        %1090 = vmatpush.bf16.msra.mxu0 0
        %1091 = vmatpush.bf16.msra.mxu0 0
        %1092 = vmatpush.bf16.msra.mxu0 0
        %1093 = vmatpush.bf16.msra.mxu0 0
        %1094 = vmatpush.bf16.msra.mxu0 0
        %1095 = vmatpush.bf16.msra.mxu0 %v1086
        %1096 = vmatmul.bf16.gmra.mxu0 %v1083
        %v1097 = vpop.f32.mrf.mxu0
        %v1098 = vadd.f32 0.0, %v1097
        %v1099 = vpop.f32.mrf.mxu0
        %1100 = vdwg.mxu0
        %v1101 = vpack.c.bf16 %v1098, %v1098
        %v1103 = vsel %vm637, %v1101, 0
        %1105 = vmatpush.bf16.msra.mxu0 0
        %1106 = vmatpush.bf16.msra.mxu0 0
        %1107 = vmatpush.bf16.msra.mxu0 0
        %1108 = vmatpush.bf16.msra.mxu0 0
        %1109 = vmatpush.bf16.msra.mxu0 0
        %1110 = vmatpush.bf16.msra.mxu0 0
        %1111 = vmatpush.bf16.msra.mxu0 0
        %1112 = vmatpush.bf16.msra.mxu0 %v767
        %1113 = vmatmul.bf16.gmra.mxu0 %v1103
        %v1114 = vpop.f32.mrf.mxu0
        %v1115 = vadd.f32 0.0, %v1114
        %v1116 = vpop.f32.mrf.mxu0
        %1117 = vdwg.mxu0
        %v1119 = vsel %vm637, %v1037, 0
        %1121 = vmatpush.bf16.msra.mxu0 0
        %1122 = vmatpush.bf16.msra.mxu0 0
        %1123 = vmatpush.bf16.msra.mxu0 0
        %1124 = vmatpush.bf16.msra.mxu0 0
        %1125 = vmatpush.bf16.msra.mxu0 0
        %1126 = vmatpush.bf16.msra.mxu0 0
        %1127 = vmatpush.bf16.msra.mxu0 0
        %1128 = vmatpush.bf16.msra.mxu0 %v786
        %1129 = vmatmul.bf16.gmra.mxu0 %v1119
        %v1130 = vpop.f32.mrf.mxu0
        %v1131 = vadd.f32 %v1115, %v1130
        %v1132 = vpop.f32.mrf.mxu0
        %1133 = vdwg.mxu0
        %1134 = vrot.lane.b32.xlu0 %v975, 112
        %v1135 = vpop.permute.xlu0 %1134
        %1136 = vrot.lane.b32.xlu0 %v975, 80
        %v1137 = vpop.permute.xlu0 %1136
        %v1139 = vsel %vm637, %v1135, 0
        %v1142 = vsel %vm637, %v1137, 0
        %1144 = vmatpush.bf16.xpose.msra.mxu0 0
        %1145 = vmatpush.bf16.xpose.msra.mxu0 0
        %1146 = vmatpush.bf16.xpose.msra.mxu0 0
        %1147 = vmatpush.bf16.xpose.msra.mxu0 0
        %1148 = vmatpush.bf16.xpose.msra.mxu0 0
        %1149 = vmatpush.bf16.xpose.msra.mxu0 0
        %1150 = vmatpush.bf16.xpose.msra.mxu0 0
        %1151 = vmatpush.bf16.xpose.msra.mxu0 %v1142
        %1152 = vmatmul.bf16.gmra.mxu0 %v1139
        %v1153 = vpop.f32.mrf.mxu0
        %v1154 = vadd.f32 0.0, %v1153
        %v1155 = vpop.f32.mrf.mxu0
        %1156 = vdwg.mxu0
        %v1157 = vmul.f32 %v1154, 0.35355338
        %v1158 = vadd.f32 %v1157, %v999
        %1160 = vrot.lane.b32.xlu0 %v1158, 16
        %v1161 = vpop.permute.xlu0 %1160
        %1163 = vst.msk [vmem:[%s1002] sm:$0xff] %vm830, %v1161
        %v1164 = vsel %vm637, %v1158, -inf
        %1165 = vmax.xlane.f32.xlu0 %v1164
        %v1166 = vpop.xlane.xlu0 %1165
        %v1167 = vsub.f32 %v1158, %v1166
        %v1168 = vmul.f32 %v1167, 1.442695
        %v1169 = vpow.pop %v1168
        %v1170 = vsel %vm637, %v1169, 0.0
        %1171 = vadd.xlane.f32.xlu0 %v1170
        %v1172 = vpop.xlane.xlu0 %1171
        %v1173 = vrcp.pop %v1172
        %v1174 = vmul.f32 %v1169, %v1173
        %v1175 = vpack.c.bf16 %v1174, %v1174
        %1176 = vrot.lane.b32.xlu0 %v975, 48
        %v1177 = vpop.permute.xlu0 %1176
        %v1179 = vsel %vm637, %v1175, 0
        %v1182 = vsel %vm680, %v1177, 0
        %1184 = vmatpush.bf16.msra.mxu0 0
        %1185 = vmatpush.bf16.msra.mxu0 0
        %1186 = vmatpush.bf16.msra.mxu0 0
        %1187 = vmatpush.bf16.msra.mxu0 0
        %1188 = vmatpush.bf16.msra.mxu0 0
        %1189 = vmatpush.bf16.msra.mxu0 0
        %1190 = vmatpush.bf16.msra.mxu0 0
        %1191 = vmatpush.bf16.msra.mxu0 %v1182
        %1192 = vmatmul.bf16.gmra.mxu0 %v1179
        %v1193 = vpop.f32.mrf.mxu0
        %v1194 = vadd.f32 0.0, %v1193
        %v1195 = vpop.f32.mrf.mxu0
        %1196 = vdwg.mxu0
        %v1197 = vpack.c.bf16 %v1194, %v1194
        %v1199 = vsel %vm637, %v1197, 0
        %1201 = vmatpush.bf16.msra.mxu0 0
        %1202 = vmatpush.bf16.msra.mxu0 0
        %1203 = vmatpush.bf16.msra.mxu0 0
        %1204 = vmatpush.bf16.msra.mxu0 0
        %1205 = vmatpush.bf16.msra.mxu0 0
        %1206 = vmatpush.bf16.msra.mxu0 0
        %1207 = vmatpush.bf16.msra.mxu0 0
        %1208 = vmatpush.bf16.msra.mxu0 %v870
        %1209 = vmatmul.bf16.gmra.mxu0 %v1199
        %v1210 = vpop.f32.mrf.mxu0
        %v1211 = vadd.f32 0.0, %v1210
        %v1212 = vpop.f32.mrf.mxu0
        %1213 = vdwg.mxu0
        %v1214 = vadd.f32 %v1131, %v1211
        %1215 = vrot.lane.b32.xlu0 %v975, 104
        %v1216 = vpop.permute.xlu0 %1215
        %1217 = vrot.lane.b32.xlu0 %v975, 72
        %v1218 = vpop.permute.xlu0 %1217
        %v1220 = vsel %vm637, %v1216, 0
        %v1223 = vsel %vm637, %v1218, 0
        %1225 = vmatpush.bf16.xpose.msra.mxu0 0
        %1226 = vmatpush.bf16.xpose.msra.mxu0 0
        %1227 = vmatpush.bf16.xpose.msra.mxu0 0
        %1228 = vmatpush.bf16.xpose.msra.mxu0 0
        %1229 = vmatpush.bf16.xpose.msra.mxu0 0
        %1230 = vmatpush.bf16.xpose.msra.mxu0 0
        %1231 = vmatpush.bf16.xpose.msra.mxu0 0
        %1232 = vmatpush.bf16.xpose.msra.mxu0 %v1223
        %1233 = vmatmul.bf16.gmra.mxu0 %v1220
        %v1234 = vpop.f32.mrf.mxu0
        %v1235 = vadd.f32 0.0, %v1234
        %v1236 = vpop.f32.mrf.mxu0
        %1237 = vdwg.mxu0
        %v1238 = vmul.f32 %v1235, 0.35355338
        %v1239 = vadd.f32 %v1238, %v999
        %1241 = vrot.lane.b32.xlu0 %v1239, 24
        %v1242 = vpop.permute.xlu0 %1241
        %1244 = vst.msk [vmem:[%s1002] sm:$0xff] %vm915, %v1242
        %v1245 = vsel %vm637, %v1239, -inf
        %1246 = vmax.xlane.f32.xlu0 %v1245
        %v1247 = vpop.xlane.xlu0 %1246
        %v1248 = vsub.f32 %v1239, %v1247
        %v1249 = vmul.f32 %v1248, 1.442695
        %v1250 = vpow.pop %v1249
        %v1251 = vsel %vm637, %v1250, 0.0
        %1252 = vadd.xlane.f32.xlu0 %v1251
        %v1253 = vpop.xlane.xlu0 %1252
        %v1254 = vrcp.pop %v1253
        %v1255 = vmul.f32 %v1250, %v1254
        %v1256 = vpack.c.bf16 %v1255, %v1255
        %1257 = vrot.lane.b32.xlu0 %v975, 40
        %v1258 = vpop.permute.xlu0 %1257
        %v1260 = vsel %vm637, %v1256, 0
        %v1263 = vsel %vm680, %v1258, 0
        %1265 = vmatpush.bf16.msra.mxu0 0
        %1266 = vmatpush.bf16.msra.mxu0 0
        %1267 = vmatpush.bf16.msra.mxu0 0
        %1268 = vmatpush.bf16.msra.mxu0 0
        %1269 = vmatpush.bf16.msra.mxu0 0
        %1270 = vmatpush.bf16.msra.mxu0 0
        %1271 = vmatpush.bf16.msra.mxu0 0
        %1272 = vmatpush.bf16.msra.mxu0 %v1263
        %1273 = vmatmul.bf16.gmra.mxu0 %v1260
        %v1274 = vpop.f32.mrf.mxu0
        %v1275 = vadd.f32 0.0, %v1274
        %v1276 = vpop.f32.mrf.mxu0
        %1277 = vdwg.mxu0
        %v1278 = vpack.c.bf16 %v1275, %v1275
        %v1280 = vsel %vm637, %v1278, 0
        %1282 = vmatpush.bf16.msra.mxu0 0
        %1283 = vmatpush.bf16.msra.mxu0 0
        %1284 = vmatpush.bf16.msra.mxu0 0
        %1285 = vmatpush.bf16.msra.mxu0 0
        %1286 = vmatpush.bf16.msra.mxu0 0
        %1287 = vmatpush.bf16.msra.mxu0 0
        %1288 = vmatpush.bf16.msra.mxu0 0
        %1289 = vmatpush.bf16.msra.mxu0 %v955
        %1290 = vmatmul.bf16.gmra.mxu0 %v1280
        %v1291 = vpop.f32.mrf.mxu0
        %v1292 = vadd.f32 0.0, %v1291
        %v1293 = vpop.f32.mrf.mxu0
        %1294 = vdwg.mxu0
        %v1295 = vadd.f32 %v1214, %v1292
        %v1296 = vld [vmem:[%s5] sm:$0x1]
        %v1298 = vperm.slane %v1296, 0
        %v1300 = vadd.f32 %v970, %v1298
        %v1301 = vadd.f32 %v1295, %v1298
        %v1302 = vadd.f32 %v584, %v1300
        %v1303 = vadd.f32 %v585, %v1301
        %v1304 = vsel %vm607, %v1302, 0.0
        %1305 = vadd.xlane.f32.xlu0 %v1304
        %v1306 = vpop.xlane.xlu0 %1305
        %v1307 = vsel %vm607, %v1303, 0.0
        %1308 = vadd.xlane.f32.xlu0 %v1307
        %v1309 = vpop.xlane.xlu0 %1308
        %v1310 = vrcp.pop 32.0
        %v1311 = vmul.f32 32.0, %v1310
        %v1312 = vsub.f32 1.0, %v1311
        %v1313 = vmul.f32 %v1310, %v1312
        %v1314 = vadd.f32 %v1310, %v1313
        %vm1315 = vweird.f32 %v1310
        %v1316 = vsel %vm1315, %v1310, %v1314
        %v1317 = vmul.f32 %v1306, %v1316
        %v1318 = vmul.f32 %v1309, %v1316
        %v1319 = vsub.f32 %v1302, %v1317
        %v1320 = vsub.f32 %v1303, %v1318
        %v1321 = vmul.f32 %v1319, %v1319
        %v1322 = vmul.f32 %v1320, %v1320
        %v1323 = vsel %vm607, %v1321, 0.0
        %1324 = vadd.xlane.f32.xlu0 %v1323
        %v1325 = vpop.xlane.xlu0 %1324
        %v1326 = vsel %vm607, %v1322, 0.0
        %1327 = vadd.xlane.f32.xlu0 %v1326
        %v1328 = vpop.xlane.xlu0 %1327
        %v1329 = vmul.f32 %v1325, %v1316
        %v1330 = vmul.f32 %v1328, %v1316
        %v1331 = vadd.f32 %v1329, 1e-12
        %v1332 = vadd.f32 %v1330, 1e-12
        %v1333 = vrsqrt.pop %v1331
        %v1334 = vmul.f32 %v1333, %v1331
        %v1335 = vmul.f32 %v1334, %v1333
        %v1336 = vmul.f32 0.5, %v1335
        %v1337 = vsub.f32 1.5, %v1336
        %v1338 = vmul.f32 %v1333, %v1337
        %vm1339 = vweird.f32 %v1331
        %vm1340 = vweird.f32 %v1333
        %vm1341 = vmor %vm1339, %vm1340
        %v1342 = vsel %vm1341, %v1333, %v1338
        %v1343 = vrsqrt.pop %v1332
        %v1344 = vmul.f32 %v1343, %v1332
        %v1345 = vmul.f32 %v1344, %v1343
        %v1346 = vmul.f32 0.5, %v1345
        %v1347 = vsub.f32 1.5, %v1346
        %v1348 = vmul.f32 %v1343, %v1347
        %vm1349 = vweird.f32 %v1332
        %vm1350 = vweird.f32 %v1343
        %vm1351 = vmor %vm1349, %vm1350
        %v1352 = vsel %vm1351, %v1343, %v1348
        %v1353 = vmul.f32 %v1319, %v1342
        %v1354 = vmul.f32 %v1320, %v1352
        %v1355 = vld [vmem:[%s10] sm:$0x1]
        %v1357 = vperm.slane %v1355, 0
        %v1359 = vmul.f32 %v1353, %v1357
        %v1360 = vmul.f32 %v1354, %v1357
        %v1361 = vld [vmem:[%s11] sm:$0x1]
        %v1363 = vperm.slane %v1361, 0
        %v1365 = vadd.f32 %v1359, %v1363
        %v1366 = vadd.f32 %v1360, %v1363
        %v1367 = vpack.c.bf16 %v1366, %v1365
        %v1368 = vld [vmem:[#allocation7] sm:$0xf]
        %v1369 = vld [vmem:[#allocation7 + $0x4] sm:$0xf]
        %v1370 = vld [vmem:[#allocation7 + $0x8] sm:$0xf]
        %v1371 = vld [vmem:[#allocation7 + $0xc] sm:$0xf]
        %v1372 = vld [vmem:[%s7] sm:$0x1]
        %v1374 = vperm.slane %v1372, 0
        %v1380 = vunpack.c.l.b16 %v1368
        %v1381 = vunpack.c.l.b16 %v1369
        %v1382 = vunpack.c.l.b16 %v1370
        %v1383 = vunpack.c.l.b16 %v1371
        %v1384 = vpack.c.b16 %v1381, %v1380
        %v1385 = vpack.c.b16 %v1383, %v1382
        %v1389 = vsel %vm607, %v1367, 0
        %1391 = vmatpush.bf16.msra.mxu0 0
        %1392 = vmatpush.bf16.msra.mxu0 0
        %1393 = vmatpush.bf16.msra.mxu0 0
        %1394 = vmatpush.bf16.msra.mxu0 0
        %1395 = vmatpush.bf16.msra.mxu0 0
        %1396 = vmatpush.bf16.msra.mxu0 0
        %1397 = vmatpush.bf16.msra.mxu0 %v1385
        %1398 = vmatpush.bf16.msra.mxu0 %v1384
        %1399 = vmatmul.bf16.gmra.mxu0 %v1389
        %v1400 = vpop.f32.mrf.mxu0
        %v1401 = vadd.f32 %v1374, %v1400
        %v1402 = vpop.f32.mrf.mxu0
        %v1403 = vadd.f32 %v1374, %v1402
        %1404 = vdwg.mxu0
        %v1405 = vmax.f32 %v1401, 0.0
        %v1406 = vmax.f32 %v1403, 0.0
        %v1407 = vpack.c.bf16 %v1406, %v1405
        %v1408 = vld [vmem:[%s8] sm:$0xf]
        %v1409 = vld [vmem:[%s8 + $0x4] sm:$0xf]
        %v1410 = vld [vmem:[%s8 + $0x8] sm:$0xf]
        %v1411 = vld [vmem:[%s8 + $0xc] sm:$0xf]
        %v1412 = vld [vmem:[%s8 + $0x10] sm:$0xf]
        %v1413 = vld [vmem:[%s8 + $0x14] sm:$0xf]
        %v1414 = vld [vmem:[%s8 + $0x18] sm:$0xf]
        %v1415 = vld [vmem:[%s8 + $0x1c] sm:$0xf]
        %v1416 = vld [vmem:[%s9] sm:$0x1]
        %v1418 = vperm.slane %v1416, 0
        %v1428 = vunpack.c.l.b16 %v1408
        %v1429 = vunpack.c.l.b16 %v1409
        %v1430 = vunpack.c.l.b16 %v1410
        %v1431 = vunpack.c.l.b16 %v1411
        %v1432 = vunpack.c.l.b16 %v1412
        %v1433 = vunpack.c.l.b16 %v1413
        %v1434 = vunpack.c.l.b16 %v1414
        %v1435 = vunpack.c.l.b16 %v1415
        %v1436 = vpack.c.b16 %v1429, %v1428
        %v1437 = vpack.c.b16 %v1431, %v1430
        %v1438 = vpack.c.b16 %v1433, %v1432
        %v1439 = vpack.c.b16 %v1435, %v1434
        %vm1444 = vcmask 523264
        %v1446 = vsel %vm1444, %v1407, 0
        %1448 = vmatpush.bf16.msra.mxu0 0
        %1449 = vmatpush.bf16.msra.mxu0 0
        %1450 = vmatpush.bf16.msra.mxu0 0
        %1451 = vmatpush.bf16.msra.mxu0 0
        %1452 = vmatpush.bf16.msra.mxu0 %v1439
        %1453 = vmatpush.bf16.msra.mxu0 %v1438
        %1454 = vmatpush.bf16.msra.mxu0 %v1437
        %1455 = vmatpush.bf16.msra.mxu0 %v1436
        %1456 = vmatmul.bf16.gmra.mxu0 %v1446
        %v1457 = vpop.f32.mrf.mxu0
        %v1458 = vadd.f32 %v1418, %v1457
        %v1459 = vpop.f32.mrf.mxu0
        %v1460 = vadd.f32 %v1418, %v1459
        %1461 = vdwg.mxu0
        %v1462 = vadd.f32 %v1365, %v1458
        %v1463 = vadd.f32 %v1366, %v1460
        %v1464 = vsel %vm607, %v1462, 0.0
        %1465 = vadd.xlane.f32.xlu0 %v1464
        %v1466 = vpop.xlane.xlu0 %1465
        %v1467 = vsel %vm607, %v1463, 0.0
        %1468 = vadd.xlane.f32.xlu0 %v1467
        %v1469 = vpop.xlane.xlu0 %1468
        %v1470 = vmul.f32 %v1466, %v1316
        %v1471 = vmul.f32 %v1469, %v1316
        %v1472 = vsub.f32 %v1462, %v1470
        %v1473 = vsub.f32 %v1463, %v1471
        %v1474 = vmul.f32 %v1472, %v1472
        %v1475 = vmul.f32 %v1473, %v1473
        %v1476 = vsel %vm607, %v1474, 0.0
        %1477 = vadd.xlane.f32.xlu0 %v1476
        %v1478 = vpop.xlane.xlu0 %1477
        %v1479 = vsel %vm607, %v1475, 0.0
        %1480 = vadd.xlane.f32.xlu0 %v1479
        %v1481 = vpop.xlane.xlu0 %1480
        %v1482 = vmul.f32 %v1478, %v1316
        %v1483 = vmul.f32 %v1481, %v1316
        %v1484 = vadd.f32 %v1482, 1e-12
        %v1485 = vadd.f32 %v1483, 1e-12
        %v1486 = vrsqrt.pop %v1484
        %v1487 = vmul.f32 %v1486, %v1484
        %v1488 = vmul.f32 %v1487, %v1486
        %v1489 = vmul.f32 0.5, %v1488
        %v1490 = vsub.f32 1.5, %v1489
        %v1491 = vmul.f32 %v1486, %v1490
        %vm1492 = vweird.f32 %v1484
        %vm1493 = vweird.f32 %v1486
        %vm1494 = vmor %vm1492, %vm1493
        %v1495 = vsel %vm1494, %v1486, %v1491
        %v1496 = vrsqrt.pop %v1485
        %v1497 = vmul.f32 %v1496, %v1485
        %v1498 = vmul.f32 %v1497, %v1496
        %v1499 = vmul.f32 0.5, %v1498
        %v1500 = vsub.f32 1.5, %v1499
        %v1501 = vmul.f32 %v1496, %v1500
        %vm1502 = vweird.f32 %v1485
        %vm1503 = vweird.f32 %v1496
        %vm1504 = vmor %vm1502, %vm1503
        %v1505 = vsel %vm1504, %v1496, %v1501
        %v1506 = vmul.f32 %v1472, %v1495
        %v1507 = vmul.f32 %v1473, %v1505
        %v1508 = vld [vmem:[%s12] sm:$0x1]
        %v1510 = vperm.slane %v1508, 0
        %v1512 = vmul.f32 %v1506, %v1510
        %v1513 = vmul.f32 %v1507, %v1510
        %v1514 = vld [vmem:[%s13] sm:$0x1]
        %v1516 = vperm.slane %v1514, 0
        %v1518 = vadd.f32 %v1512, %v1516
        %v1519 = vadd.f32 %v1513, %v1516
        %1520 = vst.msk [vmem:[%s566] sm:$0xff] %vm607, %v1518
        %1521 = vst.msk [vmem:[%s566 + $0x8] sm:$0xff] %vm607, %v1519
        %s1522 = sand.u32 %s349, 1
        %s1523 = scalar_lea.sflag [#allocation4], %s1522
        %s1524 = sand.u32 %s349, 1
        %s1525 = smul.addr %s1524, 16
        %s1526 = scalar_lea.vmem [#allocation8], %s1525
        %s1527 = sand.u32 %s375, 1
        %s1528 = scalar_lea.sflag [#allocation10], %s1527
        %s1529 = sand.u32 %s375, 1
        %s1530 = smul.addr %s1529, 16
        %s1531 = scalar_lea.vmem [#allocation9], %s1530
        // Predicated region
        $region89: #{tpu_custom_call.1} parent=75 // pred_check
          %p1532 = pneg %p359
        $region90: #{tpu_custom_call.1} parent=75 // pred_check_branch
          %1534 = sbr.rel (%p1532) target = $region92
        $region91: #{tpu_custom_call.1} parent=75 // pred_region
          %s1535 = smul.u32 2, %s37
          %1537 = vsyncadd %s1523, 0
          %s1538 = smul.addr %s1535, 8
          %s1539 = scalar_lea.hbm %s14, %s1538
          %s1540 = sshll.u32 %s1526, 4
          %s1541 = int_to_ptr.vmem [resolvable:$true] %s1540
          %s1542 = sshll.u32 %s1539, 4
          %s1543 = int_to_ptr.hbm [resolvable:$true] %s1542
          %1548 = dma.vmem_to_hbm [thread:$0]  %s1541, 256, %s1543, %s1523, 128, 128, 8
        $region92: #{tpu_custom_call.1} parent=75 // pred_fallthru
          _
        // Predicated region
        $region93: #{tpu_custom_call.1} parent=75 // pred_check
          %p1549 = pneg %p385
        $region94: #{tpu_custom_call.1} parent=75 // pred_check_branch
          %1551 = sbr.rel (%p1549) target = $region96
        $region95: #{tpu_custom_call.1} parent=75 // pred_region
          %s1552 = smul.u32 2, %s37
          %1554 = vsyncadd %s1528, 0
          %s1555 = smul.addr %s1552, 8
          %s1556 = scalar_lea.hbm %s15, %s1555
          %s1557 = sshll.u32 %s1531, 4
          %s1558 = int_to_ptr.vmem [resolvable:$true] %s1557
          %s1559 = sshll.u32 %s1556, 4
          %s1560 = int_to_ptr.hbm [resolvable:$true] %s1559
          %1565 = dma.vmem_to_hbm [thread:$0]  %s1558, 256, %s1560, %s1528, 128, 128, 8
        $region96: #{tpu_custom_call.1} parent=75 // pred_fallthru
          _
      $region76: #{tpu_custom_call.1} parent=5 // pred_fallthru
        _
      %p1566 = scmp.le.s32.totalorder 2, %s32
      // Predicated region
      $region97: #{tpu_custom_call.1} parent=5 // pred_check
        %p1567 = pneg %p1566
      $region98: #{tpu_custom_call.1} parent=5 // pred_check_branch
        %1569 = sbr.rel (%p1567) target = $region100
      $region99: #{tpu_custom_call.1} parent=5 // pred_region
        %s1570 = ssub.s32 %s32, 2
        // Predicated region
        $region101: #{tpu_custom_call.1} parent=99 // pred_check
          %p1571 = pneg %p365
        $region102: #{tpu_custom_call.1} parent=99 // pred_check_branch
          %1573 = sbr.rel (%p1571) target = $region104
        $region103: #{tpu_custom_call.1} parent=99 // pred_region
          %s1574 = sand.u32 %s350, 1
          %s1575 = scalar_lea.sflag [#allocation4], %s1574
          %s1576 = sand.u32 %s350, 1
          %s1577 = smul.addr %s1576, 16
          %s1578 = scalar_lea.vmem [#allocation8], %s1577
          %1580 = dma.done %s1575, 256
        $region104: #{tpu_custom_call.1} parent=99 // pred_fallthru
          _
        // Predicated region
        $region105: #{tpu_custom_call.1} parent=99 // pred_check
          %p1581 = pneg %p391
        $region106: #{tpu_custom_call.1} parent=99 // pred_check_branch
          %1583 = sbr.rel (%p1581) target = $region108
        $region107: #{tpu_custom_call.1} parent=99 // pred_region
          %s1584 = sand.u32 %s376, 1
          %s1585 = scalar_lea.sflag [#allocation10], %s1584
          %s1586 = sand.u32 %s376, 1
          %s1587 = smul.addr %s1586, 16
          %s1588 = scalar_lea.vmem [#allocation9], %s1587
          %1590 = dma.done %s1585, 256
        $region108: #{tpu_custom_call.1} parent=99 // pred_fallthru
          _
      $region100: #{tpu_custom_call.1} parent=5 // pred_fallthru
        _
    $region6: #{tpu_custom_call.1} parent=1 // loop_footer
      %s36 = sadd.s32 1, %s32
    $region7: #{tpu_custom_call.1} parent=1 // loop_footer_branch
      %31 = sbr.rel target = $region3
    $region8: #{tpu_custom_call.1} parent=1 // loop_exit
      _
    %1591 = vsyncpa [#allocation3], 1
    %s1592 = scalar_lea.sflag [#allocation3], 1
    %1593 = vsyncpa %s1592, 1
    %1594 = vsyncpa [#allocation6], 1
    %1595 = vsyncpa [#allocation4], 1
    %s1596 = scalar_lea.sflag [#allocation4], 1
    %1597 = vsyncpa %s1596, 1
    %1598 = vsyncpa [#allocation10], 1
    %s1599 = scalar_lea.sflag [#allocation10], 1
    %1600 = vsyncpa %s1599, 1

</llo_original>
